<compile_context>
chip_gen: v7x
topology: tpu7x:2x2x1
jax: 0.10.0
libtpu: 0.0.40
codegen_flags: <defaults>
</compile_context>

<pallas_src>
import functools
import math

import jax
import jax.numpy as jnp
from jax import lax
from jax.experimental import pallas as pl
from jax.experimental.pallas import tpu as pltpu

# MXU inputs are cast to bf16 (f32 accumulation); elementwise math stays f32.
MXU_DTYPE = jnp.bfloat16
MAX_ROW_TILE = 256  # row tile for LN / linear / FFN grids (keeps VMEM bounded on v7x)


# ----------------------------- Pallas kernels ------------------------------

def _layer_norm_f32(x, a_ref, b_ref, eps):
    # x: (rows, D) f32; a_ref/b_ref: (1, D)
    d = x.shape[-1]
    mean = jnp.mean(x, axis=-1, keepdims=True)
    xc = x - mean
    # torch.std default: unbiased (ddof = 1); eps added to std (not var).
    var = jnp.sum(xc * xc, axis=-1, keepdims=True) * (1.0 / (d - 1))
    inv = pl.reciprocal(jnp.sqrt(var) + eps, approx=True)   # EUP slot
    return a_ref[...].astype(jnp.float32) * xc * inv + b_ref[...].astype(jnp.float32)


def ln_linear_kernel(x_ref, a_ref, b_ref, w_ref, bias_ref, o_ref, *, eps):
    # Fused: LayerNorm(x) @ W + b   (W may be a fused [Wq|Wk|Wv] weight)
    x = x_ref[...].astype(jnp.float32)
    y = _layer_norm_f32(x, a_ref, b_ref, eps)
    proj = jnp.dot(y.astype(MXU_DTYPE), w_ref[...].astype(MXU_DTYPE),
                   preferred_element_type=jnp.float32)
    o_ref[...] = (proj + bias_ref[...].astype(jnp.float32)).astype(o_ref.dtype)


def linear_kernel(x_ref, w_ref, bias_ref, o_ref):
    # Plain projection (used for memory -> fused KV).
    proj = jnp.dot(x_ref[...].astype(MXU_DTYPE), w_ref[...].astype(MXU_DTYPE),
                   preferred_element_type=jnp.float32)
    o_ref[...] = (proj + bias_ref[...].astype(jnp.float32)).astype(o_ref.dtype)


def ln_ffn_res_kernel(x_ref, a_ref, b_ref, w1_ref, b1_ref, w2_ref, b2_ref, o_ref, *, eps):
    # Fused: x + FFN(LayerNorm(x)),  FFN = relu(. @ W1 + b1) @ W2 + b2
    x = x_ref[...].astype(jnp.float32)
    y = _layer_norm_f32(x, a_ref, b_ref, eps)
    h = jnp.dot(y.astype(MXU_DTYPE), w1_ref[...].astype(MXU_DTYPE),
                preferred_element_type=jnp.float32) + b1_ref[...].astype(jnp.float32)
    h = jnp.maximum(h, 0.0)
    out = jnp.dot(h.astype(MXU_DTYPE), w2_ref[...].astype(MXU_DTYPE),
                  preferred_element_type=jnp.float32) + b2_ref[...].astype(jnp.float32)
    o_ref[...] = (x + out).astype(o_ref.dtype)


def _mha_core(load_q, load_k, load_v, mask, num_heads, scale):
    # All heads of one batch; per-head (Sq,dk)@(dk,Sk) and (Sq,Sk)@(Sk,dk) dots.
    # load_*(h) return f32 (S, dk) slices taken directly from lane-dense refs.
    ctx = []
    for h in range(num_heads):
        qh = load_q(h) * scale                      # fold 1/sqrt(dk) into q
        kh = load_k(h)
        vh = load_v(h)
        s = lax.dot_general(                        # q @ k^T without materialized transpose
            qh.astype(MXU_DTYPE), kh.astype(MXU_DTYPE),
            dimension_numbers=(((1,), (1,)), ((), ())),
            preferred_element_type=jnp.float32)     # (Sq, Sk)
        s = jnp.where(mask == 0, jnp.float32(-1e9), s)
        s = s - jnp.max(s, axis=-1, keepdims=True)
        p = jnp.exp(s)
        p = p * pl.reciprocal(jnp.sum(p, axis=-1, keepdims=True), approx=True)
        ctx.append(jnp.dot(p.astype(MXU_DTYPE), vh.astype(MXU_DTYPE),
                           preferred_element_type=jnp.float32))
    return jnp.concatenate(ctx, axis=-1)            # lane-dense (Sq, D)


def _attn_epilogue(ctx, wo_ref, bo_ref, res_ref, o_ref):
    # Output projection + bias + residual add, fused into the attention kernel.
    out = jnp.dot(ctx.astype(MXU_DTYPE), wo_ref[...].astype(MXU_DTYPE),
                  preferred_element_type=jnp.float32) + bo_ref[...].astype(jnp.float32)
    o_ref[0] = (res_ref[0].astype(jnp.float32) + out).astype(o_ref.dtype)


def self_attn_kernel(qkv_ref, m_ref, wo_ref, bo_ref, res_ref, o_ref, *, num_heads, scale):
    # qkv_ref: (1, Sq, 3D) packed [Q|K|V]; m_ref: (1, 1, Sm, Sq); res/o: (1, Sq, D)
    d_model = res_ref.shape[-1]
    dk = d_model // num_heads
    mask = m_ref[0, 0]
    lq = lambda h: qkv_ref[0, :, h * dk:(h + 1) * dk].astype(jnp.float32)
    lk = lambda h: qkv_ref[0, :, d_model + h * dk:d_model + (h + 1) * dk].astype(jnp.float32)
    lv = lambda h: qkv_ref[0, :, 2 * d_model + h * dk:2 * d_model + (h + 1) * dk].astype(jnp.float32)
    ctx = _mha_core(lq, lk, lv, mask, num_heads, scale)
    _attn_epilogue(ctx, wo_ref, bo_ref, res_ref, o_ref)


def cross_attn_kernel(q_ref, kv_ref, m_ref, wo_ref, bo_ref, res_ref, o_ref, *, num_heads, scale):
    # q_ref: (1, Sq, D); kv_ref: (1, Sk, 2D) packed [K|V]; m_ref: (1, 1, Sm, Sk)
    d_model = res_ref.shape[-1]
    dk = d_model // num_heads
    mask = m_ref[0, 0]
    lq = lambda h: q_ref[0, :, h * dk:(h + 1) * dk].astype(jnp.float32)
    lk = lambda h: kv_ref[0, :, h * dk:(h + 1) * dk].astype(jnp.float32)
    lv = lambda h: kv_ref[0, :, d_model + h * dk:d_model + (h + 1) * dk].astype(jnp.float32)
    ctx = _mha_core(lq, lk, lv, mask, num_heads, scale)
    _attn_epilogue(ctx, wo_ref, bo_ref, res_ref, o_ref)


# ----------------------------- JAX wrappers ---------------------------------

def _row_tile(n):
    return n if n <= MAX_ROW_TILE else MAX_ROW_TILE


def ln_linear(x2d, a, b, w, bias, eps=1e-6):
    n, d = x2d.shape
    dout = w.shape[1]
    tile = _row_tile(n)
    return pl.pallas_call(
        functools.partial(ln_linear_kernel, eps=eps),
        out_shape=jax.ShapeDtypeStruct((n, dout), x2d.dtype),
        grid=(pl.cdiv(n, tile),),
        in_specs=[
            pl.BlockSpec((tile, d), lambda i: (i, 0)),
            pl.BlockSpec((1, d), lambda i: (0, 0)),
            pl.BlockSpec((1, d), lambda i: (0, 0)),
            pl.BlockSpec((d, dout), lambda i: (0, 0)),
            pl.BlockSpec((1, dout), lambda i: (0, 0)),
        ],
        out_specs=pl.BlockSpec((tile, dout), lambda i: (i, 0)),
        compiler_params=pltpu.CompilerParams(dimension_semantics=("parallel",)),
    )(x2d, a.reshape(1, d), b.reshape(1, d), w, bias.reshape(1, dout))


def linear(x2d, w, bias):
    n, d = x2d.shape
    dout = w.shape[1]
    tile = _row_tile(n)
    return pl.pallas_call(
        linear_kernel,
        out_shape=jax.ShapeDtypeStruct((n, dout), x2d.dtype),
        grid=(pl.cdiv(n, tile),),
        in_specs=[
            pl.BlockSpec((tile, d), lambda i: (i, 0)),
            pl.BlockSpec((d, dout), lambda i: (0, 0)),
            pl.BlockSpec((1, dout), lambda i: (0, 0)),
        ],
        out_specs=pl.BlockSpec((tile, dout), lambda i: (i, 0)),
        compiler_params=pltpu.CompilerParams(dimension_semantics=("parallel",)),
    )(x2d, w, bias.reshape(1, dout))


def ln_ffn_res(x2d, a, b, w1, b1, w2, b2, eps=1e-6):
    n, d = x2d.shape
    dff = w1.shape[1]
    tile = _row_tile(n)
    return pl.pallas_call(
        functools.partial(ln_ffn_res_kernel, eps=eps),
        out_shape=jax.ShapeDtypeStruct((n, d), x2d.dtype),
        grid=(pl.cdiv(n, tile),),
        in_specs=[
            pl.BlockSpec((tile, d), lambda i: (i, 0)),
            pl.BlockSpec((1, d), lambda i: (0, 0)),
            pl.BlockSpec((1, d), lambda i: (0, 0)),
            pl.BlockSpec((d, dff), lambda i: (0, 0)),
            pl.BlockSpec((1, dff), lambda i: (0, 0)),
            pl.BlockSpec((dff, d), lambda i: (0, 0)),
            pl.BlockSpec((1, d), lambda i: (0, 0)),
        ],
        out_specs=pl.BlockSpec((tile, d), lambda i: (i, 0)),
        compiler_params=pltpu.CompilerParams(dimension_semantics=("parallel",)),
    )(x2d, a.reshape(1, d), b.reshape(1, d), w1, b1.reshape(1, dff), w2, b2.reshape(1, d))


def _mask_index_map(mask):
    if mask.shape[0] > 1:
        return lambda b: (b, 0, 0, 0)
    return lambda b: (0, 0, 0, 0)


def self_attention(qkv, mask, wo, bo, residual, num_heads):
    # qkv: (B, Sq, 3D) packed [Q|K|V]; residual: (B, Sq, D); mask: (Bm, 1, Sm, Sq)
    B, Sq, d3 = qkv.shape
    D = d3 // 3
    Sm, Skm = mask.shape[2], mask.shape[3]
    scale = 1.0 / math.sqrt(D // num_heads)
    return pl.pallas_call(
        functools.partial(self_attn_kernel, num_heads=num_heads, scale=scale),
        out_shape=jax.ShapeDtypeStruct((B, Sq, D), residual.dtype),
        grid=(B,),
        in_specs=[
            pl.BlockSpec((1, Sq, d3), lambda b: (b, 0, 0)),
            pl.BlockSpec((1, 1, Sm, Skm), _mask_index_map(mask)),
            pl.BlockSpec((D, D), lambda b: (0, 0)),
            pl.BlockSpec((1, D), lambda b: (0, 0)),
            pl.BlockSpec((1, Sq, D), lambda b: (b, 0, 0)),
        ],
        out_specs=pl.BlockSpec((1, Sq, D), lambda b: (b, 0, 0)),
        compiler_params=pltpu.CompilerParams(dimension_semantics=("parallel",)),
    )(qkv, mask, wo, bo.reshape(1, D), residual)


def cross_attention(q, kv, mask, wo, bo, residual, num_heads):
    # q: (B, Sq, D); kv: (B, Sk, 2D) packed [K|V]; mask: (Bm, 1, Sm, Sk)
    B, Sq, D = q.shape
    Sk = kv.shape[1]
    Sm, Skm = mask.shape[2], mask.shape[3]
    scale = 1.0 / math.sqrt(D // num_heads)
    return pl.pallas_call(
        functools.partial(cross_attn_kernel, num_heads=num_heads, scale=scale),
        out_shape=jax.ShapeDtypeStruct((B, Sq, D), residual.dtype),
        grid=(B,),
        in_specs=[
            pl.BlockSpec((1, Sq, D), lambda b: (b, 0, 0)),
            pl.BlockSpec((1, Sk, 2 * D), lambda b: (b, 0, 0)),
            pl.BlockSpec((1, 1, Sm, Skm), _mask_index_map(mask)),
            pl.BlockSpec((D, D), lambda b: (0, 0)),
            pl.BlockSpec((1, D), lambda b: (0, 0)),
            pl.BlockSpec((1, Sq, D), lambda b: (b, 0, 0)),
        ],
        out_specs=pl.BlockSpec((1, Sq, D), lambda b: (b, 0, 0)),
        compiler_params=pltpu.CompilerParams(dimension_semantics=("parallel",)),
    )(q, kv, mask, wo, bo.reshape(1, D), residual)


def decoder_layer(x, memory, src_mask, tgt_mask, params, num_heads, eps=1e-6):
    """x: (B, S_tgt, D), memory: (B, S_src, D).  Dropout = identity (eval mode)."""
    B, S, D = x.shape
    Bm, Ss, _ = memory.shape
    rows = B * S

    # --- sublayer 0: self attention (pre-norm residual) ---
    sa = params["self_attn"]
    qkv = ln_linear(x.reshape(rows, D), params["ln0_a"], params["ln0_b"],
                    sa["wqkv"], sa["bqkv"], eps).reshape(B, S, 3 * D)
    x = self_attention(qkv, tgt_mask, sa["wo"], sa["bo"], x, num_heads)

    # --- sublayer 1: src (cross) attention ---
    ca = params["src_attn"]
    q = ln_linear(x.reshape(rows, D), params["ln1_a"], params["ln1_b"],
                  ca["wq"], ca["bq"], eps).reshape(B, S, D)
    kv = linear(memory.reshape(Bm * Ss, D), ca["wkv"], ca["bkv"]).reshape(B, Ss, 2 * D)
    x = cross_attention(q, kv, src_mask, ca["wo"], ca["bo"], x, num_heads)

    # --- sublayer 2: feed forward (+ residual, fused) ---
    f = params["ffn"]
    x = ln_ffn_res(x.reshape(rows, D), params["ln2_a"], params["ln2_b"],
                   f["w1"], f["b1"], f["w2"], f["b2"], eps).reshape(B, S, D)
    return x


# ----------------------------- parameter init -------------------------------

def make_params(key, d_model, d_ff):
    ks = jax.random.split(key, 8)
    scale = 0.02

    def lin(k, din, dout):
        # weights stored as (din, dout) so kernels compute x @ W + b
        return scale * jax.random.normal(k, (din, dout), jnp.float32)

    return {
        "ln0_a": jnp.ones((d_model,), jnp.float32), "ln0_b": jnp.zeros((d_model,), jnp.float32),
        "ln1_a": jnp.ones((d_model,), jnp.float32), "ln1_b": jnp.zeros((d_model,), jnp.float32),
        "ln2_a": jnp.ones((d_model,), jnp.float32), "ln2_b": jnp.zeros((d_model,), jnp.float32),
        "self_attn": {
            "wqkv": lin(ks[0], d_model, 3 * d_model),          # [Wq | Wk | Wv]
            "bqkv": jnp.zeros((3 * d_model,), jnp.float32),
            "wo": lin(ks[1], d_model, d_model),
            "bo": jnp.zeros((d_model,), jnp.float32),
        },
        "src_attn": {
            "wq": lin(ks[2], d_model, d_model),
            "bq": jnp.zeros((d_model,), jnp.float32),
            "wkv": lin(ks[3], d_model, 2 * d_model),           # [Wk | Wv]
            "bkv": jnp.zeros((2 * d_model,), jnp.float32),
            "wo": lin(ks[4], d_model, d_model),
            "bo": jnp.zeros((d_model,), jnp.float32),
        },
        "ffn": {
            "w1": lin(ks[5], d_model, d_ff), "b1": jnp.zeros((d_ff,), jnp.float32),
            "w2": lin(ks[6], d_ff, d_model), "b2": jnp.zeros((d_model,), jnp.float32),
        },
    }


# ----------------------------- pure-JAX reference ----------------------------

def reference_decoder_layer(x, memory, src_mask, tgt_mask, params, num_heads, eps=1e-6):
    D = x.shape[-1]

    def ln(v, a, b):
        mean = v.mean(-1, keepdims=True)
        var = jnp.sum((v - mean) ** 2, -1, keepdims=True) / (v.shape[-1] - 1)
        return a * (v - mean) / (jnp.sqrt(var) + eps) + b

    def attn(q, k, v, mask, wq, bq, wk, bk, wv, bv, wo, bo):
        B, Sq, _ = q.shape
        Sk = k.shape[1]
        H = num_heads
        dk = D // H
        qp = (q @ wq + bq).reshape(B, Sq, H, dk).transpose(0, 2, 1, 3)
        kp = (k @ wk + bk).reshape(B, Sk, H, dk).transpose(0, 2, 1, 3)
        vp = (v @ wv + bv).reshape(B, Sk, H, dk).transpose(0, 2, 1, 3)
        s = qp @ kp.transpose(0, 1, 3, 2) / math.sqrt(dk)
        s = jnp.where(mask == 0, -1e9, s)
        p = jax.nn.softmax(s, axis=-1)
        o = (p @ vp).transpose(0, 2, 1, 3).reshape(B, Sq, D)
        return o @ wo + bo

    sa = params["self_attn"]
    y = ln(x, params["ln0_a"], params["ln0_b"])
    x = x + attn(y, y, y, tgt_mask,
                 sa["wqkv"][:, :D], sa["bqkv"][:D],
                 sa["wqkv"][:, D:2 * D], sa["bqkv"][D:2 * D],
                 sa["wqkv"][:, 2 * D:], sa["bqkv"][2 * D:],
                 sa["wo"], sa["bo"])

    ca = params["src_attn"]
    y = ln(x, params["ln1_a"], params["ln1_b"])
    x = x + attn(y, memory, memory, src_mask,
                 ca["wq"], ca["bq"],
                 ca["wkv"][:, :D], ca["bkv"][:D],
                 ca["wkv"][:, D:], ca["bkv"][D:],
                 ca["wo"], ca["bo"])

    f = params["ffn"]
    y = ln(x, params["ln2_a"], params["ln2_b"])
    x = x + (jnp.maximum(y @ f["w1"] + f["b1"], 0.0) @ f["w2"] + f["b2"])
    return x


# --------------------------------- main --------------------------------------

if __name__ == "__main__":
    B, S_TGT, S_SRC, D, H, D_FF = 2, 8, 10, 32, 4, 64

    key = jax.random.PRNGKey(0)
    kx, km, kp = jax.random.split(key, 3)

    x = jax.random.normal(kx, (B, S_TGT, D), jnp.float32)
    memory = jax.random.normal(km, (B, S_SRC, D), jnp.float32)

    # tgt_mask: causal (B,1,S_tgt,S_tgt); src_mask: all-valid (B,1,1,S_src)
    tgt_mask = jnp.broadcast_to(
        jnp.tril(jnp.ones((S_TGT, S_TGT), jnp.float32))[None, None],
        (B, 1, S_TGT, S_TGT))
    src_mask = jnp.ones((B, 1, 1, S_SRC), jnp.float32)

    params = make_params(kp, D, D_FF)

    fwd = jax.jit(functools.partial(decoder_layer, num_heads=H))
    out = fwd(x, memory, src_mask, tgt_mask, params)
    jax.block_until_ready(out)

    assert out.shape == (B, S_TGT, D) and out.dtype == jnp.float32
    assert bool(jnp.isfinite(out).all())

    # Sanity check against an f32 pure-JAX reference (kernel uses bf16 MXU inputs
    # + approximate EUP reciprocals, so allow a loose tolerance).
    ref = reference_decoder_layer(x, memory, src_mask, tgt_mask, params, H)
    max_err = float(jnp.max(jnp.abs(out - ref)))
    assert max_err < 5e-2, f"max abs error vs reference: {max_err}"

    print("KERNEL_OK")
</pallas_src>

<mosaic_0001>
module attributes {stable_mosaic.version = 11 : i64} {
  func.func @ln_linear_kernel(%arg0: i32, %arg1: memref<16x32xf32, #tpu.memory_space<vmem>>, %arg2: memref<1x32xf32, #tpu.memory_space<vmem>>, %arg3: memref<1x32xf32, #tpu.memory_space<vmem>>, %arg4: memref<32x96xf32, #tpu.memory_space<vmem>>, %arg5: memref<1x96xf32, #tpu.memory_space<vmem>>, %arg6: memref<16x96xf32, #tpu.memory_space<vmem>>) attributes {dimension_semantics = [#tpu.dimension_semantics<parallel>], iteration_bounds = array<i64: 1>, scalar_prefetch = 0 : i64, scratch_operands = 0 : i64, tpu.core_type = #tpu.core_type<tc>, window_params = [{transform_indices = @transform_0, window_bounds = array<i64: 16, 32>}, {pipeline_mode = #tpu.pipeline_mode<synchronous>, transform_indices = @transform_1, window_bounds = array<i64: 1, 32>}, {pipeline_mode = #tpu.pipeline_mode<synchronous>, transform_indices = @transform_2, window_bounds = array<i64: 1, 32>}, {pipeline_mode = #tpu.pipeline_mode<synchronous>, transform_indices = @transform_3, window_bounds = array<i64: 32, 96>}, {pipeline_mode = #tpu.pipeline_mode<synchronous>, transform_indices = @transform_4, window_bounds = array<i64: 1, 96>}, {transform_indices = @transform_5, window_bounds = array<i64: 16, 96>}]} {
    %c0 = arith.constant 0 : index
    %c0_0 = arith.constant 0 : index
    %0 = vector.load %arg1[%c0, %c0_0] : memref<16x32xf32, #tpu.memory_space<vmem>>, vector<16x32xf32>
    %cst = arith.constant dense<0.000000e+00> : vector<16xf32>
    %1 = vector.multi_reduction <add>, %0, %cst [1] : vector<16x32xf32> to vector<16xf32>
    %2 = vector.shape_cast %1 : vector<16xf32> to vector<16x1xf32>
    %cst_1 = arith.constant 3.200000e+01 : f32
    %3 = vector.broadcast %cst_1 : f32 to vector<16x1xf32>
    %4 = arith.divf %2, %3 : vector<16x1xf32>
    %5 = vector.broadcast %4 : vector<16x1xf32> to vector<16x32xf32>
    %6 = arith.subf %0, %5 : vector<16x32xf32>
    %7 = arith.mulf %6, %6 : vector<16x32xf32>
    %cst_2 = arith.constant dense<0.000000e+00> : vector<16xf32>
    %8 = vector.multi_reduction <add>, %7, %cst_2 [1] : vector<16x32xf32> to vector<16xf32>
    %9 = vector.shape_cast %8 : vector<16xf32> to vector<16x1xf32>
    %cst_3 = arith.constant 0.0322580636 : f32
    %10 = vector.broadcast %cst_3 : f32 to vector<16x1xf32>
    %11 = arith.mulf %9, %10 : vector<16x1xf32>
    %12 = math.sqrt %11 : vector<16x1xf32>
    %cst_4 = arith.constant 9.99999997E-7 : f32
    %13 = vector.broadcast %cst_4 : f32 to vector<16x1xf32>
    %14 = arith.addf %12, %13 : vector<16x1xf32>
    %15 = tpu.reciprocal %14 {approx = true} : vector<16x1xf32> -> vector<16x1xf32>
    %c0_5 = arith.constant 0 : index
    %c0_6 = arith.constant 0 : index
    %16 = vector.load %arg2[%c0_5, %c0_6] : memref<1x32xf32, #tpu.memory_space<vmem>>, vector<1x32xf32>
    %17 = vector.broadcast %16 : vector<1x32xf32> to vector<16x32xf32>
    %18 = arith.mulf %17, %6 : vector<16x32xf32>
    %19 = vector.broadcast %15 : vector<16x1xf32> to vector<16x32xf32>
    %20 = arith.mulf %18, %19 : vector<16x32xf32>
    %c0_7 = arith.constant 0 : index
    %c0_8 = arith.constant 0 : index
    %21 = vector.load %arg3[%c0_7, %c0_8] : memref<1x32xf32, #tpu.memory_space<vmem>>, vector<1x32xf32>
    %22 = vector.broadcast %21 : vector<1x32xf32> to vector<16x32xf32>
    %23 = arith.addf %20, %22 : vector<16x32xf32>
    %24 = arith.truncf %23 : vector<16x32xf32> to vector<16x32xbf16>
    %c0_9 = arith.constant 0 : index
    %c0_10 = arith.constant 0 : index
    %25 = vector.load %arg4[%c0_9, %c0_10] : memref<32x96xf32, #tpu.memory_space<vmem>>, vector<32x96xf32>
    %26 = arith.truncf %25 : vector<32x96xf32> to vector<32x96xbf16>
    %cst_11 = arith.constant dense<0.000000e+00> : vector<16x96xf32>
    %27 = tpu.matmul %24, %26, %cst_11 {dimension_numbers = #tpu.dot_dimension_numbers<[1], [0], [0], [1], [0, 0, 1, 1], [], []>} : vector<16x32xbf16>, vector<32x96xbf16>, vector<16x96xf32> -> vector<16x96xf32>
    %c0_12 = arith.constant 0 : index
    %c0_13 = arith.constant 0 : index
    %28 = vector.load %arg5[%c0_12, %c0_13] : memref<1x96xf32, #tpu.memory_space<vmem>>, vector<1x96xf32>
    %29 = vector.broadcast %28 : vector<1x96xf32> to vector<16x96xf32>
    %30 = arith.addf %27, %29 : vector<16x96xf32>
    %c0_14 = arith.constant 0 : index
    %c0_15 = arith.constant 0 : index
    %31 = vector.load %arg6[%c0_14, %c0_15] : memref<16x96xf32, #tpu.memory_space<vmem>>, vector<16x96xf32>
    tpu.vector_store %arg6[%c0_14, %c0_15], %30 {strides = array<i32>} : memref<16x96xf32, #tpu.memory_space<vmem>>, vector<16x96xf32>,
    return
  }
  func.func @transform_0(%arg0: i32) -> (i32, i32) {
    %c0_i32 = arith.constant 0 : i32
    %c0_i32_0 = arith.constant 0 : i32
    return %arg0, %c0_i32 : i32, i32
  }
  func.func @transform_1(%arg0: i32) -> (i32, i32) {
    %c0_i32 = arith.constant 0 : i32
    %c0_i32_0 = arith.constant 0 : i32
    %c0_i32_1 = arith.constant 0 : i32
    return %c0_i32, %c0_i32_0 : i32, i32
  }
  func.func @transform_2(%arg0: i32) -> (i32, i32) {
    %c0_i32 = arith.constant 0 : i32
    %c0_i32_0 = arith.constant 0 : i32
    %c0_i32_1 = arith.constant 0 : i32
    return %c0_i32, %c0_i32_0 : i32, i32
  }
  func.func @transform_3(%arg0: i32) -> (i32, i32) {
    %c0_i32 = arith.constant 0 : i32
    %c0_i32_0 = arith.constant 0 : i32
    %c0_i32_1 = arith.constant 0 : i32
    return %c0_i32, %c0_i32_0 : i32, i32
  }
  func.func @transform_4(%arg0: i32) -> (i32, i32) {
    %c0_i32 = arith.constant 0 : i32
    %c0_i32_0 = arith.constant 0 : i32
    %c0_i32_1 = arith.constant 0 : i32
    return %c0_i32, %c0_i32_0 : i32, i32
  }
  func.func @transform_5(%arg0: i32) -> (i32, i32) {
    %c0_i32 = arith.constant 0 : i32
    %c0_i32_0 = arith.constant 0 : i32
    return %arg0, %c0_i32 : i32, i32
  }
}

module attributes {stable_mosaic.version = 11 : i64} {
  func.func @self_attn_kernel(%arg0: i32, %arg1: memref<1x8x96xf32, #tpu.memory_space<vmem>>, %arg2: memref<1x1x8x8xf32, #tpu.memory_space<vmem>>, %arg3: memref<32x32xf32, #tpu.memory_space<vmem>>, %arg4: memref<1x32xf32, #tpu.memory_space<vmem>>, %arg5: memref<1x8x32xf32, #tpu.memory_space<vmem>>, %arg6: memref<1x8x32xf32, #tpu.memory_space<vmem>>) attributes {dimension_semantics = [#tpu.dimension_semantics<parallel>], iteration_bounds = array<i64: 2>, scalar_prefetch = 0 : i64, scratch_operands = 0 : i64, tpu.core_type = #tpu.core_type<tc>, window_params = [{transform_indices = @transform_0, window_bounds = array<i64: 1, 8, 96>}, {transform_indices = @transform_1, window_bounds = array<i64: 1, 1, 8, 8>}, {pipeline_mode = #tpu.pipeline_mode<synchronous>, transform_indices = @transform_2, window_bounds = array<i64: 32, 32>}, {pipeline_mode = #tpu.pipeline_mode<synchronous>, transform_indices = @transform_3, window_bounds = array<i64: 1, 32>}, {transform_indices = @transform_4, window_bounds = array<i64: 1, 8, 32>}, {transform_indices = @transform_5, window_bounds = array<i64: 1, 8, 32>}]} {
    %c0 = arith.constant 0 : index
    %c0_0 = arith.constant 0 : index
    %c0_1 = arith.constant 0 : index
    %c0_2 = arith.constant 0 : index
    %0 = vector.load %arg2[%c0, %c0_0, %c0_1, %c0_2] : memref<1x1x8x8xf32, #tpu.memory_space<vmem>>, vector<1x1x8x8xf32>
    %1 = vector.shape_cast %0 : vector<1x1x8x8xf32> to vector<8x8xf32>
    %c0_3 = arith.constant 0 : index
    %c0_4 = arith.constant 0 : index
    %c0_5 = arith.constant 0 : index
    %2 = vector.load %arg1[%c0_3, %c0_4, %c0_5] : memref<1x8x96xf32, #tpu.memory_space<vmem>>, vector<1x8x8xf32>
    %3 = vector.shape_cast %2 : vector<1x8x8xf32> to vector<8x8xf32>
    %cst = arith.constant 0.353553385 : f32
    %4 = vector.broadcast %cst : f32 to vector<8x8xf32>
    %5 = arith.mulf %3, %4 : vector<8x8xf32>
    %c0_6 = arith.constant 0 : index
    %c0_7 = arith.constant 0 : index
    %c32 = arith.constant 32 : index
    %6 = vector.load %arg1[%c0_6, %c0_7, %c32] : memref<1x8x96xf32, #tpu.memory_space<vmem>>, vector<1x8x8xf32>
    %7 = vector.shape_cast %6 : vector<1x8x8xf32> to vector<8x8xf32>
    %c0_8 = arith.constant 0 : index
    %c0_9 = arith.constant 0 : index
    %c64 = arith.constant 64 : index
    %8 = vector.load %arg1[%c0_8, %c0_9, %c64] : memref<1x8x96xf32, #tpu.memory_space<vmem>>, vector<1x8x8xf32>
    %9 = vector.shape_cast %8 : vector<1x8x8xf32> to vector<8x8xf32>
    %10 = arith.truncf %5 : vector<8x8xf32> to vector<8x8xbf16>
    %11 = arith.truncf %7 : vector<8x8xf32> to vector<8x8xbf16>
    %cst_10 = arith.constant dense<0.000000e+00> : vector<8x8xf32>
    %12 = tpu.matmul %10, %11, %cst_10 {dimension_numbers = #tpu.dot_dimension_numbers<[1], [1], [0], [0], [0, 0, 1, 0], [], []>} : vector<8x8xbf16>, vector<8x8xbf16>, vector<8x8xf32> -> vector<8x8xf32>
    %cst_11 = arith.constant 0.000000e+00 : f32
    %13 = vector.broadcast %cst_11 : f32 to vector<8x8xf32>
    %14 = arith.cmpf oeq, %1, %13 : vector<8x8xf32>
    %cst_12 = arith.constant -1.000000e+09 : f32
    %15 = vector.broadcast %cst_12 : f32 to vector<8x8xf32>
    %16 = arith.select %14, %15, %12 : vector<8x8xi1>, vector<8x8xf32>
    %cst_13 = arith.constant dense<0xFF800000> : vector<8xf32>
    %17 = vector.multi_reduction <maximumf>, %16, %cst_13 [1] : vector<8x8xf32> to vector<8xf32>
    %18 = vector.shape_cast %17 : vector<8xf32> to vector<8x1xf32>
    %19 = vector.broadcast %18 : vector<8x1xf32> to vector<8x8xf32>
    %20 = arith.subf %16, %19 : vector<8x8xf32>
    %21 = math.exp %20 : vector<8x8xf32>
    %cst_14 = arith.constant dense<0.000000e+00> : vector<8xf32>
    %22 = vector.multi_reduction <add>, %21, %cst_14 [1] : vector<8x8xf32> to vector<8xf32>
    %23 = vector.shape_cast %22 : vector<8xf32> to vector<8x1xf32>
    %24 = tpu.reciprocal %23 {approx = true} : vector<8x1xf32> -> vector<8x1xf32>
    %25 = vector.broadcast %24 : vector<8x1xf32> to vector<8x8xf32>
    %26 = arith.mulf %21, %25 : vector<8x8xf32>
    %27 = arith.truncf %26 : vector<8x8xf32> to vector<8x8xbf16>
    %28 = arith.truncf %9 : vector<8x8xf32> to vector<8x8xbf16>
    %cst_15 = arith.constant dense<0.000000e+00> : vector<8x8xf32>
    %29 = tpu.matmul %27, %28, %cst_15 {dimension_numbers = #tpu.dot_dimension_numbers<[1], [0], [0], [1], [0, 0, 1, 1], [], []>} : vector<8x8xbf16>, vector<8x8xbf16>, vector<8x8xf32> -> vector<8x8xf32>
    %c0_16 = arith.constant 0 : index
    %c0_17 = arith.constant 0 : index
    %c8 = arith.constant 8 : index
    %30 = vector.load %arg1[%c0_16, %c0_17, %c8] : memref<1x8x96xf32, #tpu.memory_space<vmem>>, vector<1x8x8xf32>
    %31 = vector.shape_cast %30 : vector<1x8x8xf32> to vector<8x8xf32>
    %cst_18 = arith.constant 0.353553385 : f32
    %32 = vector.broadcast %cst_18 : f32 to vector<8x8xf32>
    %33 = arith.mulf %31, %32 : vector<8x8xf32>
    %c0_19 = arith.constant 0 : index
    %c0_20 = arith.constant 0 : index
    %c40 = arith.constant 40 : index
    %34 = vector.load %arg1[%c0_19, %c0_20, %c40] : memref<1x8x96xf32, #tpu.memory_space<vmem>>, vector<1x8x8xf32>
    %35 = vector.shape_cast %34 : vector<1x8x8xf32> to vector<8x8xf32>
    %c0_21 = arith.constant 0 : index
    %c0_22 = arith.constant 0 : index
    %c72 = arith.constant 72 : index
    %36 = vector.load %arg1[%c0_21, %c0_22, %c72] : memref<1x8x96xf32, #tpu.memory_space<vmem>>, vector<1x8x8xf32>
    %37 = vector.shape_cast %36 : vector<1x8x8xf32> to vector<8x8xf32>
    %38 = arith.truncf %33 : vector<8x8xf32> to vector<8x8xbf16>
    %39 = arith.truncf %35 : vector<8x8xf32> to vector<8x8xbf16>
    %cst_23 = arith.constant dense<0.000000e+00> : vector<8x8xf32>
    %40 = tpu.matmul %38, %39, %cst_23 {dimension_numbers = #tpu.dot_dimension_numbers<[1], [1], [0], [0], [0, 0, 1, 0], [], []>} : vector<8x8xbf16>, vector<8x8xbf16>, vector<8x8xf32> -> vector<8x8xf32>
    %cst_24 = arith.constant 0.000000e+00 : f32
    %41 = vector.broadcast %cst_24 : f32 to vector<8x8xf32>
    %42 = arith.cmpf oeq, %1, %41 : vector<8x8xf32>
    %cst_25 = arith.constant -1.000000e+09 : f32
    %43 = vector.broadcast %cst_25 : f32 to vector<8x8xf32>
    %44 = arith.select %42, %43, %40 : vector<8x8xi1>, vector<8x8xf32>
    %cst_26 = arith.constant dense<0xFF800000> : vector<8xf32>
    %45 = vector.multi_reduction <maximumf>, %44, %cst_26 [1] : vector<8x8xf32> to vector<8xf32>
    %46 = vector.shape_cast %45 : vector<8xf32> to vector<8x1xf32>
    %47 = vector.broadcast %46 : vector<8x1xf32> to vector<8x8xf32>
    %48 = arith.subf %44, %47 : vector<8x8xf32>
    %49 = math.exp %48 : vector<8x8xf32>
    %cst_27 = arith.constant dense<0.000000e+00> : vector<8xf32>
    %50 = vector.multi_reduction <add>, %49, %cst_27 [1] : vector<8x8xf32> to vector<8xf32>
    %51 = vector.shape_cast %50 : vector<8xf32> to vector<8x1xf32>
    %52 = tpu.reciprocal %51 {approx = true} : vector<8x1xf32> -> vector<8x1xf32>
    %53 = vector.broadcast %52 : vector<8x1xf32> to vector<8x8xf32>
    %54 = arith.mulf %49, %53 : vector<8x8xf32>
    %55 = arith.truncf %54 : vector<8x8xf32> to vector<8x8xbf16>
    %56 = arith.truncf %37 : vector<8x8xf32> to vector<8x8xbf16>
    %cst_28 = arith.constant dense<0.000000e+00> : vector<8x8xf32>
    %57 = tpu.matmul %55, %56, %cst_28 {dimension_numbers = #tpu.dot_dimension_numbers<[1], [0], [0], [1], [0, 0, 1, 1], [], []>} : vector<8x8xbf16>, vector<8x8xbf16>, vector<8x8xf32> -> vector<8x8xf32>
    %c0_29 = arith.constant 0 : index
    %c0_30 = arith.constant 0 : index
    %c16 = arith.constant 16 : index
    %58 = vector.load %arg1[%c0_29, %c0_30, %c16] : memref<1x8x96xf32, #tpu.memory_space<vmem>>, vector<1x8x8xf32>
    %59 = vector.shape_cast %58 : vector<1x8x8xf32> to vector<8x8xf32>
    %cst_31 = arith.constant 0.353553385 : f32
    %60 = vector.broadcast %cst_31 : f32 to vector<8x8xf32>
    %61 = arith.mulf %59, %60 : vector<8x8xf32>
    %c0_32 = arith.constant 0 : index
    %c0_33 = arith.constant 0 : index
    %c48 = arith.constant 48 : index
    %62 = vector.load %arg1[%c0_32, %c0_33, %c48] : memref<1x8x96xf32, #tpu.memory_space<vmem>>, vector<1x8x8xf32>
    %63 = vector.shape_cast %62 : vector<1x8x8xf32> to vector<8x8xf32>
    %c0_34 = arith.constant 0 : index
    %c0_35 = arith.constant 0 : index
    %c80 = arith.constant 80 : index
    %64 = vector.load %arg1[%c0_34, %c0_35, %c80] : memref<1x8x96xf32, #tpu.memory_space<vmem>>, vector<1x8x8xf32>
    %65 = vector.shape_cast %64 : vector<1x8x8xf32> to vector<8x8xf32>
    %66 = arith.truncf %61 : vector<8x8xf32> to vector<8x8xbf16>
    %67 = arith.truncf %63 : vector<8x8xf32> to vector<8x8xbf16>
    %cst_36 = arith.constant dense<0.000000e+00> : vector<8x8xf32>
    %68 = tpu.matmul %66, %67, %cst_36 {dimension_numbers = #tpu.dot_dimension_numbers<[1], [1], [0], [0], [0, 0, 1, 0], [], []>} : vector<8x8xbf16>, vector<8x8xbf16>, vector<8x8xf32> -> vector<8x8xf32>
    %cst_37 = arith.constant 0.000000e+00 : f32
    %69 = vector.broadcast %cst_37 : f32 to vector<8x8xf32>
    %70 = arith.cmpf oeq, %1, %69 : vector<8x8xf32>
    %cst_38 = arith.constant -1.000000e+09 : f32
    %71 = vector.broadcast %cst_38 : f32 to vector<8x8xf32>
    %72 = arith.select %70, %71, %68 : vector<8x8xi1>, vector<8x8xf32>
    %cst_39 = arith.constant dense<0xFF800000> : vector<8xf32>
    %73 = vector.multi_reduction <maximumf>, %72, %cst_39 [1] : vector<8x8xf32> to vector<8xf32>
    %74 = vector.shape_cast %73 : vector<8xf32> to vector<8x1xf32>
    %75 = vector.broadcast %74 : vector<8x1xf32> to vector<8x8xf32>
    %76 = arith.subf %72, %75 : vector<8x8xf32>
    %77 = math.exp %76 : vector<8x8xf32>
    %cst_40 = arith.constant dense<0.000000e+00> : vector<8xf32>
    %78 = vector.multi_reduction <add>, %77, %cst_40 [1] : vector<8x8xf32> to vector<8xf32>
    %79 = vector.shape_cast %78 : vector<8xf32> to vector<8x1xf32>
    %80 = tpu.reciprocal %79 {approx = true} : vector<8x1xf32> -> vector<8x1xf32>
    %81 = vector.broadcast %80 : vector<8x1xf32> to vector<8x8xf32>
    %82 = arith.mulf %77, %81 : vector<8x8xf32>
    %83 = arith.truncf %82 : vector<8x8xf32> to vector<8x8xbf16>
    %84 = arith.truncf %65 : vector<8x8xf32> to vector<8x8xbf16>
    %cst_41 = arith.constant dense<0.000000e+00> : vector<8x8xf32>
    %85 = tpu.matmul %83, %84, %cst_41 {dimension_numbers = #tpu.dot_dimension_numbers<[1], [0], [0], [1], [0, 0, 1, 1], [], []>} : vector<8x8xbf16>, vector<8x8xbf16>, vector<8x8xf32> -> vector<8x8xf32>
    %c0_42 = arith.constant 0 : index
    %c0_43 = arith.constant 0 : index
    %c24 = arith.constant 24 : index
    %86 = vector.load %arg1[%c0_42, %c0_43, %c24] : memref<1x8x96xf32, #tpu.memory_space<vmem>>, vector<1x8x8xf32>
    %87 = vector.shape_cast %86 : vector<1x8x8xf32> to vector<8x8xf32>
    %cst_44 = arith.constant 0.353553385 : f32
    %88 = vector.broadcast %cst_44 : f32 to vector<8x8xf32>
    %89 = arith.mulf %87, %88 : vector<8x8xf32>
    %c0_45 = arith.constant 0 : index
    %c0_46 = arith.constant 0 : index
    %c56 = arith.constant 56 : index
    %90 = vector.load %arg1[%c0_45, %c0_46, %c56] : memref<1x8x96xf32, #tpu.memory_space<vmem>>, vector<1x8x8xf32>
    %91 = vector.shape_cast %90 : vector<1x8x8xf32> to vector<8x8xf32>
    %c0_47 = arith.constant 0 : index
    %c0_48 = arith.constant 0 : index
    %c88 = arith.constant 88 : index
    %92 = vector.load %arg1[%c0_47, %c0_48, %c88] : memref<1x8x96xf32, #tpu.memory_space<vmem>>, vector<1x8x8xf32>
    %93 = vector.shape_cast %92 : vector<1x8x8xf32> to vector<8x8xf32>
    %94 = arith.truncf %89 : vector<8x8xf32> to vector<8x8xbf16>
    %95 = arith.truncf %91 : vector<8x8xf32> to vector<8x8xbf16>
    %cst_49 = arith.constant dense<0.000000e+00> : vector<8x8xf32>
    %96 = tpu.matmul %94, %95, %cst_49 {dimension_numbers = #tpu.dot_dimension_numbers<[1], [1], [0], [0], [0, 0, 1, 0], [], []>} : vector<8x8xbf16>, vector<8x8xbf16>, vector<8x8xf32> -> vector<8x8xf32>
    %cst_50 = arith.constant 0.000000e+00 : f32
    %97 = vector.broadcast %cst_50 : f32 to vector<8x8xf32>
    %98 = arith.cmpf oeq, %1, %97 : vector<8x8xf32>
    %cst_51 = arith.constant -1.000000e+09 : f32
    %99 = vector.broadcast %cst_51 : f32 to vector<8x8xf32>
    %100 = arith.select %98, %99, %96 : vector<8x8xi1>, vector<8x8xf32>
    %cst_52 = arith.constant dense<0xFF800000> : vector<8xf32>
    %101 = vector.multi_reduction <maximumf>, %100, %cst_52 [1] : vector<8x8xf32> to vector<8xf32>
    %102 = vector.shape_cast %101 : vector<8xf32> to vector<8x1xf32>
    %103 = vector.broadcast %102 : vector<8x1xf32> to vector<8x8xf32>
    %104 = arith.subf %100, %103 : vector<8x8xf32>
    %105 = math.exp %104 : vector<8x8xf32>
    %cst_53 = arith.constant dense<0.000000e+00> : vector<8xf32>
    %106 = vector.multi_reduction <add>, %105, %cst_53 [1] : vector<8x8xf32> to vector<8xf32>
    %107 = vector.shape_cast %106 : vector<8xf32> to vector<8x1xf32>
    %108 = tpu.reciprocal %107 {approx = true} : vector<8x1xf32> -> vector<8x1xf32>
    %109 = vector.broadcast %108 : vector<8x1xf32> to vector<8x8xf32>
    %110 = arith.mulf %105, %109 : vector<8x8xf32>
    %111 = arith.truncf %110 : vector<8x8xf32> to vector<8x8xbf16>
    %112 = arith.truncf %93 : vector<8x8xf32> to vector<8x8xbf16>
    %cst_54 = arith.constant dense<0.000000e+00> : vector<8x8xf32>
    %113 = tpu.matmul %111, %112, %cst_54 {dimension_numbers = #tpu.dot_dimension_numbers<[1], [0], [0], [1], [0, 0, 1, 1], [], []>} : vector<8x8xbf16>, vector<8x8xbf16>, vector<8x8xf32> -> vector<8x8xf32>
    %114 = tpu.concatenate %29, %57, %85, %113 in 1 : vector<8x8xf32>, vector<8x8xf32>, vector<8x8xf32>, vector<8x8xf32> -> vector<8x32xf32>
    %115 = arith.truncf %114 : vector<8x32xf32> to vector<8x32xbf16>
    %c0_55 = arith.constant 0 : index
    %c0_56 = arith.constant 0 : index
    %116 = vector.load %arg3[%c0_55, %c0_56] : memref<32x32xf32, #tpu.memory_space<vmem>>, vector<32x32xf32>
    %117 = arith.truncf %116 : vector<32x32xf32> to vector<32x32xbf16>
    %cst_57 = arith.constant dense<0.000000e+00> : vector<8x32xf32>
    %118 = tpu.matmul %115, %117, %cst_57 {dimension_numbers = #tpu.dot_dimension_numbers<[1], [0], [0], [1], [0, 0, 1, 1], [], []>} : vector<8x32xbf16>, vector<32x32xbf16>, vector<8x32xf32> -> vector<8x32xf32>
    %c0_58 = arith.constant 0 : index
    %c0_59 = arith.constant 0 : index
    %119 = vector.load %arg4[%c0_58, %c0_59] : memref<1x32xf32, #tpu.memory_space<vmem>>, vector<1x32xf32>
    %120 = vector.broadcast %119 : vector<1x32xf32> to vector<8x32xf32>
    %121 = arith.addf %118, %120 : vector<8x32xf32>
    %c0_60 = arith.constant 0 : index
    %c0_61 = arith.constant 0 : index
    %c0_62 = arith.constant 0 : index
    %122 = vector.load %arg5[%c0_60, %c0_61, %c0_62] : memref<1x8x32xf32, #tpu.memory_space<vmem>>, vector<1x8x32xf32>
    %123 = vector.shape_cast %122 : vector<1x8x32xf32> to vector<8x32xf32>
    %124 = arith.addf %123, %121 : vector<8x32xf32>
    %c0_63 = arith.constant 0 : index
    %c0_64 = arith.constant 0 : index
    %c0_65 = arith.constant 0 : index
    %125 = vector.load %arg6[%c0_63, %c0_64, %c0_65] : memref<1x8x32xf32, #tpu.memory_space<vmem>>, vector<1x8x32xf32>
    %126 = vector.shape_cast %125 : vector<1x8x32xf32> to vector<8x32xf32>
    %127 = vector.shape_cast %124 : vector<8x32xf32> to vector<1x8x32xf32>
    tpu.vector_store %arg6[%c0_63, %c0_64, %c0_65], %127 {strides = array<i32>} : memref<1x8x32xf32, #tpu.memory_space<vmem>>, vector<1x8x32xf32>,
    return
  }
  func.func @transform_0(%arg0: i32) -> (i32, i32, i32) {
    %c0_i32 = arith.constant 0 : i32
    %c0_i32_0 = arith.constant 0 : i32
    %c0_i32_1 = arith.constant 0 : i32
    return %arg0, %c0_i32, %c0_i32_0 : i32, i32, i32
  }
  func.func @transform_1(%arg0: i32) -> (i32, i32, i32, i32) {
    %c0_i32 = arith.constant 0 : i32
    %c0_i32_0 = arith.constant 0 : i32
    %c0_i32_1 = arith.constant 0 : i32
    %c0_i32_2 = arith.constant 0 : i32
    return %arg0, %c0_i32, %c0_i32_0, %c0_i32_1 : i32, i32, i32, i32
  }
  func.func @transform_2(%arg0: i32) -> (i32, i32) {
    %c0_i32 = arith.constant 0 : i32
    %c0_i32_0 = arith.constant 0 : i32
    %c0_i32_1 = arith.constant 0 : i32
    return %c0_i32, %c0_i32_0 : i32, i32
  }
  func.func @transform_3(%arg0: i32) -> (i32, i32) {
    %c0_i32 = arith.constant 0 : i32
    %c0_i32_0 = arith.constant 0 : i32
    %c0_i32_1 = arith.constant 0 : i32
    return %c0_i32, %c0_i32_0 : i32, i32
  }
  func.func @transform_4(%arg0: i32) -> (i32, i32, i32) {
    %c0_i32 = arith.constant 0 : i32
    %c0_i32_0 = arith.constant 0 : i32
    %c0_i32_1 = arith.constant 0 : i32
    return %arg0, %c0_i32, %c0_i32_0 : i32, i32, i32
  }
  func.func @transform_5(%arg0: i32) -> (i32, i32, i32) {
    %c0_i32 = arith.constant 0 : i32
    %c0_i32_0 = arith.constant 0 : i32
    %c0_i32_1 = arith.constant 0 : i32
    return %arg0, %c0_i32, %c0_i32_0 : i32, i32, i32
  }
}

module attributes {stable_mosaic.version = 11 : i64} {
  func.func @ln_linear_kernel(%arg0: i32, %arg1: memref<16x32xf32, #tpu.memory_space<vmem>>, %arg2: memref<1x32xf32, #tpu.memory_space<vmem>>, %arg3: memref<1x32xf32, #tpu.memory_space<vmem>>, %arg4: memref<32x32xf32, #tpu.memory_space<vmem>>, %arg5: memref<1x32xf32, #tpu.memory_space<vmem>>, %arg6: memref<16x32xf32, #tpu.memory_space<vmem>>) attributes {dimension_semantics = [#tpu.dimension_semantics<parallel>], iteration_bounds = array<i64: 1>, scalar_prefetch = 0 : i64, scratch_operands = 0 : i64, tpu.core_type = #tpu.core_type<tc>, window_params = [{transform_indices = @transform_0, window_bounds = array<i64: 16, 32>}, {pipeline_mode = #tpu.pipeline_mode<synchronous>, transform_indices = @transform_1, window_bounds = array<i64: 1, 32>}, {pipeline_mode = #tpu.pipeline_mode<synchronous>, transform_indices = @transform_2, window_bounds = array<i64: 1, 32>}, {pipeline_mode = #tpu.pipeline_mode<synchronous>, transform_indices = @transform_3, window_bounds = array<i64: 32, 32>}, {pipeline_mode = #tpu.pipeline_mode<synchronous>, transform_indices = @transform_4, window_bounds = array<i64: 1, 32>}, {transform_indices = @transform_5, window_bounds = array<i64: 16, 32>}]} {
    %c0 = arith.constant 0 : index
    %c0_0 = arith.constant 0 : index
    %0 = vector.load %arg1[%c0, %c0_0] : memref<16x32xf32, #tpu.memory_space<vmem>>, vector<16x32xf32>
    %cst = arith.constant dense<0.000000e+00> : vector<16xf32>
    %1 = vector.multi_reduction <add>, %0, %cst [1] : vector<16x32xf32> to vector<16xf32>
    %2 = vector.shape_cast %1 : vector<16xf32> to vector<16x1xf32>
    %cst_1 = arith.constant 3.200000e+01 : f32
    %3 = vector.broadcast %cst_1 : f32 to vector<16x1xf32>
    %4 = arith.divf %2, %3 : vector<16x1xf32>
    %5 = vector.broadcast %4 : vector<16x1xf32> to vector<16x32xf32>
    %6 = arith.subf %0, %5 : vector<16x32xf32>
    %7 = arith.mulf %6, %6 : vector<16x32xf32>
    %cst_2 = arith.constant dense<0.000000e+00> : vector<16xf32>
    %8 = vector.multi_reduction <add>, %7, %cst_2 [1] : vector<16x32xf32> to vector<16xf32>
    %9 = vector.shape_cast %8 : vector<16xf32> to vector<16x1xf32>
    %cst_3 = arith.constant 0.0322580636 : f32
    %10 = vector.broadcast %cst_3 : f32 to vector<16x1xf32>
    %11 = arith.mulf %9, %10 : vector<16x1xf32>
    %12 = math.sqrt %11 : vector<16x1xf32>
    %cst_4 = arith.constant 9.99999997E-7 : f32
    %13 = vector.broadcast %cst_4 : f32 to vector<16x1xf32>
    %14 = arith.addf %12, %13 : vector<16x1xf32>
    %15 = tpu.reciprocal %14 {approx = true} : vector<16x1xf32> -> vector<16x1xf32>
    %c0_5 = arith.constant 0 : index
    %c0_6 = arith.constant 0 : index
    %16 = vector.load %arg2[%c0_5, %c0_6] : memref<1x32xf32, #tpu.memory_space<vmem>>, vector<1x32xf32>
    %17 = vector.broadcast %16 : vector<1x32xf32> to vector<16x32xf32>
    %18 = arith.mulf %17, %6 : vector<16x32xf32>
    %19 = vector.broadcast %15 : vector<16x1xf32> to vector<16x32xf32>
    %20 = arith.mulf %18, %19 : vector<16x32xf32>
    %c0_7 = arith.constant 0 : index
    %c0_8 = arith.constant 0 : index
    %21 = vector.load %arg3[%c0_7, %c0_8] : memref<1x32xf32, #tpu.memory_space<vmem>>, vector<1x32xf32>
    %22 = vector.broadcast %21 : vector<1x32xf32> to vector<16x32xf32>
    %23 = arith.addf %20, %22 : vector<16x32xf32>
    %24 = arith.truncf %23 : vector<16x32xf32> to vector<16x32xbf16>
    %c0_9 = arith.constant 0 : index
    %c0_10 = arith.constant 0 : index
    %25 = vector.load %arg4[%c0_9, %c0_10] : memref<32x32xf32, #tpu.memory_space<vmem>>, vector<32x32xf32>
    %26 = arith.truncf %25 : vector<32x32xf32> to vector<32x32xbf16>
    %cst_11 = arith.constant dense<0.000000e+00> : vector<16x32xf32>
    %27 = tpu.matmul %24, %26, %cst_11 {dimension_numbers = #tpu.dot_dimension_numbers<[1], [0], [0], [1], [0, 0, 1, 1], [], []>} : vector<16x32xbf16>, vector<32x32xbf16>, vector<16x32xf32> -> vector<16x32xf32>
    %c0_12 = arith.constant 0 : index
    %c0_13 = arith.constant 0 : index
    %28 = vector.load %arg5[%c0_12, %c0_13] : memref<1x32xf32, #tpu.memory_space<vmem>>, vector<1x32xf32>
    %29 = vector.broadcast %28 : vector<1x32xf32> to vector<16x32xf32>
    %30 = arith.addf %27, %29 : vector<16x32xf32>
    %c0_14 = arith.constant 0 : index
    %c0_15 = arith.constant 0 : index
    %31 = vector.load %arg6[%c0_14, %c0_15] : memref<16x32xf32, #tpu.memory_space<vmem>>, vector<16x32xf32>
    tpu.vector_store %arg6[%c0_14, %c0_15], %30 {strides = array<i32>} : memref<16x32xf32, #tpu.memory_space<vmem>>, vector<16x32xf32>,
    return
  }
  func.func @transform_0(%arg0: i32) -> (i32, i32) {
    %c0_i32 = arith.constant 0 : i32
    %c0_i32_0 = arith.constant 0 : i32
    return %arg0, %c0_i32 : i32, i32
  }
  func.func @transform_1(%arg0: i32) -> (i32, i32) {
    %c0_i32 = arith.constant 0 : i32
    %c0_i32_0 = arith.constant 0 : i32
    %c0_i32_1 = arith.constant 0 : i32
    return %c0_i32, %c0_i32_0 : i32, i32
  }
  func.func @transform_2(%arg0: i32) -> (i32, i32) {
    %c0_i32 = arith.constant 0 : i32
    %c0_i32_0 = arith.constant 0 : i32
    %c0_i32_1 = arith.constant 0 : i32
    return %c0_i32, %c0_i32_0 : i32, i32
  }
  func.func @transform_3(%arg0: i32) -> (i32, i32) {
    %c0_i32 = arith.constant 0 : i32
    %c0_i32_0 = arith.constant 0 : i32
    %c0_i32_1 = arith.constant 0 : i32
    return %c0_i32, %c0_i32_0 : i32, i32
  }
  func.func @transform_4(%arg0: i32) -> (i32, i32) {
    %c0_i32 = arith.constant 0 : i32
    %c0_i32_0 = arith.constant 0 : i32
    %c0_i32_1 = arith.constant 0 : i32
    return %c0_i32, %c0_i32_0 : i32, i32
  }
  func.func @transform_5(%arg0: i32) -> (i32, i32) {
    %c0_i32 = arith.constant 0 : i32
    %c0_i32_0 = arith.constant 0 : i32
    return %arg0, %c0_i32 : i32, i32
  }
}

module attributes {stable_mosaic.version = 11 : i64} {
  func.func @linear_kernel(%arg0: i32, %arg1: memref<20x32xf32, #tpu.memory_space<vmem>>, %arg2: memref<32x64xf32, #tpu.memory_space<vmem>>, %arg3: memref<1x64xf32, #tpu.memory_space<vmem>>, %arg4: memref<20x64xf32, #tpu.memory_space<vmem>>) attributes {dimension_semantics = [#tpu.dimension_semantics<parallel>], iteration_bounds = array<i64: 1>, scalar_prefetch = 0 : i64, scratch_operands = 0 : i64, tpu.core_type = #tpu.core_type<tc>, window_params = [{transform_indices = @transform_0, window_bounds = array<i64: 20, 32>}, {pipeline_mode = #tpu.pipeline_mode<synchronous>, transform_indices = @transform_1, window_bounds = array<i64: 32, 64>}, {pipeline_mode = #tpu.pipeline_mode<synchronous>, transform_indices = @transform_2, window_bounds = array<i64: 1, 64>}, {transform_indices = @transform_3, window_bounds = array<i64: 20, 64>}]} {
    %c0 = arith.constant 0 : index
    %c0_0 = arith.constant 0 : index
    %0 = vector.load %arg1[%c0, %c0_0] : memref<20x32xf32, #tpu.memory_space<vmem>>, vector<20x32xf32>
    %1 = arith.truncf %0 : vector<20x32xf32> to vector<20x32xbf16>
    %c0_1 = arith.constant 0 : index
    %c0_2 = arith.constant 0 : index
    %2 = vector.load %arg2[%c0_1, %c0_2] : memref<32x64xf32, #tpu.memory_space<vmem>>, vector<32x64xf32>
    %3 = arith.truncf %2 : vector<32x64xf32> to vector<32x64xbf16>
    %cst = arith.constant dense<0.000000e+00> : vector<20x64xf32>
    %4 = tpu.matmul %1, %3, %cst {dimension_numbers = #tpu.dot_dimension_numbers<[1], [0], [0], [1], [0, 0, 1, 1], [], []>} : vector<20x32xbf16>, vector<32x64xbf16>, vector<20x64xf32> -> vector<20x64xf32>
    %c0_3 = arith.constant 0 : index
    %c0_4 = arith.constant 0 : index
    %5 = vector.load %arg3[%c0_3, %c0_4] : memref<1x64xf32, #tpu.memory_space<vmem>>, vector<1x64xf32>
    %6 = vector.broadcast %5 : vector<1x64xf32> to vector<20x64xf32>
    %7 = arith.addf %4, %6 : vector<20x64xf32>
    %c0_5 = arith.constant 0 : index
    %c0_6 = arith.constant 0 : index
    %8 = vector.load %arg4[%c0_5, %c0_6] : memref<20x64xf32, #tpu.memory_space<vmem>>, vector<20x64xf32>
    tpu.vector_store %arg4[%c0_5, %c0_6], %7 {strides = array<i32>} : memref<20x64xf32, #tpu.memory_space<vmem>>, vector<20x64xf32>,
    return
  }
  func.func @transform_0(%arg0: i32) -> (i32, i32) {
    %c0_i32 = arith.constant 0 : i32
    %c0_i32_0 = arith.constant 0 : i32
    return %arg0, %c0_i32 : i32, i32
  }
  func.func @transform_1(%arg0: i32) -> (i32, i32) {
    %c0_i32 = arith.constant 0 : i32
    %c0_i32_0 = arith.constant 0 : i32
    %c0_i32_1 = arith.constant 0 : i32
    return %c0_i32, %c0_i32_0 : i32, i32
  }
  func.func @transform_2(%arg0: i32) -> (i32, i32) {
    %c0_i32 = arith.constant 0 : i32
    %c0_i32_0 = arith.constant 0 : i32
    %c0_i32_1 = arith.constant 0 : i32
    return %c0_i32, %c0_i32_0 : i32, i32
  }
  func.func @transform_3(%arg0: i32) -> (i32, i32) {
    %c0_i32 = arith.constant 0 : i32
    %c0_i32_0 = arith.constant 0 : i32
    return %arg0, %c0_i32 : i32, i32
  }
}

module attributes {stable_mosaic.version = 11 : i64} {
  func.func @cross_attn_kernel(%arg0: i32, %arg1: memref<1x8x32xf32, #tpu.memory_space<vmem>>, %arg2: memref<1x10x64xf32, #tpu.memory_space<vmem>>, %arg3: memref<1x1x1x10xf32, #tpu.memory_space<vmem>>, %arg4: memref<32x32xf32, #tpu.memory_space<vmem>>, %arg5: memref<1x32xf32, #tpu.memory_space<vmem>>, %arg6: memref<1x8x32xf32, #tpu.memory_space<vmem>>, %arg7: memref<1x8x32xf32, #tpu.memory_space<vmem>>) attributes {dimension_semantics = [#tpu.dimension_semantics<parallel>], iteration_bounds = array<i64: 2>, scalar_prefetch = 0 : i64, scratch_operands = 0 : i64, tpu.core_type = #tpu.core_type<tc>, window_params = [{transform_indices = @transform_0, window_bounds = array<i64: 1, 8, 32>}, {transform_indices = @transform_1, window_bounds = array<i64: 1, 10, 64>}, {transform_indices = @transform_2, window_bounds = array<i64: 1, 1, 1, 10>}, {pipeline_mode = #tpu.pipeline_mode<synchronous>, transform_indices = @transform_3, window_bounds = array<i64: 32, 32>}, {pipeline_mode = #tpu.pipeline_mode<synchronous>, transform_indices = @transform_4, window_bounds = array<i64: 1, 32>}, {transform_indices = @transform_5, window_bounds = array<i64: 1, 8, 32>}, {transform_indices = @transform_6, window_bounds = array<i64: 1, 8, 32>}]} {
    %c0 = arith.constant 0 : index
    %c0_0 = arith.constant 0 : index
    %c0_1 = arith.constant 0 : index
    %c0_2 = arith.constant 0 : index
    %0 = vector.load %arg3[%c0, %c0_0, %c0_1, %c0_2] : memref<1x1x1x10xf32, #tpu.memory_space<vmem>>, vector<1x1x1x10xf32>
    %1 = vector.shape_cast %0 : vector<1x1x1x10xf32> to vector<1x10xf32>
    %c0_3 = arith.constant 0 : index
    %c0_4 = arith.constant 0 : index
    %c0_5 = arith.constant 0 : index
    %2 = vector.load %arg1[%c0_3, %c0_4, %c0_5] : memref<1x8x32xf32, #tpu.memory_space<vmem>>, vector<1x8x8xf32>
    %3 = vector.shape_cast %2 : vector<1x8x8xf32> to vector<8x8xf32>
    %cst = arith.constant 0.353553385 : f32
    %4 = vector.broadcast %cst : f32 to vector<8x8xf32>
    %5 = arith.mulf %3, %4 : vector<8x8xf32>
    %c0_6 = arith.constant 0 : index
    %c0_7 = arith.constant 0 : index
    %c0_8 = arith.constant 0 : index
    %6 = vector.load %arg2[%c0_6, %c0_7, %c0_8] : memref<1x10x64xf32, #tpu.memory_space<vmem>>, vector<1x10x8xf32>
    %7 = vector.shape_cast %6 : vector<1x10x8xf32> to vector<10x8xf32>
    %c0_9 = arith.constant 0 : index
    %c0_10 = arith.constant 0 : index
    %c32 = arith.constant 32 : index
    %8 = vector.load %arg2[%c0_9, %c0_10, %c32] : memref<1x10x64xf32, #tpu.memory_space<vmem>>, vector<1x10x8xf32>
    %9 = vector.shape_cast %8 : vector<1x10x8xf32> to vector<10x8xf32>
    %10 = arith.truncf %5 : vector<8x8xf32> to vector<8x8xbf16>
    %11 = arith.truncf %7 : vector<10x8xf32> to vector<10x8xbf16>
    %cst_11 = arith.constant dense<0.000000e+00> : vector<8x10xf32>
    %12 = tpu.matmul %10, %11, %cst_11 {dimension_numbers = #tpu.dot_dimension_numbers<[1], [1], [0], [0], [0, 0, 1, 0], [], []>} : vector<8x8xbf16>, vector<10x8xbf16>, vector<8x10xf32> -> vector<8x10xf32>
    %cst_12 = arith.constant 0.000000e+00 : f32
    %13 = vector.broadcast %cst_12 : f32 to vector<1x10xf32>
    %14 = arith.cmpf oeq, %1, %13 : vector<1x10xf32>
    %cst_13 = arith.constant -1.000000e+09 : f32
    %15 = vector.shape_cast %14 : vector<1x10xi1> to vector<1x10xi1>
    %16 = vector.broadcast %15 : vector<1x10xi1> to vector<8x10xi1>
    %17 = vector.broadcast %cst_13 : f32 to vector<8x10xf32>
    %18 = arith.select %16, %17, %12 : vector<8x10xi1>, vector<8x10xf32>
    %cst_14 = arith.constant dense<0xFF800000> : vector<8xf32>
    %19 = vector.multi_reduction <maximumf>, %18, %cst_14 [1] : vector<8x10xf32> to vector<8xf32>
    %20 = vector.shape_cast %19 : vector<8xf32> to vector<8x1xf32>
    %21 = vector.broadcast %20 : vector<8x1xf32> to vector<8x10xf32>
    %22 = arith.subf %18, %21 : vector<8x10xf32>
    %23 = math.exp %22 : vector<8x10xf32>
    %cst_15 = arith.constant dense<0.000000e+00> : vector<8xf32>
    %24 = vector.multi_reduction <add>, %23, %cst_15 [1] : vector<8x10xf32> to vector<8xf32>
    %25 = vector.shape_cast %24 : vector<8xf32> to vector<8x1xf32>
    %26 = tpu.reciprocal %25 {approx = true} : vector<8x1xf32> -> vector<8x1xf32>
    %27 = vector.broadcast %26 : vector<8x1xf32> to vector<8x10xf32>
    %28 = arith.mulf %23, %27 : vector<8x10xf32>
    %29 = arith.truncf %28 : vector<8x10xf32> to vector<8x10xbf16>
    %30 = arith.truncf %9 : vector<10x8xf32> to vector<10x8xbf16>
    %cst_16 = arith.constant dense<0.000000e+00> : vector<8x8xf32>
    %31 = tpu.matmul %29, %30, %cst_16 {dimension_numbers = #tpu.dot_dimension_numbers<[1], [0], [0], [1], [0, 0, 1, 1], [], []>} : vector<8x10xbf16>, vector<10x8xbf16>, vector<8x8xf32> -> vector<8x8xf32>
    %c0_17 = arith.constant 0 : index
    %c0_18 = arith.constant 0 : index
    %c8 = arith.constant 8 : index
    %32 = vector.load %arg1[%c0_17, %c0_18, %c8] : memref<1x8x32xf32, #tpu.memory_space<vmem>>, vector<1x8x8xf32>
    %33 = vector.shape_cast %32 : vector<1x8x8xf32> to vector<8x8xf32>
    %cst_19 = arith.constant 0.353553385 : f32
    %34 = vector.broadcast %cst_19 : f32 to vector<8x8xf32>
    %35 = arith.mulf %33, %34 : vector<8x8xf32>
    %c0_20 = arith.constant 0 : index
    %c0_21 = arith.constant 0 : index
    %c8_22 = arith.constant 8 : index
    %36 = vector.load %arg2[%c0_20, %c0_21, %c8_22] : memref<1x10x64xf32, #tpu.memory_space<vmem>>, vector<1x10x8xf32>
    %37 = vector.shape_cast %36 : vector<1x10x8xf32> to vector<10x8xf32>
    %c0_23 = arith.constant 0 : index
    %c0_24 = arith.constant 0 : index
    %c40 = arith.constant 40 : index
    %38 = vector.load %arg2[%c0_23, %c0_24, %c40] : memref<1x10x64xf32, #tpu.memory_space<vmem>>, vector<1x10x8xf32>
    %39 = vector.shape_cast %38 : vector<1x10x8xf32> to vector<10x8xf32>
    %40 = arith.truncf %35 : vector<8x8xf32> to vector<8x8xbf16>
    %41 = arith.truncf %37 : vector<10x8xf32> to vector<10x8xbf16>
    %cst_25 = arith.constant dense<0.000000e+00> : vector<8x10xf32>
    %42 = tpu.matmul %40, %41, %cst_25 {dimension_numbers = #tpu.dot_dimension_numbers<[1], [1], [0], [0], [0, 0, 1, 0], [], []>} : vector<8x8xbf16>, vector<10x8xbf16>, vector<8x10xf32> -> vector<8x10xf32>
    %cst_26 = arith.constant 0.000000e+00 : f32
    %43 = vector.broadcast %cst_26 : f32 to vector<1x10xf32>
    %44 = arith.cmpf oeq, %1, %43 : vector<1x10xf32>
    %cst_27 = arith.constant -1.000000e+09 : f32
    %45 = vector.shape_cast %44 : vector<1x10xi1> to vector<1x10xi1>
    %46 = vector.broadcast %45 : vector<1x10xi1> to vector<8x10xi1>
    %47 = vector.broadcast %cst_27 : f32 to vector<8x10xf32>
    %48 = arith.select %46, %47, %42 : vector<8x10xi1>, vector<8x10xf32>
    %cst_28 = arith.constant dense<0xFF800000> : vector<8xf32>
    %49 = vector.multi_reduction <maximumf>, %48, %cst_28 [1] : vector<8x10xf32> to vector<8xf32>
    %50 = vector.shape_cast %49 : vector<8xf32> to vector<8x1xf32>
    %51 = vector.broadcast %50 : vector<8x1xf32> to vector<8x10xf32>
    %52 = arith.subf %48, %51 : vector<8x10xf32>
    %53 = math.exp %52 : vector<8x10xf32>
    %cst_29 = arith.constant dense<0.000000e+00> : vector<8xf32>
    %54 = vector.multi_reduction <add>, %53, %cst_29 [1] : vector<8x10xf32> to vector<8xf32>
    %55 = vector.shape_cast %54 : vector<8xf32> to vector<8x1xf32>
    %56 = tpu.reciprocal %55 {approx = true} : vector<8x1xf32> -> vector<8x1xf32>
    %57 = vector.broadcast %56 : vector<8x1xf32> to vector<8x10xf32>
    %58 = arith.mulf %53, %57 : vector<8x10xf32>
    %59 = arith.truncf %58 : vector<8x10xf32> to vector<8x10xbf16>
    %60 = arith.truncf %39 : vector<10x8xf32> to vector<10x8xbf16>
    %cst_30 = arith.constant dense<0.000000e+00> : vector<8x8xf32>
    %61 = tpu.matmul %59, %60, %cst_30 {dimension_numbers = #tpu.dot_dimension_numbers<[1], [0], [0], [1], [0, 0, 1, 1], [], []>} : vector<8x10xbf16>, vector<10x8xbf16>, vector<8x8xf32> -> vector<8x8xf32>
    %c0_31 = arith.constant 0 : index
    %c0_32 = arith.constant 0 : index
    %c16 = arith.constant 16 : index
    %62 = vector.load %arg1[%c0_31, %c0_32, %c16] : memref<1x8x32xf32, #tpu.memory_space<vmem>>, vector<1x8x8xf32>
    %63 = vector.shape_cast %62 : vector<1x8x8xf32> to vector<8x8xf32>
    %cst_33 = arith.constant 0.353553385 : f32
    %64 = vector.broadcast %cst_33 : f32 to vector<8x8xf32>
    %65 = arith.mulf %63, %64 : vector<8x8xf32>
    %c0_34 = arith.constant 0 : index
    %c0_35 = arith.constant 0 : index
    %c16_36 = arith.constant 16 : index
    %66 = vector.load %arg2[%c0_34, %c0_35, %c16_36] : memref<1x10x64xf32, #tpu.memory_space<vmem>>, vector<1x10x8xf32>
    %67 = vector.shape_cast %66 : vector<1x10x8xf32> to vector<10x8xf32>
    %c0_37 = arith.constant 0 : index
    %c0_38 = arith.constant 0 : index
    %c48 = arith.constant 48 : index
    %68 = vector.load %arg2[%c0_37, %c0_38, %c48] : memref<1x10x64xf32, #tpu.memory_space<vmem>>, vector<1x10x8xf32>
    %69 = vector.shape_cast %68 : vector<1x10x8xf32> to vector<10x8xf32>
    %70 = arith.truncf %65 : vector<8x8xf32> to vector<8x8xbf16>
    %71 = arith.truncf %67 : vector<10x8xf32> to vector<10x8xbf16>
    %cst_39 = arith.constant dense<0.000000e+00> : vector<8x10xf32>
    %72 = tpu.matmul %70, %71, %cst_39 {dimension_numbers = #tpu.dot_dimension_numbers<[1], [1], [0], [0], [0, 0, 1, 0], [], []>} : vector<8x8xbf16>, vector<10x8xbf16>, vector<8x10xf32> -> vector<8x10xf32>
    %cst_40 = arith.constant 0.000000e+00 : f32
    %73 = vector.broadcast %cst_40 : f32 to vector<1x10xf32>
    %74 = arith.cmpf oeq, %1, %73 : vector<1x10xf32>
    %cst_41 = arith.constant -1.000000e+09 : f32
    %75 = vector.shape_cast %74 : vector<1x10xi1> to vector<1x10xi1>
    %76 = vector.broadcast %75 : vector<1x10xi1> to vector<8x10xi1>
    %77 = vector.broadcast %cst_41 : f32 to vector<8x10xf32>
    %78 = arith.select %76, %77, %72 : vector<8x10xi1>, vector<8x10xf32>
    %cst_42 = arith.constant dense<0xFF800000> : vector<8xf32>
    %79 = vector.multi_reduction <maximumf>, %78, %cst_42 [1] : vector<8x10xf32> to vector<8xf32>
    %80 = vector.shape_cast %79 : vector<8xf32> to vector<8x1xf32>
    %81 = vector.broadcast %80 : vector<8x1xf32> to vector<8x10xf32>
    %82 = arith.subf %78, %81 : vector<8x10xf32>
    %83 = math.exp %82 : vector<8x10xf32>
    %cst_43 = arith.constant dense<0.000000e+00> : vector<8xf32>
    %84 = vector.multi_reduction <add>, %83, %cst_43 [1] : vector<8x10xf32> to vector<8xf32>
    %85 = vector.shape_cast %84 : vector<8xf32> to vector<8x1xf32>
    %86 = tpu.reciprocal %85 {approx = true} : vector<8x1xf32> -> vector<8x1xf32>
    %87 = vector.broadcast %86 : vector<8x1xf32> to vector<8x10xf32>
    %88 = arith.mulf %83, %87 : vector<8x10xf32>
    %89 = arith.truncf %88 : vector<8x10xf32> to vector<8x10xbf16>
    %90 = arith.truncf %69 : vector<10x8xf32> to vector<10x8xbf16>
    %cst_44 = arith.constant dense<0.000000e+00> : vector<8x8xf32>
    %91 = tpu.matmul %89, %90, %cst_44 {dimension_numbers = #tpu.dot_dimension_numbers<[1], [0], [0], [1], [0, 0, 1, 1], [], []>} : vector<8x10xbf16>, vector<10x8xbf16>, vector<8x8xf32> -> vector<8x8xf32>
    %c0_45 = arith.constant 0 : index
    %c0_46 = arith.constant 0 : index
    %c24 = arith.constant 24 : index
    %92 = vector.load %arg1[%c0_45, %c0_46, %c24] : memref<1x8x32xf32, #tpu.memory_space<vmem>>, vector<1x8x8xf32>
    %93 = vector.shape_cast %92 : vector<1x8x8xf32> to vector<8x8xf32>
    %cst_47 = arith.constant 0.353553385 : f32
    %94 = vector.broadcast %cst_47 : f32 to vector<8x8xf32>
    %95 = arith.mulf %93, %94 : vector<8x8xf32>
    %c0_48 = arith.constant 0 : index
    %c0_49 = arith.constant 0 : index
    %c24_50 = arith.constant 24 : index
    %96 = vector.load %arg2[%c0_48, %c0_49, %c24_50] : memref<1x10x64xf32, #tpu.memory_space<vmem>>, vector<1x10x8xf32>
    %97 = vector.shape_cast %96 : vector<1x10x8xf32> to vector<10x8xf32>
    %c0_51 = arith.constant 0 : index
    %c0_52 = arith.constant 0 : index
    %c56 = arith.constant 56 : index
    %98 = vector.load %arg2[%c0_51, %c0_52, %c56] : memref<1x10x64xf32, #tpu.memory_space<vmem>>, vector<1x10x8xf32>
    %99 = vector.shape_cast %98 : vector<1x10x8xf32> to vector<10x8xf32>
    %100 = arith.truncf %95 : vector<8x8xf32> to vector<8x8xbf16>
    %101 = arith.truncf %97 : vector<10x8xf32> to vector<10x8xbf16>
    %cst_53 = arith.constant dense<0.000000e+00> : vector<8x10xf32>
    %102 = tpu.matmul %100, %101, %cst_53 {dimension_numbers = #tpu.dot_dimension_numbers<[1], [1], [0], [0], [0, 0, 1, 0], [], []>} : vector<8x8xbf16>, vector<10x8xbf16>, vector<8x10xf32> -> vector<8x10xf32>
    %cst_54 = arith.constant 0.000000e+00 : f32
    %103 = vector.broadcast %cst_54 : f32 to vector<1x10xf32>
    %104 = arith.cmpf oeq, %1, %103 : vector<1x10xf32>
    %cst_55 = arith.constant -1.000000e+09 : f32
    %105 = vector.shape_cast %104 : vector<1x10xi1> to vector<1x10xi1>
    %106 = vector.broadcast %105 : vector<1x10xi1> to vector<8x10xi1>
    %107 = vector.broadcast %cst_55 : f32 to vector<8x10xf32>
    %108 = arith.select %106, %107, %102 : vector<8x10xi1>, vector<8x10xf32>
    %cst_56 = arith.constant dense<0xFF800000> : vector<8xf32>
    %109 = vector.multi_reduction <maximumf>, %108, %cst_56 [1] : vector<8x10xf32> to vector<8xf32>
    %110 = vector.shape_cast %109 : vector<8xf32> to vector<8x1xf32>
    %111 = vector.broadcast %110 : vector<8x1xf32> to vector<8x10xf32>
    %112 = arith.subf %108, %111 : vector<8x10xf32>
    %113 = math.exp %112 : vector<8x10xf32>
    %cst_57 = arith.constant dense<0.000000e+00> : vector<8xf32>
    %114 = vector.multi_reduction <add>, %113, %cst_57 [1] : vector<8x10xf32> to vector<8xf32>
    %115 = vector.shape_cast %114 : vector<8xf32> to vector<8x1xf32>
    %116 = tpu.reciprocal %115 {approx = true} : vector<8x1xf32> -> vector<8x1xf32>
    %117 = vector.broadcast %116 : vector<8x1xf32> to vector<8x10xf32>
    %118 = arith.mulf %113, %117 : vector<8x10xf32>
    %119 = arith.truncf %118 : vector<8x10xf32> to vector<8x10xbf16>
    %120 = arith.truncf %99 : vector<10x8xf32> to vector<10x8xbf16>
    %cst_58 = arith.constant dense<0.000000e+00> : vector<8x8xf32>
    %121 = tpu.matmul %119, %120, %cst_58 {dimension_numbers = #tpu.dot_dimension_numbers<[1], [0], [0], [1], [0, 0, 1, 1], [], []>} : vector<8x10xbf16>, vector<10x8xbf16>, vector<8x8xf32> -> vector<8x8xf32>
    %122 = tpu.concatenate %31, %61, %91, %121 in 1 : vector<8x8xf32>, vector<8x8xf32>, vector<8x8xf32>, vector<8x8xf32> -> vector<8x32xf32>
    %123 = arith.truncf %122 : vector<8x32xf32> to vector<8x32xbf16>
    %c0_59 = arith.constant 0 : index
    %c0_60 = arith.constant 0 : index
    %124 = vector.load %arg4[%c0_59, %c0_60] : memref<32x32xf32, #tpu.memory_space<vmem>>, vector<32x32xf32>
    %125 = arith.truncf %124 : vector<32x32xf32> to vector<32x32xbf16>
    %cst_61 = arith.constant dense<0.000000e+00> : vector<8x32xf32>
    %126 = tpu.matmul %123, %125, %cst_61 {dimension_numbers = #tpu.dot_dimension_numbers<[1], [0], [0], [1], [0, 0, 1, 1], [], []>} : vector<8x32xbf16>, vector<32x32xbf16>, vector<8x32xf32> -> vector<8x32xf32>
    %c0_62 = arith.constant 0 : index
    %c0_63 = arith.constant 0 : index
    %127 = vector.load %arg5[%c0_62, %c0_63] : memref<1x32xf32, #tpu.memory_space<vmem>>, vector<1x32xf32>
    %128 = vector.broadcast %127 : vector<1x32xf32> to vector<8x32xf32>
    %129 = arith.addf %126, %128 : vector<8x32xf32>
    %c0_64 = arith.constant 0 : index
    %c0_65 = arith.constant 0 : index
    %c0_66 = arith.constant 0 : index
    %130 = vector.load %arg6[%c0_64, %c0_65, %c0_66] : memref<1x8x32xf32, #tpu.memory_space<vmem>>, vector<1x8x32xf32>
    %131 = vector.shape_cast %130 : vector<1x8x32xf32> to vector<8x32xf32>
    %132 = arith.addf %131, %129 : vector<8x32xf32>
    %c0_67 = arith.constant 0 : index
    %c0_68 = arith.constant 0 : index
    %c0_69 = arith.constant 0 : index
    %133 = vector.load %arg7[%c0_67, %c0_68, %c0_69] : memref<1x8x32xf32, #tpu.memory_space<vmem>>, vector<1x8x32xf32>
    %134 = vector.shape_cast %133 : vector<1x8x32xf32> to vector<8x32xf32>
    %135 = vector.shape_cast %132 : vector<8x32xf32> to vector<1x8x32xf32>
    tpu.vector_store %arg7[%c0_67, %c0_68, %c0_69], %135 {strides = array<i32>} : memref<1x8x32xf32, #tpu.memory_space<vmem>>, vector<1x8x32xf32>,
    return
  }
  func.func @transform_0(%arg0: i32) -> (i32, i32, i32) {
    %c0_i32 = arith.constant 0 : i32
    %c0_i32_0 = arith.constant 0 : i32
    %c0_i32_1 = arith.constant 0 : i32
    return %arg0, %c0_i32, %c0_i32_0 : i32, i32, i32
  }
  func.func @transform_1(%arg0: i32) -> (i32, i32, i32) {
    %c0_i32 = arith.constant 0 : i32
    %c0_i32_0 = arith.constant 0 : i32
    %c0_i32_1 = arith.constant 0 : i32
    return %arg0, %c0_i32, %c0_i32_0 : i32, i32, i32
  }
  func.func @transform_2(%arg0: i32) -> (i32, i32, i32, i32) {
    %c0_i32 = arith.constant 0 : i32
    %c0_i32_0 = arith.constant 0 : i32
    %c0_i32_1 = arith.constant 0 : i32
    %c0_i32_2 = arith.constant 0 : i32
    return %arg0, %c0_i32, %c0_i32_0, %c0_i32_1 : i32, i32, i32, i32
  }
  func.func @transform_3(%arg0: i32) -> (i32, i32) {
    %c0_i32 = arith.constant 0 : i32
    %c0_i32_0 = arith.constant 0 : i32
    %c0_i32_1 = arith.constant 0 : i32
    return %c0_i32, %c0_i32_0 : i32, i32
  }
  func.func @transform_4(%arg0: i32) -> (i32, i32) {
    %c0_i32 = arith.constant 0 : i32
    %c0_i32_0 = arith.constant 0 : i32
    %c0_i32_1 = arith.constant 0 : i32
    return %c0_i32, %c0_i32_0 : i32, i32
  }
  func.func @transform_5(%arg0: i32) -> (i32, i32, i32) {
    %c0_i32 = arith.constant 0 : i32
    %c0_i32_0 = arith.constant 0 : i32
    %c0_i32_1 = arith.constant 0 : i32
    return %arg0, %c0_i32, %c0_i32_0 : i32, i32, i32
  }
  func.func @transform_6(%arg0: i32) -> (i32, i32, i32) {
    %c0_i32 = arith.constant 0 : i32
    %c0_i32_0 = arith.constant 0 : i32
    %c0_i32_1 = arith.constant 0 : i32
    return %arg0, %c0_i32, %c0_i32_0 : i32, i32, i32
  }
}

module attributes {stable_mosaic.version = 11 : i64} {
  func.func @ln_ffn_res_kernel(%arg0: i32, %arg1: memref<16x32xf32, #tpu.memory_space<vmem>>, %arg2: memref<1x32xf32, #tpu.memory_space<vmem>>, %arg3: memref<1x32xf32, #tpu.memory_space<vmem>>, %arg4: memref<32x64xf32, #tpu.memory_space<vmem>>, %arg5: memref<1x64xf32, #tpu.memory_space<vmem>>, %arg6: memref<64x32xf32, #tpu.memory_space<vmem>>, %arg7: memref<1x32xf32, #tpu.memory_space<vmem>>, %arg8: memref<16x32xf32, #tpu.memory_space<vmem>>) attributes {dimension_semantics = [#tpu.dimension_semantics<parallel>], iteration_bounds = array<i64: 1>, scalar_prefetch = 0 : i64, scratch_operands = 0 : i64, tpu.core_type = #tpu.core_type<tc>, window_params = [{transform_indices = @transform_0, window_bounds = array<i64: 16, 32>}, {pipeline_mode = #tpu.pipeline_mode<synchronous>, transform_indices = @transform_1, window_bounds = array<i64: 1, 32>}, {pipeline_mode = #tpu.pipeline_mode<synchronous>, transform_indices = @transform_2, window_bounds = array<i64: 1, 32>}, {pipeline_mode = #tpu.pipeline_mode<synchronous>, transform_indices = @transform_3, window_bounds = array<i64: 32, 64>}, {pipeline_mode = #tpu.pipeline_mode<synchronous>, transform_indices = @transform_4, window_bounds = array<i64: 1, 64>}, {pipeline_mode = #tpu.pipeline_mode<synchronous>, transform_indices = @transform_5, window_bounds = array<i64: 64, 32>}, {pipeline_mode = #tpu.pipeline_mode<synchronous>, transform_indices = @transform_6, window_bounds = array<i64: 1, 32>}, {transform_indices = @transform_7, window_bounds = array<i64: 16, 32>}]} {
    %c0 = arith.constant 0 : index
    %c0_0 = arith.constant 0 : index
    %0 = vector.load %arg1[%c0, %c0_0] : memref<16x32xf32, #tpu.memory_space<vmem>>, vector<16x32xf32>
    %cst = arith.constant dense<0.000000e+00> : vector<16xf32>
    %1 = vector.multi_reduction <add>, %0, %cst [1] : vector<16x32xf32> to vector<16xf32>
    %2 = vector.shape_cast %1 : vector<16xf32> to vector<16x1xf32>
    %cst_1 = arith.constant 3.200000e+01 : f32
    %3 = vector.broadcast %cst_1 : f32 to vector<16x1xf32>
    %4 = arith.divf %2, %3 : vector<16x1xf32>
    %5 = vector.broadcast %4 : vector<16x1xf32> to vector<16x32xf32>
    %6 = arith.subf %0, %5 : vector<16x32xf32>
    %7 = arith.mulf %6, %6 : vector<16x32xf32>
    %cst_2 = arith.constant dense<0.000000e+00> : vector<16xf32>
    %8 = vector.multi_reduction <add>, %7, %cst_2 [1] : vector<16x32xf32> to vector<16xf32>
    %9 = vector.shape_cast %8 : vector<16xf32> to vector<16x1xf32>
    %cst_3 = arith.constant 0.0322580636 : f32
    %10 = vector.broadcast %cst_3 : f32 to vector<16x1xf32>
    %11 = arith.mulf %9, %10 : vector<16x1xf32>
    %12 = math.sqrt %11 : vector<16x1xf32>
    %cst_4 = arith.constant 9.99999997E-7 : f32
    %13 = vector.broadcast %cst_4 : f32 to vector<16x1xf32>
    %14 = arith.addf %12, %13 : vector<16x1xf32>
    %15 = tpu.reciprocal %14 {approx = true} : vector<16x1xf32> -> vector<16x1xf32>
    %c0_5 = arith.constant 0 : index
    %c0_6 = arith.constant 0 : index
    %16 = vector.load %arg2[%c0_5, %c0_6] : memref<1x32xf32, #tpu.memory_space<vmem>>, vector<1x32xf32>
    %17 = vector.broadcast %16 : vector<1x32xf32> to vector<16x32xf32>
    %18 = arith.mulf %17, %6 : vector<16x32xf32>
    %19 = vector.broadcast %15 : vector<16x1xf32> to vector<16x32xf32>
    %20 = arith.mulf %18, %19 : vector<16x32xf32>
    %c0_7 = arith.constant 0 : index
    %c0_8 = arith.constant 0 : index
    %21 = vector.load %arg3[%c0_7, %c0_8] : memref<1x32xf32, #tpu.memory_space<vmem>>, vector<1x32xf32>
    %22 = vector.broadcast %21 : vector<1x32xf32> to vector<16x32xf32>
    %23 = arith.addf %20, %22 : vector<16x32xf32>
    %24 = arith.truncf %23 : vector<16x32xf32> to vector<16x32xbf16>
    %c0_9 = arith.constant 0 : index
    %c0_10 = arith.constant 0 : index
    %25 = vector.load %arg4[%c0_9, %c0_10] : memref<32x64xf32, #tpu.memory_space<vmem>>, vector<32x64xf32>
    %26 = arith.truncf %25 : vector<32x64xf32> to vector<32x64xbf16>
    %cst_11 = arith.constant dense<0.000000e+00> : vector<16x64xf32>
    %27 = tpu.matmul %24, %26, %cst_11 {dimension_numbers = #tpu.dot_dimension_numbers<[1], [0], [0], [1], [0, 0, 1, 1], [], []>} : vector<16x32xbf16>, vector<32x64xbf16>, vector<16x64xf32> -> vector<16x64xf32>
    %c0_12 = arith.constant 0 : index
    %c0_13 = arith.constant 0 : index
    %28 = vector.load %arg5[%c0_12, %c0_13] : memref<1x64xf32, #tpu.memory_space<vmem>>, vector<1x64xf32>
    %29 = vector.broadcast %28 : vector<1x64xf32> to vector<16x64xf32>
    %30 = arith.addf %27, %29 : vector<16x64xf32>
    %cst_14 = arith.constant 0.000000e+00 : f32
    %31 = vector.broadcast %cst_14 : f32 to vector<16x64xf32>
    %32 = arith.maximumf %30, %31 : vector<16x64xf32>
    %33 = arith.truncf %32 : vector<16x64xf32> to vector<16x64xbf16>
    %c0_15 = arith.constant 0 : index
    %c0_16 = arith.constant 0 : index
    %34 = vector.load %arg6[%c0_15, %c0_16] : memref<64x32xf32, #tpu.memory_space<vmem>>, vector<64x32xf32>
    %35 = arith.truncf %34 : vector<64x32xf32> to vector<64x32xbf16>
    %cst_17 = arith.constant dense<0.000000e+00> : vector<16x32xf32>
    %36 = tpu.matmul %33, %35, %cst_17 {dimension_numbers = #tpu.dot_dimension_numbers<[1], [0], [0], [1], [0, 0, 1, 1], [], []>} : vector<16x64xbf16>, vector<64x32xbf16>, vector<16x32xf32> -> vector<16x32xf32>
    %c0_18 = arith.constant 0 : index
    %c0_19 = arith.constant 0 : index
    %37 = vector.load %arg7[%c0_18, %c0_19] : memref<1x32xf32, #tpu.memory_space<vmem>>, vector<1x32xf32>
    %38 = vector.broadcast %37 : vector<1x32xf32> to vector<16x32xf32>
    %39 = arith.addf %36, %38 : vector<16x32xf32>
    %40 = arith.addf %0, %39 : vector<16x32xf32>
    %c0_20 = arith.constant 0 : index
    %c0_21 = arith.constant 0 : index
    %41 = vector.load %arg8[%c0_20, %c0_21] : memref<16x32xf32, #tpu.memory_space<vmem>>, vector<16x32xf32>
    tpu.vector_store %arg8[%c0_20, %c0_21], %40 {strides = array<i32>} : memref<16x32xf32, #tpu.memory_space<vmem>>, vector<16x32xf32>,
    return
  }
  func.func @transform_0(%arg0: i32) -> (i32, i32) {
    %c0_i32 = arith.constant 0 : i32
    %c0_i32_0 = arith.constant 0 : i32
    return %arg0, %c0_i32 : i32, i32
  }
  func.func @transform_1(%arg0: i32) -> (i32, i32) {
    %c0_i32 = arith.constant 0 : i32
    %c0_i32_0 = arith.constant 0 : i32
    %c0_i32_1 = arith.constant 0 : i32
    return %c0_i32, %c0_i32_0 : i32, i32
  }
  func.func @transform_2(%arg0: i32) -> (i32, i32) {
    %c0_i32 = arith.constant 0 : i32
    %c0_i32_0 = arith.constant 0 : i32
    %c0_i32_1 = arith.constant 0 : i32
    return %c0_i32, %c0_i32_0 : i32, i32
  }
  func.func @transform_3(%arg0: i32) -> (i32, i32) {
    %c0_i32 = arith.constant 0 : i32
    %c0_i32_0 = arith.constant 0 : i32
    %c0_i32_1 = arith.constant 0 : i32
    return %c0_i32, %c0_i32_0 : i32, i32
  }
  func.func @transform_4(%arg0: i32) -> (i32, i32) {
    %c0_i32 = arith.constant 0 : i32
    %c0_i32_0 = arith.constant 0 : i32
    %c0_i32_1 = arith.constant 0 : i32
    return %c0_i32, %c0_i32_0 : i32, i32
  }
  func.func @transform_5(%arg0: i32) -> (i32, i32) {
    %c0_i32 = arith.constant 0 : i32
    %c0_i32_0 = arith.constant 0 : i32
    %c0_i32_1 = arith.constant 0 : i32
    return %c0_i32, %c0_i32_0 : i32, i32
  }
  func.func @transform_6(%arg0: i32) -> (i32, i32) {
    %c0_i32 = arith.constant 0 : i32
    %c0_i32_0 = arith.constant 0 : i32
    %c0_i32_1 = arith.constant 0 : i32
    return %c0_i32, %c0_i32_0 : i32, i32
  }
  func.func @transform_7(%arg0: i32) -> (i32, i32) {
    %c0_i32 = arith.constant 0 : i32
    %c0_i32_0 = arith.constant 0 : i32
    return %arg0, %c0_i32 : i32, i32
  }
}

</mosaic_0001>

<llo_original>
// kernel: decoder_layer.9
$region0: #{decoder_layer.9}
  #allocation0 [shape = 'u32[]', space=smem, size = 0x4, offset = 0x4, fixed_abs, tag = 'smem constant byte address 0x4 - core index']
  #allocation1 [shape = 'u32[144,128]{1,0:T(1,128)}', space=vmem, size = 0x12000, scoped, tag = 'internal scratch']
  %s0 = inlined_call_operand.vmem [shape: f32[20,32], index: 0, kind: input, shape index: {}]
  %s1 = inlined_call_operand.vmem [shape: f32[32,64], index: 1, kind: input, shape index: {}]
  %s2 = inlined_call_operand.vmem [shape: f32[1,64], index: 2, kind: input, shape index: {}]
  %s3 = inlined_call_operand.vmem [shape: f32[20,64], index: 3, kind: output, shape index: {}]
  %s4 = sld [smem:[#allocation0]]
  $region22: #{decoder_layer.9} parent=0
    _
  %s6 = ssub.s32 1, %s4
  %s7 = scalar_select 0, %s6, %s4
  // Predicated region
  $region2: #{decoder_layer.9} parent=0 // pred_check
    _
  $region3: #{decoder_layer.9} parent=0 // pred_check_branch
    %9 = sbr.rel (0) target = $region5
  $region4: #{decoder_layer.9} parent=0 // pred_region
    _
  $region5: #{decoder_layer.9} parent=0 // pred_fallthru
    _
  // Predicated region
  $region6: #{decoder_layer.9} parent=0 // pred_check
    _
  $region7: #{decoder_layer.9} parent=0 // pred_check_branch
    %11 = sbr.rel (0) target = $region9
  $region8: #{decoder_layer.9} parent=0 // pred_region
    _
  $region9: #{decoder_layer.9} parent=0 // pred_fallthru
    _
  // Predicated region
  $region10: #{decoder_layer.9} parent=0 // pred_check
    _
  $region11: #{decoder_layer.9} parent=0 // pred_check_branch
    %13 = sbr.rel (0) target = $region13
  $region12: #{decoder_layer.9} parent=0 // pred_region
    _
  $region13: #{decoder_layer.9} parent=0 // pred_fallthru
    _
  %v15 = vld [vmem:[%s0] sm:$0xff]
  %v16 = vld [vmem:[%s0 + $0x8] sm:$0xff]
  %v17 = vld [vmem:[%s0 + $0x10] sm:$0xf]
  %v18 = vpack.c.bf16 %v16, %v15
  %v19 = vpack.c.bf16 %v17, %v17
  %v20 = vld [vmem:[%s1] sm:$0xff]
  %v21 = vld [vmem:[%s1 + $0x8] sm:$0xff]
  %v22 = vld [vmem:[%s1 + $0x10] sm:$0xff]
  %v23 = vld [vmem:[%s1 + $0x18] sm:$0xff]
  %v24 = vpack.c.bf16 %v21, %v20
  %v25 = vpack.c.bf16 %v23, %v22
  %v26 = vld [vmem:[%s2] sm:$0x1]
  %v28 = vlaneseq
  %v29 = vshrl.u32 %v28, 7
  %v30 = vsub.s32 0, %v29
  %v31 = vrot.slane %v26, %v30
  %vm33 = vcmask 261120
  %v35 = vsel %vm33, %v18, 0
  %v38 = vsel %vm33, %v19, 0
  %40 = vmatprep.subr.bf16.mxu0 0
  %41 = vmatpush1.bf16.msra.mxu0 %v24
  %42 = vmatprep.subr.bf16.mxu0 0
  %43 = vmatpush1.bf16.msra.mxu0 %v25
  %44 = vmatprep.subr.bf16.mxu0 0
  %45 = vmatpush1.bf16.msra.mxu0 0
  %46 = vmatprep.subr.bf16.mxu0 0
  %47 = vmatpush1.bf16.msra.mxu0 0
  %48 = vmatprep.subr.bf16.mxu0 0
  %49 = vmatpush1.bf16.msra.mxu0 0
  %50 = vmatprep.subr.bf16.mxu0 0
  %51 = vmatpush1.bf16.msra.mxu0 0
  %52 = vmatprep.subr.bf16.mxu0 0
  %53 = vmatpush1.bf16.msra.mxu0 0
  %54 = vmatprep.subr.bf16.mxu0 0
  %55 = vmatpush1.bf16.msra.mxu0 0
  %56 = vmatprep.subr.bf16.mxu0 0
  %57 = vmatpush1.bf16.msra.mxu0 0
  %58 = vmatprep.subr.bf16.mxu0 0
  %59 = vmatpush1.bf16.msra.mxu0 0
  %60 = vmatprep.subr.bf16.mxu0 0
  %61 = vmatpush1.bf16.msra.mxu0 0
  %62 = vmatprep.subr.bf16.mxu0 0
  %63 = vmatpush1.bf16.msra.mxu0 0
  %64 = vmatprep.subr.bf16.mxu0 0
  %65 = vmatpush1.bf16.msra.mxu0 0
  %66 = vmatprep.subr.bf16.mxu0 0
  %67 = vmatpush1.bf16.msra.mxu0 0
  %68 = vmatprep.subr.bf16.mxu0 0
  %69 = vmatpush1.bf16.msra.mxu0 0
  %70 = vmatprep.subr.bf16.mxu0 0
  %71 = vmatpush1.bf16.msra.mxu0 0
  %72 = vmatprep.mubr.bf16.mxu0 0
  %73 = vmatmul.mubr.bf16.gmra.mrb[0].mxu0 %v35
  %v74 = vpop.f32.mrb[0].mxu0
  %v75 = vadd.f32 %v31, %v74
  %v76 = vpop.f32.mrb[0].mxu0
  %v77 = vpop.f32.mrb[0].mxu0
  %v78 = vadd.f32 %v31, %v77
  %v79 = vpop.f32.mrb[0].mxu0
  %80 = vmatprep.mubr.bf16.mxu0 0
  %81 = vmatmul.mubr.bf16.gmra.mrb[0].mxu0 %v38
  %v82 = vpop.f32.mrb[0].mxu0
  %v83 = vadd.f32 %v31, %v82
  %v84 = vpop.f32.mrb[0].mxu0
  %v85 = vpop.f32.mrb[0].mxu0
  %v86 = vpop.f32.mrb[0].mxu0
  %87 = vdwg.mxu0
  %vm88 = vcmask 523264
  %89 = vst.msk [vmem:[%s3] sm:$0xff] %vm88, %v75
  %90 = vst.msk [vmem:[%s3 + $0x8] sm:$0xff] %vm88, %v78
  %vm91 = vcmask 519168
  %92 = vst.msk [vmem:[%s3 + $0x10] sm:$0xf] %vm91, %v83
  // Predicated region
  $region14: #{decoder_layer.9} parent=0 // pred_check
    _
  $region15: #{decoder_layer.9} parent=0 // pred_check_branch
    %94 = sbr.rel (0) target = $region17
  $region16: #{decoder_layer.9} parent=0 // pred_region
    _
  $region17: #{decoder_layer.9} parent=0 // pred_fallthru
    _
  // Predicated region
  $region18: #{decoder_layer.9} parent=0 // pred_check
    _
  $region19: #{decoder_layer.9} parent=0 // pred_check_branch
    %96 = sbr.rel (0) target = $region21
  $region20: #{decoder_layer.9} parent=0 // pred_region
    _
  $region21: #{decoder_layer.9} parent=0 // pred_fallthru
    _

// kernel: decoder_layer.6
$region0: #{decoder_layer.6}
  #allocation0 [shape = 'u32[]', space=smem, size = 0x4, offset = 0x4, fixed_abs, tag = 'smem constant byte address 0x4 - core index']
  #allocation1 [shape = 'u32[144,128]{1,0:T(1,128)}', space=vmem, size = 0x12000, scoped, tag = 'internal scratch']
  %s0 = inlined_call_operand.vmem [shape: f32[16,32], index: 0, kind: input, shape index: {}]
  %s1 = inlined_call_operand.vmem [shape: f32[1,32], index: 1, kind: input, shape index: {}]
  %s2 = inlined_call_operand.vmem [shape: f32[1,32], index: 2, kind: input, shape index: {}]
  %s3 = inlined_call_operand.vmem [shape: f32[32,96], index: 3, kind: input, shape index: {}]
  %s4 = inlined_call_operand.vmem [shape: f32[1,96], index: 4, kind: input, shape index: {}]
  %s5 = inlined_call_operand.vmem [shape: f32[16,96], index: 5, kind: output, shape index: {}]
  %s6 = sld [smem:[#allocation0]]
  $region30: #{decoder_layer.6} parent=0
    _
  %s8 = ssub.s32 1, %s6
  %s9 = scalar_select 0, %s8, %s6
  // Predicated region
  $region2: #{decoder_layer.6} parent=0 // pred_check
    _
  $region3: #{decoder_layer.6} parent=0 // pred_check_branch
    %11 = sbr.rel (0) target = $region5
  $region4: #{decoder_layer.6} parent=0 // pred_region
    _
  $region5: #{decoder_layer.6} parent=0 // pred_fallthru
    _
  // Predicated region
  $region6: #{decoder_layer.6} parent=0 // pred_check
    _
  $region7: #{decoder_layer.6} parent=0 // pred_check_branch
    %13 = sbr.rel (0) target = $region9
  $region8: #{decoder_layer.6} parent=0 // pred_region
    _
  $region9: #{decoder_layer.6} parent=0 // pred_fallthru
    _
  // Predicated region
  $region10: #{decoder_layer.6} parent=0 // pred_check
    _
  $region11: #{decoder_layer.6} parent=0 // pred_check_branch
    %15 = sbr.rel (0) target = $region13
  $region12: #{decoder_layer.6} parent=0 // pred_region
    _
  $region13: #{decoder_layer.6} parent=0 // pred_fallthru
    _
  // Predicated region
  $region14: #{decoder_layer.6} parent=0 // pred_check
    _
  $region15: #{decoder_layer.6} parent=0 // pred_check_branch
    %17 = sbr.rel (0) target = $region17
  $region16: #{decoder_layer.6} parent=0 // pred_region
    _
  $region17: #{decoder_layer.6} parent=0 // pred_fallthru
    _
  // Predicated region
  $region18: #{decoder_layer.6} parent=0 // pred_check
    _
  $region19: #{decoder_layer.6} parent=0 // pred_check_branch
    %19 = sbr.rel (0) target = $region21
  $region20: #{decoder_layer.6} parent=0 // pred_region
    _
  $region21: #{decoder_layer.6} parent=0 // pred_fallthru
    _
  %v21 = vld [vmem:[%s0] sm:$0xff]
  %v22 = vld [vmem:[%s0 + $0x8] sm:$0xff]
  %vm23 = vcmask 261120
  %v24 = vsel %vm23, %v21, 0.0
  %25 = vadd.xlane.f32.xlu0 %v24
  %v26 = vpop.xlane.xlu0 %25
  %v27 = vsel %vm23, %v22, 0.0
  %28 = vadd.xlane.f32.xlu0 %v27
  %v29 = vpop.xlane.xlu0 %28
  %v30 = vrcp.pop 32.0
  %v31 = vmul.f32 %v26, %v30
  %v32 = vmul.f32 %v29, %v30
  %v33 = vsub.f32 %v21, %v31
  %v34 = vsub.f32 %v22, %v32
  %v35 = vmul.f32 %v33, %v33
  %v36 = vmul.f32 %v34, %v34
  %v37 = vsel %vm23, %v35, 0.0
  %38 = vadd.xlane.f32.xlu0 %v37
  %v39 = vpop.xlane.xlu0 %38
  %v40 = vsel %vm23, %v36, 0.0
  %41 = vadd.xlane.f32.xlu0 %v40
  %v42 = vpop.xlane.xlu0 %41
  %v43 = vmul.f32 %v39, 0.032258064
  %v44 = vmul.f32 %v42, 0.032258064
  %v45 = vrsqrt.pop %v43
  %v46 = vmul.f32 %v43, %v45
  %vm47 = vcmp.eq.f32.partialorder %v43, inf
  %v48 = vsel %vm47, %v43, %v46
  %vm49 = vcmp.eq.f32.partialorder %v43, 0.0
  %v50 = vand.u32 %v43, 2147483648
  %v51 = vsel %vm49, %v50, %v48
  %v52 = vrsqrt.pop %v44
  %v53 = vmul.f32 %v44, %v52
  %vm54 = vcmp.eq.f32.partialorder %v44, inf
  %v55 = vsel %vm54, %v44, %v53
  %vm56 = vcmp.eq.f32.partialorder %v44, 0.0
  %v57 = vand.u32 %v44, 2147483648
  %v58 = vsel %vm56, %v57, %v55
  %v59 = vadd.f32 %v51, 1e-06
  %v60 = vadd.f32 %v58, 1e-06
  %v61 = vrcp.pop %v59
  %v62 = vrcp.pop %v60
  %v63 = vld [vmem:[%s1] sm:$0x1]
  %v65 = vlaneseq
  %v66 = vshrl.u32 %v65, 7
  %v67 = vsub.s32 0, %v66
  %v68 = vrot.slane %v63, %v67
  %v70 = vmul.f32 %v68, %v33
  %v71 = vmul.f32 %v68, %v34
  %v72 = vmul.f32 %v70, %v61
  %v73 = vmul.f32 %v71, %v62
  %v74 = vld [vmem:[%s2] sm:$0x1]
  %v76 = vlaneseq
  %v77 = vshrl.u32 %v76, 7
  %v78 = vsub.s32 0, %v77
  %v79 = vrot.slane %v74, %v78
  %v81 = vadd.f32 %v72, %v79
  %v82 = vadd.f32 %v73, %v79
  %v83 = vpack.c.bf16 %v82, %v81
  %v84 = vld [vmem:[%s3] sm:$0xff]
  %v85 = vld [vmem:[%s3 + $0x8] sm:$0xff]
  %v86 = vld [vmem:[%s3 + $0x10] sm:$0xff]
  %v87 = vld [vmem:[%s3 + $0x18] sm:$0xff]
  %v88 = vpack.c.bf16 %v85, %v84
  %v89 = vpack.c.bf16 %v87, %v86
  %v90 = vld [vmem:[%s4] sm:$0x1]
  %v92 = vlaneseq
  %v93 = vshrl.u32 %v92, 7
  %v94 = vsub.s32 0, %v93
  %v95 = vrot.slane %v90, %v94
  %v98 = vsel %vm23, %v83, 0
  %100 = vmatprep.subr.bf16.mxu0 0
  %101 = vmatpush1.bf16.msra.mxu0 %v88
  %102 = vmatprep.subr.bf16.mxu0 0
  %103 = vmatpush1.bf16.msra.mxu0 %v89
  %104 = vmatprep.subr.bf16.mxu0 0
  %105 = vmatpush1.bf16.msra.mxu0 0
  %106 = vmatprep.subr.bf16.mxu0 0
  %107 = vmatpush1.bf16.msra.mxu0 0
  %108 = vmatprep.subr.bf16.mxu0 0
  %109 = vmatpush1.bf16.msra.mxu0 0
  %110 = vmatprep.subr.bf16.mxu0 0
  %111 = vmatpush1.bf16.msra.mxu0 0
  %112 = vmatprep.subr.bf16.mxu0 0
  %113 = vmatpush1.bf16.msra.mxu0 0
  %114 = vmatprep.subr.bf16.mxu0 0
  %115 = vmatpush1.bf16.msra.mxu0 0
  %116 = vmatprep.subr.bf16.mxu0 0
  %117 = vmatpush1.bf16.msra.mxu0 0
  %118 = vmatprep.subr.bf16.mxu0 0
  %119 = vmatpush1.bf16.msra.mxu0 0
  %120 = vmatprep.subr.bf16.mxu0 0
  %121 = vmatpush1.bf16.msra.mxu0 0
  %122 = vmatprep.subr.bf16.mxu0 0
  %123 = vmatpush1.bf16.msra.mxu0 0
  %124 = vmatprep.subr.bf16.mxu0 0
  %125 = vmatpush1.bf16.msra.mxu0 0
  %126 = vmatprep.subr.bf16.mxu0 0
  %127 = vmatpush1.bf16.msra.mxu0 0
  %128 = vmatprep.subr.bf16.mxu0 0
  %129 = vmatpush1.bf16.msra.mxu0 0
  %130 = vmatprep.subr.bf16.mxu0 0
  %131 = vmatpush1.bf16.msra.mxu0 0
  %132 = vmatprep.mubr.bf16.mxu0 0
  %133 = vmatmul.mubr.bf16.gmra.mrb[0].mxu0 %v98
  %v134 = vpop.f32.mrb[0].mxu0
  %v135 = vadd.f32 %v95, %v134
  %v136 = vpop.f32.mrb[0].mxu0
  %v137 = vpop.f32.mrb[0].mxu0
  %v138 = vadd.f32 %v95, %v137
  %v139 = vpop.f32.mrb[0].mxu0
  %140 = vdwg.mxu0
  %vm141 = vcmask 785408
  %142 = vst.msk [vmem:[%s5] sm:$0xff] %vm141, %v135
  %143 = vst.msk [vmem:[%s5 + $0x8] sm:$0xff] %vm141, %v138
  // Predicated region
  $region22: #{decoder_layer.6} parent=0 // pred_check
    _
  $region23: #{decoder_layer.6} parent=0 // pred_check_branch
    %145 = sbr.rel (0) target = $region25
  $region24: #{decoder_layer.6} parent=0 // pred_region
    _
  $region25: #{decoder_layer.6} parent=0 // pred_fallthru
    _
  // Predicated region
  $region26: #{decoder_layer.6} parent=0 // pred_check
    _
  $region27: #{decoder_layer.6} parent=0 // pred_check_branch
    %147 = sbr.rel (0) target = $region29
  $region28: #{decoder_layer.6} parent=0 // pred_region
    _
  $region29: #{decoder_layer.6} parent=0 // pred_fallthru
    _

// kernel: decoder_layer.8
$region0: #{decoder_layer.8}
  #allocation0 [shape = 'u32[]', space=smem, size = 0x4, offset = 0x4, fixed_abs, tag = 'smem constant byte address 0x4 - core index']
  #allocation1 [shape = 'u32[144,128]{1,0:T(1,128)}', space=vmem, size = 0x12000, scoped, tag = 'internal scratch']
  %s0 = inlined_call_operand.vmem [shape: f32[16,32], index: 0, kind: input, shape index: {}]
  %s1 = inlined_call_operand.vmem [shape: f32[1,32], index: 1, kind: input, shape index: {}]
  %s2 = inlined_call_operand.vmem [shape: f32[1,32], index: 2, kind: input, shape index: {}]
  %s3 = inlined_call_operand.vmem [shape: f32[32,32], index: 3, kind: input, shape index: {}]
  %s4 = inlined_call_operand.vmem [shape: f32[1,32], index: 4, kind: input, shape index: {}]
  %s5 = inlined_call_operand.vmem [shape: f32[16,32], index: 5, kind: output, shape index: {}]
  %s6 = sld [smem:[#allocation0]]
  $region30: #{decoder_layer.8} parent=0
    _
  %s8 = ssub.s32 1, %s6
  %s9 = scalar_select 0, %s8, %s6
  // Predicated region
  $region2: #{decoder_layer.8} parent=0 // pred_check
    _
  $region3: #{decoder_layer.8} parent=0 // pred_check_branch
    %11 = sbr.rel (0) target = $region5
  $region4: #{decoder_layer.8} parent=0 // pred_region
    _
  $region5: #{decoder_layer.8} parent=0 // pred_fallthru
    _
  // Predicated region
  $region6: #{decoder_layer.8} parent=0 // pred_check
    _
  $region7: #{decoder_layer.8} parent=0 // pred_check_branch
    %13 = sbr.rel (0) target = $region9
  $region8: #{decoder_layer.8} parent=0 // pred_region
    _
  $region9: #{decoder_layer.8} parent=0 // pred_fallthru
    _
  // Predicated region
  $region10: #{decoder_layer.8} parent=0 // pred_check
    _
  $region11: #{decoder_layer.8} parent=0 // pred_check_branch
    %15 = sbr.rel (0) target = $region13
  $region12: #{decoder_layer.8} parent=0 // pred_region
    _
  $region13: #{decoder_layer.8} parent=0 // pred_fallthru
    _
  // Predicated region
  $region14: #{decoder_layer.8} parent=0 // pred_check
    _
  $region15: #{decoder_layer.8} parent=0 // pred_check_branch
    %17 = sbr.rel (0) target = $region17
  $region16: #{decoder_layer.8} parent=0 // pred_region
    _
  $region17: #{decoder_layer.8} parent=0 // pred_fallthru
    _
  // Predicated region
  $region18: #{decoder_layer.8} parent=0 // pred_check
    _
  $region19: #{decoder_layer.8} parent=0 // pred_check_branch
    %19 = sbr.rel (0) target = $region21
  $region20: #{decoder_layer.8} parent=0 // pred_region
    _
  $region21: #{decoder_layer.8} parent=0 // pred_fallthru
    _
  %v21 = vld [vmem:[%s0] sm:$0xff]
  %v22 = vld [vmem:[%s0 + $0x8] sm:$0xff]
  %vm23 = vcmask 261120
  %v24 = vsel %vm23, %v21, 0.0
  %25 = vadd.xlane.f32.xlu0 %v24
  %v26 = vpop.xlane.xlu0 %25
  %v27 = vsel %vm23, %v22, 0.0
  %28 = vadd.xlane.f32.xlu0 %v27
  %v29 = vpop.xlane.xlu0 %28
  %v30 = vrcp.pop 32.0
  %v31 = vmul.f32 %v26, %v30
  %v32 = vmul.f32 %v29, %v30
  %v33 = vsub.f32 %v21, %v31
  %v34 = vsub.f32 %v22, %v32
  %v35 = vmul.f32 %v33, %v33
  %v36 = vmul.f32 %v34, %v34
  %v37 = vsel %vm23, %v35, 0.0
  %38 = vadd.xlane.f32.xlu0 %v37
  %v39 = vpop.xlane.xlu0 %38
  %v40 = vsel %vm23, %v36, 0.0
  %41 = vadd.xlane.f32.xlu0 %v40
  %v42 = vpop.xlane.xlu0 %41
  %v43 = vmul.f32 %v39, 0.032258064
  %v44 = vmul.f32 %v42, 0.032258064
  %v45 = vrsqrt.pop %v43
  %v46 = vmul.f32 %v43, %v45
  %vm47 = vcmp.eq.f32.partialorder %v43, inf
  %v48 = vsel %vm47, %v43, %v46
  %vm49 = vcmp.eq.f32.partialorder %v43, 0.0
  %v50 = vand.u32 %v43, 2147483648
  %v51 = vsel %vm49, %v50, %v48
  %v52 = vrsqrt.pop %v44
  %v53 = vmul.f32 %v44, %v52
  %vm54 = vcmp.eq.f32.partialorder %v44, inf
  %v55 = vsel %vm54, %v44, %v53
  %vm56 = vcmp.eq.f32.partialorder %v44, 0.0
  %v57 = vand.u32 %v44, 2147483648
  %v58 = vsel %vm56, %v57, %v55
  %v59 = vadd.f32 %v51, 1e-06
  %v60 = vadd.f32 %v58, 1e-06
  %v61 = vrcp.pop %v59
  %v62 = vrcp.pop %v60
  %v63 = vld [vmem:[%s1] sm:$0x1]
  %v65 = vlaneseq
  %v66 = vshrl.u32 %v65, 7
  %v67 = vsub.s32 0, %v66
  %v68 = vrot.slane %v63, %v67
  %v70 = vmul.f32 %v68, %v33
  %v71 = vmul.f32 %v68, %v34
  %v72 = vmul.f32 %v70, %v61
  %v73 = vmul.f32 %v71, %v62
  %v74 = vld [vmem:[%s2] sm:$0x1]
  %v76 = vlaneseq
  %v77 = vshrl.u32 %v76, 7
  %v78 = vsub.s32 0, %v77
  %v79 = vrot.slane %v74, %v78
  %v81 = vadd.f32 %v72, %v79
  %v82 = vadd.f32 %v73, %v79
  %v83 = vpack.c.bf16 %v82, %v81
  %v84 = vld [vmem:[%s3] sm:$0xff]
  %v85 = vld [vmem:[%s3 + $0x8] sm:$0xff]
  %v86 = vld [vmem:[%s3 + $0x10] sm:$0xff]
  %v87 = vld [vmem:[%s3 + $0x18] sm:$0xff]
  %v88 = vpack.c.bf16 %v85, %v84
  %v89 = vpack.c.bf16 %v87, %v86
  %v90 = vld [vmem:[%s4] sm:$0x1]
  %v92 = vlaneseq
  %v93 = vshrl.u32 %v92, 7
  %v94 = vsub.s32 0, %v93
  %v95 = vrot.slane %v90, %v94
  %v98 = vsel %vm23, %v83, 0
  %100 = vmatprep.subr.bf16.mxu0 0
  %101 = vmatpush1.bf16.msra.mxu0 %v88
  %102 = vmatprep.subr.bf16.mxu0 0
  %103 = vmatpush1.bf16.msra.mxu0 %v89
  %104 = vmatprep.subr.bf16.mxu0 0
  %105 = vmatpush1.bf16.msra.mxu0 0
  %106 = vmatprep.subr.bf16.mxu0 0
  %107 = vmatpush1.bf16.msra.mxu0 0
  %108 = vmatprep.subr.bf16.mxu0 0
  %109 = vmatpush1.bf16.msra.mxu0 0
  %110 = vmatprep.subr.bf16.mxu0 0
  %111 = vmatpush1.bf16.msra.mxu0 0
  %112 = vmatprep.subr.bf16.mxu0 0
  %113 = vmatpush1.bf16.msra.mxu0 0
  %114 = vmatprep.subr.bf16.mxu0 0
  %115 = vmatpush1.bf16.msra.mxu0 0
  %116 = vmatprep.subr.bf16.mxu0 0
  %117 = vmatpush1.bf16.msra.mxu0 0
  %118 = vmatprep.subr.bf16.mxu0 0
  %119 = vmatpush1.bf16.msra.mxu0 0
  %120 = vmatprep.subr.bf16.mxu0 0
  %121 = vmatpush1.bf16.msra.mxu0 0
  %122 = vmatprep.subr.bf16.mxu0 0
  %123 = vmatpush1.bf16.msra.mxu0 0
  %124 = vmatprep.subr.bf16.mxu0 0
  %125 = vmatpush1.bf16.msra.mxu0 0
  %126 = vmatprep.subr.bf16.mxu0 0
  %127 = vmatpush1.bf16.msra.mxu0 0
  %128 = vmatprep.subr.bf16.mxu0 0
  %129 = vmatpush1.bf16.msra.mxu0 0
  %130 = vmatprep.subr.bf16.mxu0 0
  %131 = vmatpush1.bf16.msra.mxu0 0
  %132 = vmatprep.mubr.bf16.mxu0 0
  %133 = vmatmul.mubr.bf16.gmra.mrb[0].mxu0 %v98
  %v134 = vpop.f32.mrb[0].mxu0
  %v135 = vadd.f32 %v95, %v134
  %v136 = vpop.f32.mrb[0].mxu0
  %v137 = vpop.f32.mrb[0].mxu0
  %v138 = vadd.f32 %v95, %v137
  %v139 = vpop.f32.mrb[0].mxu0
  %140 = vdwg.mxu0
  %141 = vst.msk [vmem:[%s5] sm:$0xff] %vm23, %v135
  %142 = vst.msk [vmem:[%s5 + $0x8] sm:$0xff] %vm23, %v138
  // Predicated region
  $region22: #{decoder_layer.8} parent=0 // pred_check
    _
  $region23: #{decoder_layer.8} parent=0 // pred_check_branch
    %144 = sbr.rel (0) target = $region25
  $region24: #{decoder_layer.8} parent=0 // pred_region
    _
  $region25: #{decoder_layer.8} parent=0 // pred_fallthru
    _
  // Predicated region
  $region26: #{decoder_layer.8} parent=0 // pred_check
    _
  $region27: #{decoder_layer.8} parent=0 // pred_check_branch
    %146 = sbr.rel (0) target = $region29
  $region28: #{decoder_layer.8} parent=0 // pred_region
    _
  $region29: #{decoder_layer.8} parent=0 // pred_fallthru
    _

// kernel: decoder_layer.7
$region0: #{decoder_layer.7}
  #allocation0 [shape = 'u32[]', space=smem, size = 0x4, offset = 0x4, fixed_abs, tag = 'smem constant byte address 0x4 - core index']
  #allocation1 [shape = 'u32[144,128]{1,0:T(1,128)}', space=vmem, size = 0x12000, scoped, tag = 'internal scratch']
  %s0 = inlined_call_operand.vmem [shape: f32[2,8,96], index: 0, kind: input, shape index: {}]
  %s1 = inlined_call_operand.vmem [shape: f32[2,1,8,8], index: 1, kind: input, shape index: {}]
  %s2 = inlined_call_operand.vmem [shape: f32[32,32], index: 2, kind: input, shape index: {}]
  %s3 = inlined_call_operand.vmem [shape: f32[1,32], index: 3, kind: input, shape index: {}]
  %s4 = inlined_call_operand.vmem [shape: f32[2,8,32], index: 4, kind: input, shape index: {}]
  %s5 = inlined_call_operand.vmem [shape: f32[2,8,32], index: 5, kind: output, shape index: {}]
  %s6 = sld [smem:[#allocation0]]
  $region53: #{decoder_layer.7} parent=0
    _
  %s8 = ssub.s32 1, %s6
  %s9 = scalar_select 0, %s8, %s6
  loop: start=0, step=1, limit=4
  $region2: #{decoder_layer.7} parent=0 // loop_pre_header
    _
  $region3: #{decoder_layer.7} parent=0 // loop_header
    %s11 = sphi 0, %s15
    %p12 = scmp.ge.s32.totalorder %s11, 4
    %s21 = sphi 0, %s23
    %s24 = sphi 0, %s21
    %s25 = sphi 0, %s24
    %s41 = sphi 0, %s25
    %s47 = sphi 0, %s49
    %s50 = sphi 0, %s47
    %s51 = sphi 0, %s50
    %s67 = sphi 0, %s51
    %s71 = sphi 0, %s71
    %s73 = sphi 0, %s71
    %s74 = sphi 0, %s73
    %s88 = sphi 0, %s74
    %s92 = sphi 0, %s92
    %s94 = sphi 0, %s92
    %s95 = sphi 0, %s94
    %s109 = sphi 0, %s95
    %s115 = sphi 0, %s117
    %s118 = sphi 0, %s115
    %s119 = sphi 0, %s118
    %s135 = sphi 0, %s119
    %s141 = sphi 0, %s143
    %s144 = sphi 0, %s141
    %s145 = sphi 0, %s144
    %s161 = sphi 0, %s145
  $region4: #{decoder_layer.7} parent=0 // loop_header_branch
    %14 = sbr.rel (%p12) target = $region8
  $region5: #{decoder_layer.7} parent=0 // loop_body
    %s16 = ssub.s32 %s11, 1
    %s17 = ssub.s32 %s11, 2
    %s18 = sadd.s32 %s11, 1
    %s19 = ssub.s32 %s11, %s18
    %p20 = scmp.eq.s32.totalorder %s19, 0
    %s22 = sadd.s32 %s21, 1
    %s23 = scalar_select %p20, %s21, %s22
    %p26 = pneg %p20
    %p27 = scmp.eq.s32.totalorder %s11, 1
    %p28 = por %p26, %p27
    %p29 = scmp.ne.s32.totalorder %s21, %s24
    %p30 = scmp.eq.s32.totalorder %s11, 0
    %p31 = por %p29, %p30
    %p32 = scmp.ne.s32.totalorder %s21, %s24
    %p33 = scmp.eq.s32.totalorder %s16, 1
    %p34 = por %p32, %p33
    %p35 = scmp.ne.s32.totalorder %s24, %s25
    %p36 = scmp.eq.s32.totalorder %s16, 0
    %p37 = por %p35, %p36
    %p38 = scmp.ne.s32.totalorder %s24, %s25
    %p39 = scmp.eq.s32.totalorder %s17, 1
    %p40 = por %p38, %p39
    %p42 = scmp.ne.s32.totalorder %s25, %s41
    %p43 = scmp.eq.s32.totalorder %s17, 0
    %p44 = por %p42, %p43
    %s45 = ssub.s32 %s11, %s18
    %p46 = scmp.eq.s32.totalorder %s45, 0
    %s48 = sadd.s32 %s47, 1
    %s49 = scalar_select %p46, %s47, %s48
    %p52 = pneg %p46
    %p53 = scmp.eq.s32.totalorder %s11, 1
    %p54 = por %p52, %p53
    %p55 = scmp.ne.s32.totalorder %s47, %s50
    %p56 = scmp.eq.s32.totalorder %s11, 0
    %p57 = por %p55, %p56
    %p58 = scmp.ne.s32.totalorder %s47, %s50
    %p59 = scmp.eq.s32.totalorder %s16, 1
    %p60 = por %p58, %p59
    %p61 = scmp.ne.s32.totalorder %s50, %s51
    %p62 = scmp.eq.s32.totalorder %s16, 0
    %p63 = por %p61, %p62
    %p64 = scmp.ne.s32.totalorder %s50, %s51
    %p65 = scmp.eq.s32.totalorder %s17, 1
    %p66 = por %p64, %p65
    %p68 = scmp.ne.s32.totalorder %s51, %s67
    %p69 = scmp.eq.s32.totalorder %s17, 0
    %p70 = por %p68, %p69
    %s72 = sadd.s32 %s71, 1
    %p75 = scmp.eq.s32.totalorder %s11, 1
    %p76 = scmp.ne.s32.totalorder %s71, %s73
    %p77 = scmp.eq.s32.totalorder %s11, 0
    %p78 = por %p76, %p77
    %p79 = scmp.ne.s32.totalorder %s71, %s73
    %p80 = scmp.eq.s32.totalorder %s16, 1
    %p81 = por %p79, %p80
    %p82 = scmp.ne.s32.totalorder %s73, %s74
    %p83 = scmp.eq.s32.totalorder %s16, 0
    %p84 = por %p82, %p83
    %p85 = scmp.ne.s32.totalorder %s73, %s74
    %p86 = scmp.eq.s32.totalorder %s17, 1
    %p87 = por %p85, %p86
    %p89 = scmp.ne.s32.totalorder %s74, %s88
    %p90 = scmp.eq.s32.totalorder %s17, 0
    %p91 = por %p89, %p90
    %s93 = sadd.s32 %s92, 1
    %p96 = scmp.eq.s32.totalorder %s11, 1
    %p97 = scmp.ne.s32.totalorder %s92, %s94
    %p98 = scmp.eq.s32.totalorder %s11, 0
    %p99 = por %p97, %p98
    %p100 = scmp.ne.s32.totalorder %s92, %s94
    %p101 = scmp.eq.s32.totalorder %s16, 1
    %p102 = por %p100, %p101
    %p103 = scmp.ne.s32.totalorder %s94, %s95
    %p104 = scmp.eq.s32.totalorder %s16, 0
    %p105 = por %p103, %p104
    %p106 = scmp.ne.s32.totalorder %s94, %s95
    %p107 = scmp.eq.s32.totalorder %s17, 1
    %p108 = por %p106, %p107
    %p110 = scmp.ne.s32.totalorder %s95, %s109
    %p111 = scmp.eq.s32.totalorder %s17, 0
    %p112 = por %p110, %p111
    %s113 = ssub.s32 %s11, %s18
    %p114 = scmp.eq.s32.totalorder %s113, 0
    %s116 = sadd.s32 %s115, 1
    %s117 = scalar_select %p114, %s115, %s116
    %p120 = pneg %p114
    %p121 = scmp.eq.s32.totalorder %s11, 1
    %p122 = por %p120, %p121
    %p123 = scmp.ne.s32.totalorder %s115, %s118
    %p124 = scmp.eq.s32.totalorder %s11, 0
    %p125 = por %p123, %p124
    %p126 = scmp.ne.s32.totalorder %s115, %s118
    %p127 = scmp.eq.s32.totalorder %s16, 1
    %p128 = por %p126, %p127
    %p129 = scmp.ne.s32.totalorder %s118, %s119
    %p130 = scmp.eq.s32.totalorder %s16, 0
    %p131 = por %p129, %p130
    %p132 = scmp.ne.s32.totalorder %s118, %s119
    %p133 = scmp.eq.s32.totalorder %s17, 1
    %p134 = por %p132, %p133
    %p136 = scmp.ne.s32.totalorder %s119, %s135
    %p137 = scmp.eq.s32.totalorder %s17, 0
    %p138 = por %p136, %p137
    %s139 = ssub.s32 %s11, %s18
    %p140 = scmp.eq.s32.totalorder %s139, 0
    %s142 = sadd.s32 %s141, 1
    %s143 = scalar_select %p140, %s141, %s142
    %p146 = pneg %p140
    %p147 = scmp.eq.s32.totalorder %s11, 1
    %p148 = por %p146, %p147
    %p149 = scmp.ne.s32.totalorder %s141, %s144
    %p150 = scmp.eq.s32.totalorder %s11, 0
    %p151 = por %p149, %p150
    %p152 = scmp.ne.s32.totalorder %s141, %s144
    %p153 = scmp.eq.s32.totalorder %s16, 1
    %p154 = por %p152, %p153
    %p155 = scmp.ne.s32.totalorder %s144, %s145
    %p156 = scmp.eq.s32.totalorder %s16, 0
    %p157 = por %p155, %p156
    %p158 = scmp.ne.s32.totalorder %s144, %s145
    %p159 = scmp.eq.s32.totalorder %s17, 1
    %p160 = por %p158, %p159
    %p162 = scmp.ne.s32.totalorder %s145, %s161
    %p163 = scmp.eq.s32.totalorder %s17, 0
    %p164 = por %p162, %p163
    %p165 = scmp.le.s32.totalorder 1, %s11
    %p166 = scmp.lt.s32.totalorder %s11, 3
    %p167 = pnand %p165, %p166
    %p168 = pneg %p167
    // Predicated region
    $region9: #{decoder_layer.7} parent=5 // pred_check
      _
    $region10: #{decoder_layer.7} parent=5 // pred_check_branch
      %170 = sbr.rel (%p167) target = $region12
    $region11: #{decoder_layer.7} parent=5 // pred_region
      %s171 = ssub.s32 %s11, 1
      // Predicated region
      $region13: #{decoder_layer.7} parent=11 // pred_check
        %p172 = pneg %p84
      $region14: #{decoder_layer.7} parent=11 // pred_check_branch
        %174 = sbr.rel (%p172) target = $region16
      $region15: #{decoder_layer.7} parent=11 // pred_region
        _
      $region16: #{decoder_layer.7} parent=11 // pred_fallthru
        _
      // Predicated region
      $region17: #{decoder_layer.7} parent=11 // pred_check
        %p175 = pneg %p105
      $region18: #{decoder_layer.7} parent=11 // pred_check_branch
        %177 = sbr.rel (%p175) target = $region20
      $region19: #{decoder_layer.7} parent=11 // pred_region
        _
      $region20: #{decoder_layer.7} parent=11 // pred_fallthru
        _
    $region12: #{decoder_layer.7} parent=5 // pred_fallthru
      _
    %p178 = scmp.lt.s32.totalorder %s11, 2
    // Predicated region
    $region21: #{decoder_layer.7} parent=5 // pred_check
      %p179 = pneg %p178
    $region22: #{decoder_layer.7} parent=5 // pred_check_branch
      %181 = sbr.rel (%p179) target = $region24
    $region23: #{decoder_layer.7} parent=5 // pred_region
      // Predicated region
      $region25: #{decoder_layer.7} parent=23 // pred_check
        %p182 = pneg %p31
      $region26: #{decoder_layer.7} parent=23 // pred_check_branch
        %184 = sbr.rel (%p182) target = $region28
      $region27: #{decoder_layer.7} parent=23 // pred_region
        %p185 = scmp.lt.s32.totalorder %s11, 1
        %s186 = scalar_select %p185, %s11, 1
        %s187 = smul.addr %s186, 8
        %s188 = scalar_lea.vmem %s0, %s187
      $region28: #{decoder_layer.7} parent=23 // pred_fallthru
        _
      // Predicated region
      $region29: #{decoder_layer.7} parent=23 // pred_check
        %p189 = pneg %p57
      $region30: #{decoder_layer.7} parent=23 // pred_check_branch
        %191 = sbr.rel (%p189) target = $region32
      $region31: #{decoder_layer.7} parent=23 // pred_region
        %p192 = scmp.lt.s32.totalorder %s11, 1
        %s193 = scalar_select %p192, %s11, 1
        %s194 = smul.addr %s193, 8
        %s195 = scalar_lea.vmem %s1, %s194
      $region32: #{decoder_layer.7} parent=23 // pred_fallthru
        _
      // Predicated region
      $region33: #{decoder_layer.7} parent=23 // pred_check
        %p196 = pneg %p125
      $region34: #{decoder_layer.7} parent=23 // pred_check_branch
        %198 = sbr.rel (%p196) target = $region36
      $region35: #{decoder_layer.7} parent=23 // pred_region
        %p199 = scmp.lt.s32.totalorder %s11, 1
        %s200 = scalar_select %p199, %s11, 1
        %s201 = smul.addr %s200, 8
        %s202 = scalar_lea.vmem %s4, %s201
      $region36: #{decoder_layer.7} parent=23 // pred_fallthru
        _
    $region24: #{decoder_layer.7} parent=5 // pred_fallthru
      _
    %p203 = scmp.le.s32.totalorder 1, %s11
    %p204 = scmp.lt.s32.totalorder %s11, 3
    %p205 = pnand %p203, %p204
    %p206 = pneg %p205
    // Predicated region
    $region37: #{decoder_layer.7} parent=5 // pred_check
      _
    $region38: #{decoder_layer.7} parent=5 // pred_check_branch
      %208 = sbr.rel (%p205) target = $region40
    $region39: #{decoder_layer.7} parent=5 // pred_region
      %s209 = ssub.s32 %s11, 1
      %p210 = scmp.lt.s32.totalorder %s16, 1
      %s211 = scalar_select %p210, %s16, 1
      %s212 = smul.addr %s211, 8
      %s213 = scalar_lea.vmem %s0, %s212
      %p214 = pneg %p37
      %p215 = pneg %p34
      %p216 = scmp.lt.s32.totalorder %s16, 1
      %s217 = scalar_select %p216, %s16, 1
      %s218 = smul.addr %s217, 8
      %s219 = scalar_lea.vmem %s1, %s218
      %p220 = pneg %p63
      %p221 = pneg %p60
      %p222 = pneg %p84
      %p223 = pneg %p81
      %p224 = pneg %p105
      %p225 = pneg %p102
      %p226 = scmp.lt.s32.totalorder %s16, 1
      %s227 = scalar_select %p226, %s16, 1
      %s228 = smul.addr %s227, 8
      %s229 = scalar_lea.vmem %s4, %s228
      %p230 = pneg %p131
      %p231 = pneg %p128
      %p232 = pneg %p157
      %p233 = pneg %p154
      %p234 = scmp.lt.s32.totalorder %s16, 1
      %s235 = scalar_select %p234, %s16, 1
      %s236 = smul.addr %s235, 8
      %s237 = scalar_lea.vmem %s5, %s236
      %p238 = scmp.lt.s32.totalorder %s16, 1
      %s239 = scalar_select %p238, %s16, 1
      %s240 = smul.addr %s239, 8
      %s241 = scalar_lea.vmem %s0, %s240
      %p242 = scmp.lt.s32.totalorder %s16, 1
      %s243 = scalar_select %p242, %s16, 1
      %s244 = smul.addr %s243, 8
      %s245 = scalar_lea.vmem %s1, %s244
      %p246 = scmp.lt.s32.totalorder %s16, 1
      %s247 = scalar_select %p246, %s16, 1
      %s248 = smul.addr %s247, 8
      %s249 = scalar_lea.vmem %s4, %s248
      %p250 = scmp.lt.s32.totalorder %s16, 1
      %s251 = scalar_select %p250, %s16, 1
      %s252 = smul.addr %s251, 8
      %s253 = scalar_lea.vmem %s5, %s252
      %v255 = vld [vmem:[%s245] sm:$0xff]
      %v256 = vld [vmem:[%s241] sm:$0xff]
      %v257 = vmul.f32 %v256, 0.35355338
      %v258 = vpack.c.bf16 %v257, %v257
      %v259 = vpack.c.bf16 %v256, %v256
      %261 = vrot.lane.b32.xlu0 %v259, 96
      %v262 = vpop.permute.xlu0 %261
      %vm263 = vcmask 64512
      %v265 = vsel %vm263, %v258, 0
      %v268 = vsel %vm263, %v262, 0
      %270 = vmatprep.subr.bf16.mxu0 0
      %271 = vmatpush1.bf16.xpose.msra.mxu0 %v268
      %272 = vmatprep.subr.bf16.mxu0 0
      %273 = vmatpush1.bf16.xpose.msra.mxu0 0
      %274 = vmatprep.subr.bf16.mxu0 0
      %275 = vmatpush1.bf16.xpose.msra.mxu0 0
      %276 = vmatprep.subr.bf16.mxu0 0
      %277 = vmatpush1.bf16.xpose.msra.mxu0 0
      %278 = vmatprep.subr.bf16.mxu0 0
      %279 = vmatpush1.bf16.xpose.msra.mxu0 0
      %280 = vmatprep.subr.bf16.mxu0 0
      %281 = vmatpush1.bf16.xpose.msra.mxu0 0
      %282 = vmatprep.subr.bf16.mxu0 0
      %283 = vmatpush1.bf16.xpose.msra.mxu0 0
      %284 = vmatprep.subr.bf16.mxu0 0
      %285 = vmatpush1.bf16.xpose.msra.mxu0 0
      %286 = vmatprep.subr.bf16.mxu0 0
      %287 = vmatpush1.bf16.xpose.msra.mxu0 0
      %288 = vmatprep.subr.bf16.mxu0 0
      %289 = vmatpush1.bf16.xpose.msra.mxu0 0
      %290 = vmatprep.subr.bf16.mxu0 0
      %291 = vmatpush1.bf16.xpose.msra.mxu0 0
      %292 = vmatprep.subr.bf16.mxu0 0
      %293 = vmatpush1.bf16.xpose.msra.mxu0 0
      %294 = vmatprep.subr.bf16.mxu0 0
      %295 = vmatpush1.bf16.xpose.msra.mxu0 0
      %296 = vmatprep.subr.bf16.mxu0 0
      %297 = vmatpush1.bf16.xpose.msra.mxu0 0
      %298 = vmatprep.subr.bf16.mxu0 0
      %299 = vmatpush1.bf16.xpose.msra.mxu0 0
      %300 = vmatprep.subr.bf16.mxu0 0
      %301 = vmatpush1.bf16.xpose.msra.mxu0 0
      %302 = vmatprep.mubr.bf16.mxu0 0
      %303 = vmatmul.mubr.bf16.gmra.mrb[0].mxu0 %v265
      %v304 = vpop.f32.mrb[0].mxu0
      %v305 = vadd.f32 0.0, %v304
      %v306 = vpop.f32.mrb[0].mxu0
      %v307 = vpop.f32.mrb[0].mxu0
      %v308 = vpop.f32.mrb[0].mxu0
      %309 = vdwg.mxu0
      %vm310 = vcmp.eq.f32.partialorder %v255, 0.0
      %v311 = vsel %vm310, -1e+09, %v305
      %v312 = vsel %vm263, %v311, -inf
      %313 = vmax.xlane.f32.xlu0 %v312
      %v314 = vpop.xlane.xlu0 %313
      %v315 = vsub.f32 %v311, %v314
      %v316 = vmul.f32 %v315, 1.442695
      %v317 = vpow.pop %v316
      %v318 = vsel %vm263, %v317, 0.0
      %319 = vadd.xlane.f32.xlu0 %v318
      %v320 = vpop.xlane.xlu0 %319
      %v321 = vrcp.pop %v320
      %v322 = vmul.f32 %v317, %v321
      %v323 = vpack.c.bf16 %v322, %v322
      %324 = vrot.lane.b32.xlu0 %v259, 64
      %v325 = vpop.permute.xlu0 %324
      %v327 = vsel %vm263, %v323, 0
      %vm329 = vcmask 1043456
      %v331 = vsel %vm329, %v325, 0
      %333 = vmatprep.subr.bf16.mxu0 0
      %334 = vmatpush1.bf16.msra.mxu0 %v331
      %335 = vmatprep.subr.bf16.mxu0 0
      %336 = vmatpush1.bf16.msra.mxu0 0
      %337 = vmatprep.subr.bf16.mxu0 0
      %338 = vmatpush1.bf16.msra.mxu0 0
      %339 = vmatprep.subr.bf16.mxu0 0
      %340 = vmatpush1.bf16.msra.mxu0 0
      %341 = vmatprep.subr.bf16.mxu0 0
      %342 = vmatpush1.bf16.msra.mxu0 0
      %343 = vmatprep.subr.bf16.mxu0 0
      %344 = vmatpush1.bf16.msra.mxu0 0
      %345 = vmatprep.subr.bf16.mxu0 0
      %346 = vmatpush1.bf16.msra.mxu0 0
      %347 = vmatprep.subr.bf16.mxu0 0
      %348 = vmatpush1.bf16.msra.mxu0 0
      %349 = vmatprep.subr.bf16.mxu0 0
      %350 = vmatpush1.bf16.msra.mxu0 0
      %351 = vmatprep.subr.bf16.mxu0 0
      %352 = vmatpush1.bf16.msra.mxu0 0
      %353 = vmatprep.subr.bf16.mxu0 0
      %354 = vmatpush1.bf16.msra.mxu0 0
      %355 = vmatprep.subr.bf16.mxu0 0
      %356 = vmatpush1.bf16.msra.mxu0 0
      %357 = vmatprep.subr.bf16.mxu0 0
      %358 = vmatpush1.bf16.msra.mxu0 0
      %359 = vmatprep.subr.bf16.mxu0 0
      %360 = vmatpush1.bf16.msra.mxu0 0
      %361 = vmatprep.subr.bf16.mxu0 0
      %362 = vmatpush1.bf16.msra.mxu0 0
      %363 = vmatprep.subr.bf16.mxu0 0
      %364 = vmatpush1.bf16.msra.mxu0 0
      %365 = vmatprep.mubr.bf16.mxu0 0
      %366 = vmatmul.mubr.bf16.gmra.mrb[0].mxu0 %v327
      %v367 = vpop.f32.mrb[0].mxu0
      %v368 = vadd.f32 0.0, %v367
      %v369 = vpop.f32.mrb[0].mxu0
      %v370 = vpop.f32.mrb[0].mxu0
      %v371 = vpop.f32.mrb[0].mxu0
      %372 = vdwg.mxu0
      %374 = vrot.lane.b32.xlu0 %v258, 120
      %v375 = vpop.permute.xlu0 %374
      %376 = vrot.lane.b32.xlu0 %v259, 88
      %v377 = vpop.permute.xlu0 %376
      %v379 = vsel %vm263, %v375, 0
      %v382 = vsel %vm263, %v377, 0
      %384 = vmatprep.subr.bf16.mxu0 0
      %385 = vmatpush1.bf16.xpose.msra.mxu0 %v382
      %386 = vmatprep.subr.bf16.mxu0 0
      %387 = vmatpush1.bf16.xpose.msra.mxu0 0
      %388 = vmatprep.subr.bf16.mxu0 0
      %389 = vmatpush1.bf16.xpose.msra.mxu0 0
      %390 = vmatprep.subr.bf16.mxu0 0
      %391 = vmatpush1.bf16.xpose.msra.mxu0 0
      %392 = vmatprep.subr.bf16.mxu0 0
      %393 = vmatpush1.bf16.xpose.msra.mxu0 0
      %394 = vmatprep.subr.bf16.mxu0 0
      %395 = vmatpush1.bf16.xpose.msra.mxu0 0
      %396 = vmatprep.subr.bf16.mxu0 0
      %397 = vmatpush1.bf16.xpose.msra.mxu0 0
      %398 = vmatprep.subr.bf16.mxu0 0
      %399 = vmatpush1.bf16.xpose.msra.mxu0 0
      %400 = vmatprep.subr.bf16.mxu0 0
      %401 = vmatpush1.bf16.xpose.msra.mxu0 0
      %402 = vmatprep.subr.bf16.mxu0 0
      %403 = vmatpush1.bf16.xpose.msra.mxu0 0
      %404 = vmatprep.subr.bf16.mxu0 0
      %405 = vmatpush1.bf16.xpose.msra.mxu0 0
      %406 = vmatprep.subr.bf16.mxu0 0
      %407 = vmatpush1.bf16.xpose.msra.mxu0 0
      %408 = vmatprep.subr.bf16.mxu0 0
      %409 = vmatpush1.bf16.xpose.msra.mxu0 0
      %410 = vmatprep.subr.bf16.mxu0 0
      %411 = vmatpush1.bf16.xpose.msra.mxu0 0
      %412 = vmatprep.subr.bf16.mxu0 0
      %413 = vmatpush1.bf16.xpose.msra.mxu0 0
      %414 = vmatprep.subr.bf16.mxu0 0
      %415 = vmatpush1.bf16.xpose.msra.mxu0 0
      %416 = vmatprep.mubr.bf16.mxu0 0
      %417 = vmatmul.mubr.bf16.gmra.mrb[0].mxu0 %v379
      %v418 = vpop.f32.mrb[0].mxu0
      %v419 = vadd.f32 0.0, %v418
      %v420 = vpop.f32.mrb[0].mxu0
      %v421 = vpop.f32.mrb[0].mxu0
      %v422 = vpop.f32.mrb[0].mxu0
      %423 = vdwg.mxu0
      %v424 = vsel %vm310, -1e+09, %v419
      %v425 = vsel %vm263, %v424, -inf
      %426 = vmax.xlane.f32.xlu0 %v425
      %v427 = vpop.xlane.xlu0 %426
      %v428 = vsub.f32 %v424, %v427
      %v429 = vmul.f32 %v428, 1.442695
      %v430 = vpow.pop %v429
      %v431 = vsel %vm263, %v430, 0.0
      %432 = vadd.xlane.f32.xlu0 %v431
      %v433 = vpop.xlane.xlu0 %432
      %v434 = vrcp.pop %v433
      %v435 = vmul.f32 %v430, %v434
      %v436 = vpack.c.bf16 %v435, %v435
      %437 = vrot.lane.b32.xlu0 %v259, 56
      %v438 = vpop.permute.xlu0 %437
      %v440 = vsel %vm263, %v436, 0
      %v443 = vsel %vm329, %v438, 0
      %445 = vmatprep.subr.bf16.mxu0 0
      %446 = vmatpush1.bf16.msra.mxu0 %v443
      %447 = vmatprep.subr.bf16.mxu0 0
      %448 = vmatpush1.bf16.msra.mxu0 0
      %449 = vmatprep.subr.bf16.mxu0 0
      %450 = vmatpush1.bf16.msra.mxu0 0
      %451 = vmatprep.subr.bf16.mxu0 0
      %452 = vmatpush1.bf16.msra.mxu0 0
      %453 = vmatprep.subr.bf16.mxu0 0
      %454 = vmatpush1.bf16.msra.mxu0 0
      %455 = vmatprep.subr.bf16.mxu0 0
      %456 = vmatpush1.bf16.msra.mxu0 0
      %457 = vmatprep.subr.bf16.mxu0 0
      %458 = vmatpush1.bf16.msra.mxu0 0
      %459 = vmatprep.subr.bf16.mxu0 0
      %460 = vmatpush1.bf16.msra.mxu0 0
      %461 = vmatprep.subr.bf16.mxu0 0
      %462 = vmatpush1.bf16.msra.mxu0 0
      %463 = vmatprep.subr.bf16.mxu0 0
      %464 = vmatpush1.bf16.msra.mxu0 0
      %465 = vmatprep.subr.bf16.mxu0 0
      %466 = vmatpush1.bf16.msra.mxu0 0
      %467 = vmatprep.subr.bf16.mxu0 0
      %468 = vmatpush1.bf16.msra.mxu0 0
      %469 = vmatprep.subr.bf16.mxu0 0
      %470 = vmatpush1.bf16.msra.mxu0 0
      %471 = vmatprep.subr.bf16.mxu0 0
      %472 = vmatpush1.bf16.msra.mxu0 0
      %473 = vmatprep.subr.bf16.mxu0 0
      %474 = vmatpush1.bf16.msra.mxu0 0
      %475 = vmatprep.subr.bf16.mxu0 0
      %476 = vmatpush1.bf16.msra.mxu0 0
      %477 = vmatprep.mubr.bf16.mxu0 0
      %478 = vmatmul.mubr.bf16.gmra.mrb[0].mxu0 %v440
      %v479 = vpop.f32.mrb[0].mxu0
      %v480 = vadd.f32 0.0, %v479
      %v481 = vpop.f32.mrb[0].mxu0
      %v482 = vpop.f32.mrb[0].mxu0
      %v483 = vpop.f32.mrb[0].mxu0
      %484 = vdwg.mxu0
      %485 = vrot.lane.b32.xlu0 %v258, 112
      %v486 = vpop.permute.xlu0 %485
      %487 = vrot.lane.b32.xlu0 %v259, 80
      %v488 = vpop.permute.xlu0 %487
      %v490 = vsel %vm263, %v486, 0
      %v493 = vsel %vm263, %v488, 0
      %495 = vmatprep.subr.bf16.mxu0 0
      %496 = vmatpush1.bf16.xpose.msra.mxu0 %v493
      %497 = vmatprep.subr.bf16.mxu0 0
      %498 = vmatpush1.bf16.xpose.msra.mxu0 0
      %499 = vmatprep.subr.bf16.mxu0 0
      %500 = vmatpush1.bf16.xpose.msra.mxu0 0
      %501 = vmatprep.subr.bf16.mxu0 0
      %502 = vmatpush1.bf16.xpose.msra.mxu0 0
      %503 = vmatprep.subr.bf16.mxu0 0
      %504 = vmatpush1.bf16.xpose.msra.mxu0 0
      %505 = vmatprep.subr.bf16.mxu0 0
      %506 = vmatpush1.bf16.xpose.msra.mxu0 0
      %507 = vmatprep.subr.bf16.mxu0 0
      %508 = vmatpush1.bf16.xpose.msra.mxu0 0
      %509 = vmatprep.subr.bf16.mxu0 0
      %510 = vmatpush1.bf16.xpose.msra.mxu0 0
      %511 = vmatprep.subr.bf16.mxu0 0
      %512 = vmatpush1.bf16.xpose.msra.mxu0 0
      %513 = vmatprep.subr.bf16.mxu0 0
      %514 = vmatpush1.bf16.xpose.msra.mxu0 0
      %515 = vmatprep.subr.bf16.mxu0 0
      %516 = vmatpush1.bf16.xpose.msra.mxu0 0
      %517 = vmatprep.subr.bf16.mxu0 0
      %518 = vmatpush1.bf16.xpose.msra.mxu0 0
      %519 = vmatprep.subr.bf16.mxu0 0
      %520 = vmatpush1.bf16.xpose.msra.mxu0 0
      %521 = vmatprep.subr.bf16.mxu0 0
      %522 = vmatpush1.bf16.xpose.msra.mxu0 0
      %523 = vmatprep.subr.bf16.mxu0 0
      %524 = vmatpush1.bf16.xpose.msra.mxu0 0
      %525 = vmatprep.subr.bf16.mxu0 0
      %526 = vmatpush1.bf16.xpose.msra.mxu0 0
      %527 = vmatprep.mubr.bf16.mxu0 0
      %528 = vmatmul.mubr.bf16.gmra.mrb[0].mxu0 %v490
      %v529 = vpop.f32.mrb[0].mxu0
      %v530 = vadd.f32 0.0, %v529
      %v531 = vpop.f32.mrb[0].mxu0
      %v532 = vpop.f32.mrb[0].mxu0
      %v533 = vpop.f32.mrb[0].mxu0
      %534 = vdwg.mxu0
      %v535 = vsel %vm310, -1e+09, %v530
      %v536 = vsel %vm263, %v535, -inf
      %537 = vmax.xlane.f32.xlu0 %v536
      %v538 = vpop.xlane.xlu0 %537
      %v539 = vsub.f32 %v535, %v538
      %v540 = vmul.f32 %v539, 1.442695
      %v541 = vpow.pop %v540
      %v542 = vsel %vm263, %v541, 0.0
      %543 = vadd.xlane.f32.xlu0 %v542
      %v544 = vpop.xlane.xlu0 %543
      %v545 = vrcp.pop %v544
      %v546 = vmul.f32 %v541, %v545
      %v547 = vpack.c.bf16 %v546, %v546
      %548 = vrot.lane.b32.xlu0 %v259, 48
      %v549 = vpop.permute.xlu0 %548
      %v551 = vsel %vm263, %v547, 0
      %v554 = vsel %vm329, %v549, 0
      %556 = vmatprep.subr.bf16.mxu0 0
      %557 = vmatpush1.bf16.msra.mxu0 %v554
      %558 = vmatprep.subr.bf16.mxu0 0
      %559 = vmatpush1.bf16.msra.mxu0 0
      %560 = vmatprep.subr.bf16.mxu0 0
      %561 = vmatpush1.bf16.msra.mxu0 0
      %562 = vmatprep.subr.bf16.mxu0 0
      %563 = vmatpush1.bf16.msra.mxu0 0
      %564 = vmatprep.subr.bf16.mxu0 0
      %565 = vmatpush1.bf16.msra.mxu0 0
      %566 = vmatprep.subr.bf16.mxu0 0
      %567 = vmatpush1.bf16.msra.mxu0 0
      %568 = vmatprep.subr.bf16.mxu0 0
      %569 = vmatpush1.bf16.msra.mxu0 0
      %570 = vmatprep.subr.bf16.mxu0 0
      %571 = vmatpush1.bf16.msra.mxu0 0
      %572 = vmatprep.subr.bf16.mxu0 0
      %573 = vmatpush1.bf16.msra.mxu0 0
      %574 = vmatprep.subr.bf16.mxu0 0
      %575 = vmatpush1.bf16.msra.mxu0 0
      %576 = vmatprep.subr.bf16.mxu0 0
      %577 = vmatpush1.bf16.msra.mxu0 0
      %578 = vmatprep.subr.bf16.mxu0 0
      %579 = vmatpush1.bf16.msra.mxu0 0
      %580 = vmatprep.subr.bf16.mxu0 0
      %581 = vmatpush1.bf16.msra.mxu0 0
      %582 = vmatprep.subr.bf16.mxu0 0
      %583 = vmatpush1.bf16.msra.mxu0 0
      %584 = vmatprep.subr.bf16.mxu0 0
      %585 = vmatpush1.bf16.msra.mxu0 0
      %586 = vmatprep.subr.bf16.mxu0 0
      %587 = vmatpush1.bf16.msra.mxu0 0
      %588 = vmatprep.mubr.bf16.mxu0 0
      %589 = vmatmul.mubr.bf16.gmra.mrb[0].mxu0 %v551
      %v590 = vpop.f32.mrb[0].mxu0
      %v591 = vadd.f32 0.0, %v590
      %v592 = vpop.f32.mrb[0].mxu0
      %v593 = vpop.f32.mrb[0].mxu0
      %v594 = vpop.f32.mrb[0].mxu0
      %595 = vdwg.mxu0
      %596 = vrot.lane.b32.xlu0 %v258, 104
      %v597 = vpop.permute.xlu0 %596
      %598 = vrot.lane.b32.xlu0 %v259, 72
      %v599 = vpop.permute.xlu0 %598
      %v601 = vsel %vm263, %v597, 0
      %v604 = vsel %vm263, %v599, 0
      %606 = vmatprep.subr.bf16.mxu0 0
      %607 = vmatpush1.bf16.xpose.msra.mxu0 %v604
      %608 = vmatprep.subr.bf16.mxu0 0
      %609 = vmatpush1.bf16.xpose.msra.mxu0 0
      %610 = vmatprep.subr.bf16.mxu0 0
      %611 = vmatpush1.bf16.xpose.msra.mxu0 0
      %612 = vmatprep.subr.bf16.mxu0 0
      %613 = vmatpush1.bf16.xpose.msra.mxu0 0
      %614 = vmatprep.subr.bf16.mxu0 0
      %615 = vmatpush1.bf16.xpose.msra.mxu0 0
      %616 = vmatprep.subr.bf16.mxu0 0
      %617 = vmatpush1.bf16.xpose.msra.mxu0 0
      %618 = vmatprep.subr.bf16.mxu0 0
      %619 = vmatpush1.bf16.xpose.msra.mxu0 0
      %620 = vmatprep.subr.bf16.mxu0 0
      %621 = vmatpush1.bf16.xpose.msra.mxu0 0
      %622 = vmatprep.subr.bf16.mxu0 0
      %623 = vmatpush1.bf16.xpose.msra.mxu0 0
      %624 = vmatprep.subr.bf16.mxu0 0
      %625 = vmatpush1.bf16.xpose.msra.mxu0 0
      %626 = vmatprep.subr.bf16.mxu0 0
      %627 = vmatpush1.bf16.xpose.msra.mxu0 0
      %628 = vmatprep.subr.bf16.mxu0 0
      %629 = vmatpush1.bf16.xpose.msra.mxu0 0
      %630 = vmatprep.subr.bf16.mxu0 0
      %631 = vmatpush1.bf16.xpose.msra.mxu0 0
      %632 = vmatprep.subr.bf16.mxu0 0
      %633 = vmatpush1.bf16.xpose.msra.mxu0 0
      %634 = vmatprep.subr.bf16.mxu0 0
      %635 = vmatpush1.bf16.xpose.msra.mxu0 0
      %636 = vmatprep.subr.bf16.mxu0 0
      %637 = vmatpush1.bf16.xpose.msra.mxu0 0
      %638 = vmatprep.mubr.bf16.mxu0 0
      %639 = vmatmul.mubr.bf16.gmra.mrb[0].mxu0 %v601
      %v640 = vpop.f32.mrb[0].mxu0
      %v641 = vadd.f32 0.0, %v640
      %v642 = vpop.f32.mrb[0].mxu0
      %v643 = vpop.f32.mrb[0].mxu0
      %v644 = vpop.f32.mrb[0].mxu0
      %645 = vdwg.mxu0
      %v646 = vsel %vm310, -1e+09, %v641
      %v647 = vsel %vm263, %v646, -inf
      %648 = vmax.xlane.f32.xlu0 %v647
      %v649 = vpop.xlane.xlu0 %648
      %v650 = vsub.f32 %v646, %v649
      %v651 = vmul.f32 %v650, 1.442695
      %v652 = vpow.pop %v651
      %v653 = vsel %vm263, %v652, 0.0
      %654 = vadd.xlane.f32.xlu0 %v653
      %v655 = vpop.xlane.xlu0 %654
      %v656 = vrcp.pop %v655
      %v657 = vmul.f32 %v652, %v656
      %v658 = vpack.c.bf16 %v657, %v657
      %659 = vrot.lane.b32.xlu0 %v259, 40
      %v660 = vpop.permute.xlu0 %659
      %v662 = vsel %vm263, %v658, 0
      %v665 = vsel %vm329, %v660, 0
      %667 = vmatprep.subr.bf16.mxu0 0
      %668 = vmatpush1.bf16.msra.mxu0 %v665
      %669 = vmatprep.subr.bf16.mxu0 0
      %670 = vmatpush1.bf16.msra.mxu0 0
      %671 = vmatprep.subr.bf16.mxu0 0
      %672 = vmatpush1.bf16.msra.mxu0 0
      %673 = vmatprep.subr.bf16.mxu0 0
      %674 = vmatpush1.bf16.msra.mxu0 0
      %675 = vmatprep.subr.bf16.mxu0 0
      %676 = vmatpush1.bf16.msra.mxu0 0
      %677 = vmatprep.subr.bf16.mxu0 0
      %678 = vmatpush1.bf16.msra.mxu0 0
      %679 = vmatprep.subr.bf16.mxu0 0
      %680 = vmatpush1.bf16.msra.mxu0 0
      %681 = vmatprep.subr.bf16.mxu0 0
      %682 = vmatpush1.bf16.msra.mxu0 0
      %683 = vmatprep.subr.bf16.mxu0 0
      %684 = vmatpush1.bf16.msra.mxu0 0
      %685 = vmatprep.subr.bf16.mxu0 0
      %686 = vmatpush1.bf16.msra.mxu0 0
      %687 = vmatprep.subr.bf16.mxu0 0
      %688 = vmatpush1.bf16.msra.mxu0 0
      %689 = vmatprep.subr.bf16.mxu0 0
      %690 = vmatpush1.bf16.msra.mxu0 0
      %691 = vmatprep.subr.bf16.mxu0 0
      %692 = vmatpush1.bf16.msra.mxu0 0
      %693 = vmatprep.subr.bf16.mxu0 0
      %694 = vmatpush1.bf16.msra.mxu0 0
      %695 = vmatprep.subr.bf16.mxu0 0
      %696 = vmatpush1.bf16.msra.mxu0 0
      %697 = vmatprep.subr.bf16.mxu0 0
      %698 = vmatpush1.bf16.msra.mxu0 0
      %699 = vmatprep.mubr.bf16.mxu0 0
      %700 = vmatmul.mubr.bf16.gmra.mrb[0].mxu0 %v662
      %v701 = vpop.f32.mrb[0].mxu0
      %v702 = vadd.f32 0.0, %v701
      %v703 = vpop.f32.mrb[0].mxu0
      %v704 = vpop.f32.mrb[0].mxu0
      %v705 = vpop.f32.mrb[0].mxu0
      %706 = vdwg.mxu0
      %708 = vrot.lane.b32.xlu0 %v480, 8
      %v709 = vpop.permute.xlu0 %708
      %712 = vrot.lane.b32.xlu0 %v591, 16
      %v713 = vpop.permute.xlu0 %712
      %716 = vrot.lane.b32.xlu0 %v702, 24
      %v717 = vpop.permute.xlu0 %716
      %v719 = vsel %vm263, %v368, %v709
      %vm720 = vcmask 130048
      %v721 = vsel %vm720, %v719, %v713
      %vm722 = vcmask 195584
      %v723 = vsel %vm722, %v721, %v717
      %v724 = vpack.c.bf16 %v723, %v723
      %v725 = vld [vmem:[%s2] sm:$0xff]
      %v726 = vld [vmem:[%s2 + $0x8] sm:$0xff]
      %v727 = vld [vmem:[%s2 + $0x10] sm:$0xff]
      %v728 = vld [vmem:[%s2 + $0x18] sm:$0xff]
      %v729 = vpack.c.bf16 %v726, %v725
      %v730 = vpack.c.bf16 %v728, %v727
      %v731 = vld [vmem:[%s3] sm:$0x1]
      %v733 = vlaneseq
      %v734 = vshrl.u32 %v733, 7
      %v735 = vsub.s32 0, %v734
      %v736 = vrot.slane %v731, %v735
      %vm738 = vcmask 261120
      %v740 = vsel %vm738, %v724, 0
      %742 = vmatprep.subr.bf16.mxu0 0
      %743 = vmatpush1.bf16.msra.mxu0 %v729
      %744 = vmatprep.subr.bf16.mxu0 0
      %745 = vmatpush1.bf16.msra.mxu0 %v730
      %746 = vmatprep.subr.bf16.mxu0 0
      %747 = vmatpush1.bf16.msra.mxu0 0
      %748 = vmatprep.subr.bf16.mxu0 0
      %749 = vmatpush1.bf16.msra.mxu0 0
      %750 = vmatprep.subr.bf16.mxu0 0
      %751 = vmatpush1.bf16.msra.mxu0 0
      %752 = vmatprep.subr.bf16.mxu0 0
      %753 = vmatpush1.bf16.msra.mxu0 0
      %754 = vmatprep.subr.bf16.mxu0 0
      %755 = vmatpush1.bf16.msra.mxu0 0
      %756 = vmatprep.subr.bf16.mxu0 0
      %757 = vmatpush1.bf16.msra.mxu0 0
      %758 = vmatprep.subr.bf16.mxu0 0
      %759 = vmatpush1.bf16.msra.mxu0 0
      %760 = vmatprep.subr.bf16.mxu0 0
      %761 = vmatpush1.bf16.msra.mxu0 0
      %762 = vmatprep.subr.bf16.mxu0 0
      %763 = vmatpush1.bf16.msra.mxu0 0
      %764 = vmatprep.subr.bf16.mxu0 0
      %765 = vmatpush1.bf16.msra.mxu0 0
      %766 = vmatprep.subr.bf16.mxu0 0
      %767 = vmatpush1.bf16.msra.mxu0 0
      %768 = vmatprep.subr.bf16.mxu0 0
      %769 = vmatpush1.bf16.msra.mxu0 0
      %770 = vmatprep.subr.bf16.mxu0 0
      %771 = vmatpush1.bf16.msra.mxu0 0
      %772 = vmatprep.subr.bf16.mxu0 0
      %773 = vmatpush1.bf16.msra.mxu0 0
      %774 = vmatprep.mubr.bf16.mxu0 0
      %775 = vmatmul.mubr.bf16.gmra.mrb[0].mxu0 %v740
      %v776 = vpop.f32.mrb[0].mxu0
      %v777 = vadd.f32 %v736, %v776
      %v778 = vpop.f32.mrb[0].mxu0
      %v779 = vpop.f32.mrb[0].mxu0
      %v780 = vpop.f32.mrb[0].mxu0
      %781 = vdwg.mxu0
      %v782 = vld [vmem:[%s249] sm:$0xff]
      %v783 = vadd.f32 %v782, %v777
      %784 = vst.msk [vmem:[%s253] sm:$0xff] %vm738, %v783
      %p785 = scmp.lt.s32.totalorder %s16, 1
      %s786 = scalar_select %p785, %s16, 1
      %s787 = smul.addr %s786, 8
      %s788 = scalar_lea.vmem %s5, %s787
      // Predicated region
      $region41: #{decoder_layer.7} parent=39 // pred_check
        %p789 = pneg %p154
      $region42: #{decoder_layer.7} parent=39 // pred_check_branch
        %791 = sbr.rel (%p789) target = $region44
      $region43: #{decoder_layer.7} parent=39 // pred_region
        _
      $region44: #{decoder_layer.7} parent=39 // pred_fallthru
        _
    $region40: #{decoder_layer.7} parent=5 // pred_fallthru
      _
    %p792 = scmp.le.s32.totalorder 2, %s11
    // Predicated region
    $region45: #{decoder_layer.7} parent=5 // pred_check
      %p793 = pneg %p792
    $region46: #{decoder_layer.7} parent=5 // pred_check_branch
      %795 = sbr.rel (%p793) target = $region48
    $region47: #{decoder_layer.7} parent=5 // pred_region
      %s796 = ssub.s32 %s11, 2
      // Predicated region
      $region49: #{decoder_layer.7} parent=47 // pred_check
        %p797 = pneg %p160
      $region50: #{decoder_layer.7} parent=47 // pred_check_branch
        %799 = sbr.rel (%p797) target = $region52
      $region51: #{decoder_layer.7} parent=47 // pred_region
        %p800 = scmp.lt.s32.totalorder %s17, 1
        %s801 = scalar_select %p800, %s17, 1
        %s802 = smul.addr %s801, 8
        %s803 = scalar_lea.vmem %s5, %s802
      $region52: #{decoder_layer.7} parent=47 // pred_fallthru
        _
    $region48: #{decoder_layer.7} parent=5 // pred_fallthru
      _
  $region6: #{decoder_layer.7} parent=0 // loop_footer
    %s15 = sadd.s32 1, %s11
  $region7: #{decoder_layer.7} parent=0 // loop_footer_branch
    %10 = sbr.rel target = $region3
  $region8: #{decoder_layer.7} parent=0 // loop_exit
    _

// kernel: decoder_layer.11
$region0: #{decoder_layer.11}
  #allocation0 [shape = 'u32[]', space=smem, size = 0x4, offset = 0x4, fixed_abs, tag = 'smem constant byte address 0x4 - core index']
  #allocation1 [shape = 'u32[144,128]{1,0:T(1,128)}', space=vmem, size = 0x12000, scoped, tag = 'internal scratch']
  %s0 = inlined_call_operand.vmem [shape: f32[16,32], index: 0, kind: input, shape index: {}]
  %s1 = inlined_call_operand.vmem [shape: f32[1,32], index: 1, kind: input, shape index: {}]
  %s2 = inlined_call_operand.vmem [shape: f32[1,32], index: 2, kind: input, shape index: {}]
  %s3 = inlined_call_operand.vmem [shape: f32[32,64], index: 3, kind: input, shape index: {}]
  %s4 = inlined_call_operand.vmem [shape: f32[1,64], index: 4, kind: input, shape index: {}]
  %s5 = inlined_call_operand.vmem [shape: f32[64,32], index: 5, kind: input, shape index: {}]
  %s6 = inlined_call_operand.vmem [shape: f32[1,32], index: 6, kind: input, shape index: {}]
  %s7 = inlined_call_operand.hbm [shape: f32[16,32], index: 7, kind: output, shape index: {}]
  %s8 = sld [smem:[#allocation0]]
  $region38: #{decoder_layer.11} parent=0
    _
  %s10 = ssub.s32 1, %s8
  %s11 = scalar_select 0, %s10, %s8
  $region1: #{decoder_layer.11} parent=0
    #allocation2 [shape = 'u8[8192]{0}', space=vmem, size = 0x2000, scoped, tag = 'output window, operand 0, single buffered']
    #allocation3 [shape = 's32[1]{0}', space=sflag, size = 0x4, scoped, tag = 'scoped memory for decoder_layer.11']
    %12 = vsyncpa [#allocation3], 0
    // Predicated region
    $region2: #{decoder_layer.11} parent=1 // pred_check
      _
    $region3: #{decoder_layer.11} parent=1 // pred_check_branch
      %14 = sbr.rel (0) target = $region5
    $region4: #{decoder_layer.11} parent=1 // pred_region
      _
    $region5: #{decoder_layer.11} parent=1 // pred_fallthru
      _
    // Predicated region
    $region6: #{decoder_layer.11} parent=1 // pred_check
      _
    $region7: #{decoder_layer.11} parent=1 // pred_check_branch
      %16 = sbr.rel (0) target = $region9
    $region8: #{decoder_layer.11} parent=1 // pred_region
      _
    $region9: #{decoder_layer.11} parent=1 // pred_fallthru
      _
    // Predicated region
    $region10: #{decoder_layer.11} parent=1 // pred_check
      _
    $region11: #{decoder_layer.11} parent=1 // pred_check_branch
      %18 = sbr.rel (0) target = $region13
    $region12: #{decoder_layer.11} parent=1 // pred_region
      _
    $region13: #{decoder_layer.11} parent=1 // pred_fallthru
      _
    // Predicated region
    $region14: #{decoder_layer.11} parent=1 // pred_check
      _
    $region15: #{decoder_layer.11} parent=1 // pred_check_branch
      %20 = sbr.rel (0) target = $region17
    $region16: #{decoder_layer.11} parent=1 // pred_region
      _
    $region17: #{decoder_layer.11} parent=1 // pred_fallthru
      _
    // Predicated region
    $region18: #{decoder_layer.11} parent=1 // pred_check
      _
    $region19: #{decoder_layer.11} parent=1 // pred_check_branch
      %22 = sbr.rel (0) target = $region21
    $region20: #{decoder_layer.11} parent=1 // pred_region
      _
    $region21: #{decoder_layer.11} parent=1 // pred_fallthru
      _
    // Predicated region
    $region22: #{decoder_layer.11} parent=1 // pred_check
      _
    $region23: #{decoder_layer.11} parent=1 // pred_check_branch
      %24 = sbr.rel (0) target = $region25
    $region24: #{decoder_layer.11} parent=1 // pred_region
      _
    $region25: #{decoder_layer.11} parent=1 // pred_fallthru
      _
    // Predicated region
    $region26: #{decoder_layer.11} parent=1 // pred_check
      _
    $region27: #{decoder_layer.11} parent=1 // pred_check_branch
      %26 = sbr.rel (0) target = $region29
    $region28: #{decoder_layer.11} parent=1 // pred_region
      _
    $region29: #{decoder_layer.11} parent=1 // pred_fallthru
      _
    %v28 = vld [vmem:[%s0] sm:$0xff]
    %v29 = vld [vmem:[%s0 + $0x8] sm:$0xff]
    %vm30 = vcmask 261120
    %v31 = vsel %vm30, %v28, 0.0
    %32 = vadd.xlane.f32.xlu0 %v31
    %v33 = vpop.xlane.xlu0 %32
    %v34 = vsel %vm30, %v29, 0.0
    %35 = vadd.xlane.f32.xlu0 %v34
    %v36 = vpop.xlane.xlu0 %35
    %v37 = vrcp.pop 32.0
    %v38 = vmul.f32 %v33, %v37
    %v39 = vmul.f32 %v36, %v37
    %v40 = vsub.f32 %v28, %v38
    %v41 = vsub.f32 %v29, %v39
    %v42 = vmul.f32 %v40, %v40
    %v43 = vmul.f32 %v41, %v41
    %v44 = vsel %vm30, %v42, 0.0
    %45 = vadd.xlane.f32.xlu0 %v44
    %v46 = vpop.xlane.xlu0 %45
    %v47 = vsel %vm30, %v43, 0.0
    %48 = vadd.xlane.f32.xlu0 %v47
    %v49 = vpop.xlane.xlu0 %48
    %v50 = vmul.f32 %v46, 0.032258064
    %v51 = vmul.f32 %v49, 0.032258064
    %v52 = vrsqrt.pop %v50
    %v53 = vmul.f32 %v50, %v52
    %vm54 = vcmp.eq.f32.partialorder %v50, inf
    %v55 = vsel %vm54, %v50, %v53
    %vm56 = vcmp.eq.f32.partialorder %v50, 0.0
    %v57 = vand.u32 %v50, 2147483648
    %v58 = vsel %vm56, %v57, %v55
    %v59 = vrsqrt.pop %v51
    %v60 = vmul.f32 %v51, %v59
    %vm61 = vcmp.eq.f32.partialorder %v51, inf
    %v62 = vsel %vm61, %v51, %v60
    %vm63 = vcmp.eq.f32.partialorder %v51, 0.0
    %v64 = vand.u32 %v51, 2147483648
    %v65 = vsel %vm63, %v64, %v62
    %v66 = vadd.f32 %v58, 1e-06
    %v67 = vadd.f32 %v65, 1e-06
    %v68 = vrcp.pop %v66
    %v69 = vrcp.pop %v67
    %v70 = vld [vmem:[%s1] sm:$0x1]
    %v72 = vlaneseq
    %v73 = vshrl.u32 %v72, 7
    %v74 = vsub.s32 0, %v73
    %v75 = vrot.slane %v70, %v74
    %v77 = vmul.f32 %v75, %v40
    %v78 = vmul.f32 %v75, %v41
    %v79 = vmul.f32 %v77, %v68
    %v80 = vmul.f32 %v78, %v69
    %v81 = vld [vmem:[%s2] sm:$0x1]
    %v83 = vlaneseq
    %v84 = vshrl.u32 %v83, 7
    %v85 = vsub.s32 0, %v84
    %v86 = vrot.slane %v81, %v85
    %v88 = vadd.f32 %v79, %v86
    %v89 = vadd.f32 %v80, %v86
    %v90 = vpack.c.bf16 %v89, %v88
    %v91 = vld [vmem:[%s3] sm:$0xff]
    %v92 = vld [vmem:[%s3 + $0x8] sm:$0xff]
    %v93 = vld [vmem:[%s3 + $0x10] sm:$0xff]
    %v94 = vld [vmem:[%s3 + $0x18] sm:$0xff]
    %v95 = vpack.c.bf16 %v92, %v91
    %v96 = vpack.c.bf16 %v94, %v93
    %v97 = vld [vmem:[%s4] sm:$0x1]
    %v99 = vlaneseq
    %v100 = vshrl.u32 %v99, 7
    %v101 = vsub.s32 0, %v100
    %v102 = vrot.slane %v97, %v101
    %v105 = vsel %vm30, %v90, 0
    %107 = vmatprep.subr.bf16.mxu0 0
    %108 = vmatpush1.bf16.msra.mxu0 %v95
    %109 = vmatprep.subr.bf16.mxu0 0
    %110 = vmatpush1.bf16.msra.mxu0 %v96
    %111 = vmatprep.subr.bf16.mxu0 0
    %112 = vmatpush1.bf16.msra.mxu0 0
    %113 = vmatprep.subr.bf16.mxu0 0
    %114 = vmatpush1.bf16.msra.mxu0 0
    %115 = vmatprep.subr.bf16.mxu0 0
    %116 = vmatpush1.bf16.msra.mxu0 0
    %117 = vmatprep.subr.bf16.mxu0 0
    %118 = vmatpush1.bf16.msra.mxu0 0
    %119 = vmatprep.subr.bf16.mxu0 0
    %120 = vmatpush1.bf16.msra.mxu0 0
    %121 = vmatprep.subr.bf16.mxu0 0
    %122 = vmatpush1.bf16.msra.mxu0 0
    %123 = vmatprep.subr.bf16.mxu0 0
    %124 = vmatpush1.bf16.msra.mxu0 0
    %125 = vmatprep.subr.bf16.mxu0 0
    %126 = vmatpush1.bf16.msra.mxu0 0
    %127 = vmatprep.subr.bf16.mxu0 0
    %128 = vmatpush1.bf16.msra.mxu0 0
    %129 = vmatprep.subr.bf16.mxu0 0
    %130 = vmatpush1.bf16.msra.mxu0 0
    %131 = vmatprep.subr.bf16.mxu0 0
    %132 = vmatpush1.bf16.msra.mxu0 0
    %133 = vmatprep.subr.bf16.mxu0 0
    %134 = vmatpush1.bf16.msra.mxu0 0
    %135 = vmatprep.subr.bf16.mxu0 0
    %136 = vmatpush1.bf16.msra.mxu0 0
    %137 = vmatprep.subr.bf16.mxu0 0
    %138 = vmatpush1.bf16.msra.mxu0 0
    %139 = vmatprep.mubr.bf16.mxu0 0
    %140 = vmatmul.mubr.bf16.gmra.mrb[0].mxu0 %v105
    %v141 = vpop.f32.mrb[0].mxu0
    %v142 = vadd.f32 %v102, %v141
    %v143 = vpop.f32.mrb[0].mxu0
    %v144 = vpop.f32.mrb[0].mxu0
    %v145 = vadd.f32 %v102, %v144
    %v146 = vpop.f32.mrb[0].mxu0
    %147 = vdwg.mxu0
    %v148 = vmax.f32 %v142, 0.0
    %v149 = vmax.f32 %v145, 0.0
    %v150 = vpack.c.bf16 %v149, %v148
    %v151 = vld [vmem:[%s5] sm:$0xff]
    %v152 = vld [vmem:[%s5 + $0x8] sm:$0xff]
    %v153 = vld [vmem:[%s5 + $0x10] sm:$0xff]
    %v154 = vld [vmem:[%s5 + $0x18] sm:$0xff]
    %v155 = vld [vmem:[%s5 + $0x20] sm:$0xff]
    %v156 = vld [vmem:[%s5 + $0x28] sm:$0xff]
    %v157 = vld [vmem:[%s5 + $0x30] sm:$0xff]
    %v158 = vld [vmem:[%s5 + $0x38] sm:$0xff]
    %v159 = vpack.c.bf16 %v152, %v151
    %v160 = vpack.c.bf16 %v154, %v153
    %v161 = vpack.c.bf16 %v156, %v155
    %v162 = vpack.c.bf16 %v158, %v157
    %v163 = vld [vmem:[%s6] sm:$0x1]
    %v165 = vlaneseq
    %v166 = vshrl.u32 %v165, 7
    %v167 = vsub.s32 0, %v166
    %v168 = vrot.slane %v163, %v167
    %vm170 = vcmask 523264
    %v172 = vsel %vm170, %v150, 0
    %174 = vmatprep.subr.bf16.mxu0 0
    %175 = vmatpush1.bf16.msra.mxu0 %v159
    %176 = vmatprep.subr.bf16.mxu0 0
    %177 = vmatpush1.bf16.msra.mxu0 %v160
    %178 = vmatprep.subr.bf16.mxu0 0
    %179 = vmatpush1.bf16.msra.mxu0 %v161
    %180 = vmatprep.subr.bf16.mxu0 0
    %181 = vmatpush1.bf16.msra.mxu0 %v162
    %182 = vmatprep.subr.bf16.mxu0 0
    %183 = vmatpush1.bf16.msra.mxu0 0
    %184 = vmatprep.subr.bf16.mxu0 0
    %185 = vmatpush1.bf16.msra.mxu0 0
    %186 = vmatprep.subr.bf16.mxu0 0
    %187 = vmatpush1.bf16.msra.mxu0 0
    %188 = vmatprep.subr.bf16.mxu0 0
    %189 = vmatpush1.bf16.msra.mxu0 0
    %190 = vmatprep.subr.bf16.mxu0 0
    %191 = vmatpush1.bf16.msra.mxu0 0
    %192 = vmatprep.subr.bf16.mxu0 0
    %193 = vmatpush1.bf16.msra.mxu0 0
    %194 = vmatprep.subr.bf16.mxu0 0
    %195 = vmatpush1.bf16.msra.mxu0 0
    %196 = vmatprep.subr.bf16.mxu0 0
    %197 = vmatpush1.bf16.msra.mxu0 0
    %198 = vmatprep.subr.bf16.mxu0 0
    %199 = vmatpush1.bf16.msra.mxu0 0
    %200 = vmatprep.subr.bf16.mxu0 0
    %201 = vmatpush1.bf16.msra.mxu0 0
    %202 = vmatprep.subr.bf16.mxu0 0
    %203 = vmatpush1.bf16.msra.mxu0 0
    %204 = vmatprep.subr.bf16.mxu0 0
    %205 = vmatpush1.bf16.msra.mxu0 0
    %206 = vmatprep.mubr.bf16.mxu0 0
    %207 = vmatmul.mubr.bf16.gmra.mrb[0].mxu0 %v172
    %v208 = vpop.f32.mrb[0].mxu0
    %v209 = vadd.f32 %v168, %v208
    %v210 = vpop.f32.mrb[0].mxu0
    %v211 = vpop.f32.mrb[0].mxu0
    %v212 = vadd.f32 %v168, %v211
    %v213 = vpop.f32.mrb[0].mxu0
    %214 = vdwg.mxu0
    %v215 = vadd.f32 %v28, %v209
    %v216 = vadd.f32 %v29, %v212
    %217 = vst.msk [vmem:[#allocation2] sm:$0xff] %vm30, %v215
    %218 = vst.msk [vmem:[#allocation2 + $0x8] sm:$0xff] %vm30, %v216
    // Predicated region
    $region30: #{decoder_layer.11} parent=1 // pred_check
      _
    $region31: #{decoder_layer.11} parent=1 // pred_check_branch
      %220 = sbr.rel (0) target = $region33
    $region32: #{decoder_layer.11} parent=1 // pred_region
      %s222 = ssub.s32 256, 256
      %223 = vsyncadd [#allocation3], %s222
      %s224 = sshll.u32 [#allocation2], 4
      %s225 = int_to_ptr.vmem [resolvable:$true] %s224
      %230 = dma.vmem_to_hbm [thread:$0]  %s225, 256, %s7, [#allocation3], 128, 128, 8
    $region33: #{decoder_layer.11} parent=1 // pred_fallthru
      _
    // Predicated region
    $region34: #{decoder_layer.11} parent=1 // pred_check
      _
    $region35: #{decoder_layer.11} parent=1 // pred_check_branch
      %232 = sbr.rel (0) target = $region37
    $region36: #{decoder_layer.11} parent=1 // pred_region
      %233 = dma.done [#allocation3], 256
    $region37: #{decoder_layer.11} parent=1 // pred_fallthru
      _
    %234 = vsyncpa [#allocation3], 1

// kernel: decoder_layer.10
$region0: #{decoder_layer.10}
  #allocation0 [shape = 'u32[]', space=smem, size = 0x4, offset = 0x4, fixed_abs, tag = 'smem constant byte address 0x4 - core index']
  #allocation1 [shape = 'u32[144,128]{1,0:T(1,128)}', space=vmem, size = 0x12000, scoped, tag = 'internal scratch']
  %s0 = inlined_call_operand.vmem [shape: f32[2,8,32], index: 0, kind: input, shape index: {}]
  %s1 = inlined_call_operand.vmem [shape: f32[2,10,64], index: 1, kind: input, shape index: {}]
  %s2 = inlined_call_operand.vmem [shape: f32[2,1,1,10], index: 2, kind: input, shape index: {}]
  %s3 = inlined_call_operand.vmem [shape: f32[32,32], index: 3, kind: input, shape index: {}]
  %s4 = inlined_call_operand.vmem [shape: f32[1,32], index: 4, kind: input, shape index: {}]
  %s5 = inlined_call_operand.vmem [shape: f32[2,8,32], index: 5, kind: input, shape index: {}]
  %s6 = inlined_call_operand.vmem [shape: f32[2,8,32], index: 6, kind: output, shape index: {}]
  %s7 = sld [smem:[#allocation0]]
  $region57: #{decoder_layer.10} parent=0
    _
  %s9 = ssub.s32 1, %s7
  %s10 = scalar_select 0, %s9, %s7
  loop: start=0, step=1, limit=4
  $region2: #{decoder_layer.10} parent=0 // loop_pre_header
    _
  $region3: #{decoder_layer.10} parent=0 // loop_header
    %s12 = sphi 0, %s16
    %p13 = scmp.ge.s32.totalorder %s12, 4
    %s22 = sphi 0, %s24
    %s25 = sphi 0, %s22
    %s26 = sphi 0, %s25
    %s42 = sphi 0, %s26
    %s48 = sphi 0, %s50
    %s51 = sphi 0, %s48
    %s52 = sphi 0, %s51
    %s68 = sphi 0, %s52
    %s74 = sphi 0, %s76
    %s77 = sphi 0, %s74
    %s78 = sphi 0, %s77
    %s94 = sphi 0, %s78
    %s98 = sphi 0, %s98
    %s100 = sphi 0, %s98
    %s101 = sphi 0, %s100
    %s115 = sphi 0, %s101
    %s119 = sphi 0, %s119
    %s121 = sphi 0, %s119
    %s122 = sphi 0, %s121
    %s136 = sphi 0, %s122
    %s142 = sphi 0, %s144
    %s145 = sphi 0, %s142
    %s146 = sphi 0, %s145
    %s162 = sphi 0, %s146
    %s168 = sphi 0, %s170
    %s171 = sphi 0, %s168
    %s172 = sphi 0, %s171
    %s188 = sphi 0, %s172
  $region4: #{decoder_layer.10} parent=0 // loop_header_branch
    %15 = sbr.rel (%p13) target = $region8
  $region5: #{decoder_layer.10} parent=0 // loop_body
    %s17 = ssub.s32 %s12, 1
    %s18 = ssub.s32 %s12, 2
    %s19 = sadd.s32 %s12, 1
    %s20 = ssub.s32 %s12, %s19
    %p21 = scmp.eq.s32.totalorder %s20, 0
    %s23 = sadd.s32 %s22, 1
    %s24 = scalar_select %p21, %s22, %s23
    %p27 = pneg %p21
    %p28 = scmp.eq.s32.totalorder %s12, 1
    %p29 = por %p27, %p28
    %p30 = scmp.ne.s32.totalorder %s22, %s25
    %p31 = scmp.eq.s32.totalorder %s12, 0
    %p32 = por %p30, %p31
    %p33 = scmp.ne.s32.totalorder %s22, %s25
    %p34 = scmp.eq.s32.totalorder %s17, 1
    %p35 = por %p33, %p34
    %p36 = scmp.ne.s32.totalorder %s25, %s26
    %p37 = scmp.eq.s32.totalorder %s17, 0
    %p38 = por %p36, %p37
    %p39 = scmp.ne.s32.totalorder %s25, %s26
    %p40 = scmp.eq.s32.totalorder %s18, 1
    %p41 = por %p39, %p40
    %p43 = scmp.ne.s32.totalorder %s26, %s42
    %p44 = scmp.eq.s32.totalorder %s18, 0
    %p45 = por %p43, %p44
    %s46 = ssub.s32 %s12, %s19
    %p47 = scmp.eq.s32.totalorder %s46, 0
    %s49 = sadd.s32 %s48, 1
    %s50 = scalar_select %p47, %s48, %s49
    %p53 = pneg %p47
    %p54 = scmp.eq.s32.totalorder %s12, 1
    %p55 = por %p53, %p54
    %p56 = scmp.ne.s32.totalorder %s48, %s51
    %p57 = scmp.eq.s32.totalorder %s12, 0
    %p58 = por %p56, %p57
    %p59 = scmp.ne.s32.totalorder %s48, %s51
    %p60 = scmp.eq.s32.totalorder %s17, 1
    %p61 = por %p59, %p60
    %p62 = scmp.ne.s32.totalorder %s51, %s52
    %p63 = scmp.eq.s32.totalorder %s17, 0
    %p64 = por %p62, %p63
    %p65 = scmp.ne.s32.totalorder %s51, %s52
    %p66 = scmp.eq.s32.totalorder %s18, 1
    %p67 = por %p65, %p66
    %p69 = scmp.ne.s32.totalorder %s52, %s68
    %p70 = scmp.eq.s32.totalorder %s18, 0
    %p71 = por %p69, %p70
    %s72 = ssub.s32 %s12, %s19
    %p73 = scmp.eq.s32.totalorder %s72, 0
    %s75 = sadd.s32 %s74, 1
    %s76 = scalar_select %p73, %s74, %s75
    %p79 = pneg %p73
    %p80 = scmp.eq.s32.totalorder %s12, 1
    %p81 = por %p79, %p80
    %p82 = scmp.ne.s32.totalorder %s74, %s77
    %p83 = scmp.eq.s32.totalorder %s12, 0
    %p84 = por %p82, %p83
    %p85 = scmp.ne.s32.totalorder %s74, %s77
    %p86 = scmp.eq.s32.totalorder %s17, 1
    %p87 = por %p85, %p86
    %p88 = scmp.ne.s32.totalorder %s77, %s78
    %p89 = scmp.eq.s32.totalorder %s17, 0
    %p90 = por %p88, %p89
    %p91 = scmp.ne.s32.totalorder %s77, %s78
    %p92 = scmp.eq.s32.totalorder %s18, 1
    %p93 = por %p91, %p92
    %p95 = scmp.ne.s32.totalorder %s78, %s94
    %p96 = scmp.eq.s32.totalorder %s18, 0
    %p97 = por %p95, %p96
    %s99 = sadd.s32 %s98, 1
    %p102 = scmp.eq.s32.totalorder %s12, 1
    %p103 = scmp.ne.s32.totalorder %s98, %s100
    %p104 = scmp.eq.s32.totalorder %s12, 0
    %p105 = por %p103, %p104
    %p106 = scmp.ne.s32.totalorder %s98, %s100
    %p107 = scmp.eq.s32.totalorder %s17, 1
    %p108 = por %p106, %p107
    %p109 = scmp.ne.s32.totalorder %s100, %s101
    %p110 = scmp.eq.s32.totalorder %s17, 0
    %p111 = por %p109, %p110
    %p112 = scmp.ne.s32.totalorder %s100, %s101
    %p113 = scmp.eq.s32.totalorder %s18, 1
    %p114 = por %p112, %p113
    %p116 = scmp.ne.s32.totalorder %s101, %s115
    %p117 = scmp.eq.s32.totalorder %s18, 0
    %p118 = por %p116, %p117
    %s120 = sadd.s32 %s119, 1
    %p123 = scmp.eq.s32.totalorder %s12, 1
    %p124 = scmp.ne.s32.totalorder %s119, %s121
    %p125 = scmp.eq.s32.totalorder %s12, 0
    %p126 = por %p124, %p125
    %p127 = scmp.ne.s32.totalorder %s119, %s121
    %p128 = scmp.eq.s32.totalorder %s17, 1
    %p129 = por %p127, %p128
    %p130 = scmp.ne.s32.totalorder %s121, %s122
    %p131 = scmp.eq.s32.totalorder %s17, 0
    %p132 = por %p130, %p131
    %p133 = scmp.ne.s32.totalorder %s121, %s122
    %p134 = scmp.eq.s32.totalorder %s18, 1
    %p135 = por %p133, %p134
    %p137 = scmp.ne.s32.totalorder %s122, %s136
    %p138 = scmp.eq.s32.totalorder %s18, 0
    %p139 = por %p137, %p138
    %s140 = ssub.s32 %s12, %s19
    %p141 = scmp.eq.s32.totalorder %s140, 0
    %s143 = sadd.s32 %s142, 1
    %s144 = scalar_select %p141, %s142, %s143
    %p147 = pneg %p141
    %p148 = scmp.eq.s32.totalorder %s12, 1
    %p149 = por %p147, %p148
    %p150 = scmp.ne.s32.totalorder %s142, %s145
    %p151 = scmp.eq.s32.totalorder %s12, 0
    %p152 = por %p150, %p151
    %p153 = scmp.ne.s32.totalorder %s142, %s145
    %p154 = scmp.eq.s32.totalorder %s17, 1
    %p155 = por %p153, %p154
    %p156 = scmp.ne.s32.totalorder %s145, %s146
    %p157 = scmp.eq.s32.totalorder %s17, 0
    %p158 = por %p156, %p157
    %p159 = scmp.ne.s32.totalorder %s145, %s146
    %p160 = scmp.eq.s32.totalorder %s18, 1
    %p161 = por %p159, %p160
    %p163 = scmp.ne.s32.totalorder %s146, %s162
    %p164 = scmp.eq.s32.totalorder %s18, 0
    %p165 = por %p163, %p164
    %s166 = ssub.s32 %s12, %s19
    %p167 = scmp.eq.s32.totalorder %s166, 0
    %s169 = sadd.s32 %s168, 1
    %s170 = scalar_select %p167, %s168, %s169
    %p173 = pneg %p167
    %p174 = scmp.eq.s32.totalorder %s12, 1
    %p175 = por %p173, %p174
    %p176 = scmp.ne.s32.totalorder %s168, %s171
    %p177 = scmp.eq.s32.totalorder %s12, 0
    %p178 = por %p176, %p177
    %p179 = scmp.ne.s32.totalorder %s168, %s171
    %p180 = scmp.eq.s32.totalorder %s17, 1
    %p181 = por %p179, %p180
    %p182 = scmp.ne.s32.totalorder %s171, %s172
    %p183 = scmp.eq.s32.totalorder %s17, 0
    %p184 = por %p182, %p183
    %p185 = scmp.ne.s32.totalorder %s171, %s172
    %p186 = scmp.eq.s32.totalorder %s18, 1
    %p187 = por %p185, %p186
    %p189 = scmp.ne.s32.totalorder %s172, %s188
    %p190 = scmp.eq.s32.totalorder %s18, 0
    %p191 = por %p189, %p190
    %p192 = scmp.le.s32.totalorder 1, %s12
    %p193 = scmp.lt.s32.totalorder %s12, 3
    %p194 = pnand %p192, %p193
    %p195 = pneg %p194
    // Predicated region
    $region9: #{decoder_layer.10} parent=5 // pred_check
      _
    $region10: #{decoder_layer.10} parent=5 // pred_check_branch
      %197 = sbr.rel (%p194) target = $region12
    $region11: #{decoder_layer.10} parent=5 // pred_region
      %s198 = ssub.s32 %s12, 1
      // Predicated region
      $region13: #{decoder_layer.10} parent=11 // pred_check
        %p199 = pneg %p111
      $region14: #{decoder_layer.10} parent=11 // pred_check_branch
        %201 = sbr.rel (%p199) target = $region16
      $region15: #{decoder_layer.10} parent=11 // pred_region
        _
      $region16: #{decoder_layer.10} parent=11 // pred_fallthru
        _
      // Predicated region
      $region17: #{decoder_layer.10} parent=11 // pred_check
        %p202 = pneg %p132
      $region18: #{decoder_layer.10} parent=11 // pred_check_branch
        %204 = sbr.rel (%p202) target = $region20
      $region19: #{decoder_layer.10} parent=11 // pred_region
        _
      $region20: #{decoder_layer.10} parent=11 // pred_fallthru
        _
    $region12: #{decoder_layer.10} parent=5 // pred_fallthru
      _
    %p205 = scmp.lt.s32.totalorder %s12, 2
    // Predicated region
    $region21: #{decoder_layer.10} parent=5 // pred_check
      %p206 = pneg %p205
    $region22: #{decoder_layer.10} parent=5 // pred_check_branch
      %208 = sbr.rel (%p206) target = $region24
    $region23: #{decoder_layer.10} parent=5 // pred_region
      // Predicated region
      $region25: #{decoder_layer.10} parent=23 // pred_check
        %p209 = pneg %p32
      $region26: #{decoder_layer.10} parent=23 // pred_check_branch
        %211 = sbr.rel (%p209) target = $region28
      $region27: #{decoder_layer.10} parent=23 // pred_region
        %p212 = scmp.lt.s32.totalorder %s12, 1
        %s213 = scalar_select %p212, %s12, 1
        %s214 = smul.addr %s213, 8
        %s215 = scalar_lea.vmem %s0, %s214
      $region28: #{decoder_layer.10} parent=23 // pred_fallthru
        _
      // Predicated region
      $region29: #{decoder_layer.10} parent=23 // pred_check
        %p216 = pneg %p58
      $region30: #{decoder_layer.10} parent=23 // pred_check_branch
        %218 = sbr.rel (%p216) target = $region32
      $region31: #{decoder_layer.10} parent=23 // pred_region
        %p219 = scmp.lt.s32.totalorder %s12, 1
        %s220 = scalar_select %p219, %s12, 1
        %s221 = smul.addr %s220, 2
        %s222 = smul.addr %s221, 8
        %s223 = scalar_lea.vmem %s1, %s222
      $region32: #{decoder_layer.10} parent=23 // pred_fallthru
        _
      // Predicated region
      $region33: #{decoder_layer.10} parent=23 // pred_check
        %p224 = pneg %p84
      $region34: #{decoder_layer.10} parent=23 // pred_check_branch
        %226 = sbr.rel (%p224) target = $region36
      $region35: #{decoder_layer.10} parent=23 // pred_region
        %p227 = scmp.lt.s32.totalorder %s12, 1
        %s228 = scalar_select %p227, %s12, 1
        %s229 = scalar_lea.vmem %s2, %s228
      $region36: #{decoder_layer.10} parent=23 // pred_fallthru
        _
      // Predicated region
      $region37: #{decoder_layer.10} parent=23 // pred_check
        %p230 = pneg %p152
      $region38: #{decoder_layer.10} parent=23 // pred_check_branch
        %232 = sbr.rel (%p230) target = $region40
      $region39: #{decoder_layer.10} parent=23 // pred_region
        %p233 = scmp.lt.s32.totalorder %s12, 1
        %s234 = scalar_select %p233, %s12, 1
        %s235 = smul.addr %s234, 8
        %s236 = scalar_lea.vmem %s5, %s235
      $region40: #{decoder_layer.10} parent=23 // pred_fallthru
        _
    $region24: #{decoder_layer.10} parent=5 // pred_fallthru
      _
    %p237 = scmp.le.s32.totalorder 1, %s12
    %p238 = scmp.lt.s32.totalorder %s12, 3
    %p239 = pnand %p237, %p238
    %p240 = pneg %p239
    // Predicated region
    $region41: #{decoder_layer.10} parent=5 // pred_check
      _
    $region42: #{decoder_layer.10} parent=5 // pred_check_branch
      %242 = sbr.rel (%p239) target = $region44
    $region43: #{decoder_layer.10} parent=5 // pred_region
      %s243 = ssub.s32 %s12, 1
      %p244 = scmp.lt.s32.totalorder %s17, 1
      %s245 = scalar_select %p244, %s17, 1
      %s246 = smul.addr %s245, 8
      %s247 = scalar_lea.vmem %s0, %s246
      %p248 = pneg %p38
      %p249 = pneg %p35
      %p250 = scmp.lt.s32.totalorder %s17, 1
      %s251 = scalar_select %p250, %s17, 1
      %s252 = smul.addr %s251, 2
      %s253 = smul.addr %s252, 8
      %s254 = scalar_lea.vmem %s1, %s253
      %p255 = pneg %p64
      %p256 = pneg %p61
      %p257 = scmp.lt.s32.totalorder %s17, 1
      %s258 = scalar_select %p257, %s17, 1
      %s259 = scalar_lea.vmem %s2, %s258
      %p260 = pneg %p90
      %p261 = pneg %p87
      %p262 = pneg %p111
      %p263 = pneg %p108
      %p264 = pneg %p132
      %p265 = pneg %p129
      %p266 = scmp.lt.s32.totalorder %s17, 1
      %s267 = scalar_select %p266, %s17, 1
      %s268 = smul.addr %s267, 8
      %s269 = scalar_lea.vmem %s5, %s268
      %p270 = pneg %p158
      %p271 = pneg %p155
      %p272 = pneg %p184
      %p273 = pneg %p181
      %p274 = scmp.lt.s32.totalorder %s17, 1
      %s275 = scalar_select %p274, %s17, 1
      %s276 = smul.addr %s275, 8
      %s277 = scalar_lea.vmem %s6, %s276
      %p278 = scmp.lt.s32.totalorder %s17, 1
      %s279 = scalar_select %p278, %s17, 1
      %s280 = smul.addr %s279, 8
      %s281 = scalar_lea.vmem %s0, %s280
      %p282 = scmp.lt.s32.totalorder %s17, 1
      %s283 = scalar_select %p282, %s17, 1
      %s284 = smul.addr %s283, 2
      %s285 = smul.addr %s284, 8
      %s286 = scalar_lea.vmem %s1, %s285
      %p287 = scmp.lt.s32.totalorder %s17, 1
      %s288 = scalar_select %p287, %s17, 1
      %s289 = scalar_lea.vmem %s2, %s288
      %p290 = scmp.lt.s32.totalorder %s17, 1
      %s291 = scalar_select %p290, %s17, 1
      %s292 = smul.addr %s291, 8
      %s293 = scalar_lea.vmem %s5, %s292
      %p294 = scmp.lt.s32.totalorder %s17, 1
      %s295 = scalar_select %p294, %s17, 1
      %s296 = smul.addr %s295, 8
      %s297 = scalar_lea.vmem %s6, %s296
      %v299 = vld [vmem:[%s289] sm:$0x1]
      %v300 = vld [vmem:[%s281] sm:$0xff]
      %v301 = vmul.f32 %v300, 0.35355338
      %v302 = vld [vmem:[%s286] sm:$0xff]
      %v303 = vld [vmem:[%s286 + $0x8] sm:$0x3]
      %v304 = vpack.c.bf16 %v301, %v301
      %v305 = vpack.c.bf16 %v303, %v302
      %vm306 = vcmask 64512
      %v308 = vsel %vm306, %v304, 0
      %v311 = vsel %vm306, %v305, 0
      %313 = vmatprep.subr.bf16.mxu0 0
      %314 = vmatpush1.bf16.xpose.msra.mxu0 %v311
      %315 = vmatprep.subr.bf16.mxu0 0
      %316 = vmatpush1.bf16.xpose.msra.mxu0 0
      %317 = vmatprep.subr.bf16.mxu0 0
      %318 = vmatpush1.bf16.xpose.msra.mxu0 0
      %319 = vmatprep.subr.bf16.mxu0 0
      %320 = vmatpush1.bf16.xpose.msra.mxu0 0
      %321 = vmatprep.subr.bf16.mxu0 0
      %322 = vmatpush1.bf16.xpose.msra.mxu0 0
      %323 = vmatprep.subr.bf16.mxu0 0
      %324 = vmatpush1.bf16.xpose.msra.mxu0 0
      %325 = vmatprep.subr.bf16.mxu0 0
      %326 = vmatpush1.bf16.xpose.msra.mxu0 0
      %327 = vmatprep.subr.bf16.mxu0 0
      %328 = vmatpush1.bf16.xpose.msra.mxu0 0
      %329 = vmatprep.subr.bf16.mxu0 0
      %330 = vmatpush1.bf16.xpose.msra.mxu0 0
      %331 = vmatprep.subr.bf16.mxu0 0
      %332 = vmatpush1.bf16.xpose.msra.mxu0 0
      %333 = vmatprep.subr.bf16.mxu0 0
      %334 = vmatpush1.bf16.xpose.msra.mxu0 0
      %335 = vmatprep.subr.bf16.mxu0 0
      %336 = vmatpush1.bf16.xpose.msra.mxu0 0
      %337 = vmatprep.subr.bf16.mxu0 0
      %338 = vmatpush1.bf16.xpose.msra.mxu0 0
      %339 = vmatprep.subr.bf16.mxu0 0
      %340 = vmatpush1.bf16.xpose.msra.mxu0 0
      %341 = vmatprep.subr.bf16.mxu0 0
      %342 = vmatpush1.bf16.xpose.msra.mxu0 0
      %343 = vmatprep.subr.bf16.mxu0 0
      %344 = vmatpush1.bf16.xpose.msra.mxu0 0
      %345 = vmatprep.mubr.bf16.mxu0 0
      %346 = vmatmul.mubr.bf16.gmra.mrb[0].mxu0 %v308
      %v347 = vpop.f32.mrb[0].mxu0
      %v348 = vadd.f32 0.0, %v347
      %v349 = vpop.f32.mrb[0].mxu0
      %v350 = vpop.f32.mrb[0].mxu0
      %v351 = vpop.f32.mrb[0].mxu0
      %352 = vdwg.mxu0
      %vm353 = vcmp.eq.f32.partialorder %v299, 0.0
      %v354 = vsel %vm353, 1, 0
      %v355 = vlaneseq
      %v356 = vshrl.u32 %v355, 7
      %v357 = vsub.s32 0, %v356
      %v358 = vrot.slane %v354, %v357
      %vm359 = vcmp.eq.s32.totalorder %v358, 1
      %v360 = vsel %vm359, -1e+09, %v348
      %vm361 = vcmask 80896
      %v362 = vsel %vm361, %v360, -inf
      %363 = vmax.xlane.f32.xlu0 %v362
      %v364 = vpop.xlane.xlu0 %363
      %v365 = vsub.f32 %v360, %v364
      %v366 = vmul.f32 %v365, 1.442695
      %v367 = vpow.pop %v366
      %v368 = vsel %vm361, %v367, 0.0
      %369 = vadd.xlane.f32.xlu0 %v368
      %v370 = vpop.xlane.xlu0 %369
      %v371 = vrcp.pop %v370
      %v372 = vmul.f32 %v367, %v371
      %v373 = vpack.c.bf16 %v372, %v372
      %375 = vrot.lane.b32.xlu0 %v305, 96
      %v376 = vpop.permute.xlu0 %375
      %v378 = vsel %vm361, %v373, 0
      %vm380 = vcmask 1044480
      %v382 = vsel %vm380, %v376, 0
      %384 = vmatprep.subr.bf16.mxu0 0
      %385 = vmatpush1.bf16.msra.mxu0 %v382
      %386 = vmatprep.subr.bf16.mxu0 0
      %387 = vmatpush1.bf16.msra.mxu0 0
      %388 = vmatprep.subr.bf16.mxu0 0
      %389 = vmatpush1.bf16.msra.mxu0 0
      %390 = vmatprep.subr.bf16.mxu0 0
      %391 = vmatpush1.bf16.msra.mxu0 0
      %392 = vmatprep.subr.bf16.mxu0 0
      %393 = vmatpush1.bf16.msra.mxu0 0
      %394 = vmatprep.subr.bf16.mxu0 0
      %395 = vmatpush1.bf16.msra.mxu0 0
      %396 = vmatprep.subr.bf16.mxu0 0
      %397 = vmatpush1.bf16.msra.mxu0 0
      %398 = vmatprep.subr.bf16.mxu0 0
      %399 = vmatpush1.bf16.msra.mxu0 0
      %400 = vmatprep.subr.bf16.mxu0 0
      %401 = vmatpush1.bf16.msra.mxu0 0
      %402 = vmatprep.subr.bf16.mxu0 0
      %403 = vmatpush1.bf16.msra.mxu0 0
      %404 = vmatprep.subr.bf16.mxu0 0
      %405 = vmatpush1.bf16.msra.mxu0 0
      %406 = vmatprep.subr.bf16.mxu0 0
      %407 = vmatpush1.bf16.msra.mxu0 0
      %408 = vmatprep.subr.bf16.mxu0 0
      %409 = vmatpush1.bf16.msra.mxu0 0
      %410 = vmatprep.subr.bf16.mxu0 0
      %411 = vmatpush1.bf16.msra.mxu0 0
      %412 = vmatprep.subr.bf16.mxu0 0
      %413 = vmatpush1.bf16.msra.mxu0 0
      %414 = vmatprep.subr.bf16.mxu0 0
      %415 = vmatpush1.bf16.msra.mxu0 0
      %416 = vmatprep.mubr.bf16.mxu0 0
      %417 = vmatmul.mubr.bf16.gmra.mrb[0].mxu0 %v378
      %v418 = vpop.f32.mrb[0].mxu0
      %v419 = vadd.f32 0.0, %v418
      %v420 = vpop.f32.mrb[0].mxu0
      %v421 = vpop.f32.mrb[0].mxu0
      %v422 = vpop.f32.mrb[0].mxu0
      %423 = vdwg.mxu0
      %425 = vrot.lane.b32.xlu0 %v304, 120
      %v426 = vpop.permute.xlu0 %425
      %427 = vrot.lane.b32.xlu0 %v305, 120
      %v428 = vpop.permute.xlu0 %427
      %v430 = vsel %vm306, %v426, 0
      %v433 = vsel %vm306, %v428, 0
      %435 = vmatprep.subr.bf16.mxu0 0
      %436 = vmatpush1.bf16.xpose.msra.mxu0 %v433
      %437 = vmatprep.subr.bf16.mxu0 0
      %438 = vmatpush1.bf16.xpose.msra.mxu0 0
      %439 = vmatprep.subr.bf16.mxu0 0
      %440 = vmatpush1.bf16.xpose.msra.mxu0 0
      %441 = vmatprep.subr.bf16.mxu0 0
      %442 = vmatpush1.bf16.xpose.msra.mxu0 0
      %443 = vmatprep.subr.bf16.mxu0 0
      %444 = vmatpush1.bf16.xpose.msra.mxu0 0
      %445 = vmatprep.subr.bf16.mxu0 0
      %446 = vmatpush1.bf16.xpose.msra.mxu0 0
      %447 = vmatprep.subr.bf16.mxu0 0
      %448 = vmatpush1.bf16.xpose.msra.mxu0 0
      %449 = vmatprep.subr.bf16.mxu0 0
      %450 = vmatpush1.bf16.xpose.msra.mxu0 0
      %451 = vmatprep.subr.bf16.mxu0 0
      %452 = vmatpush1.bf16.xpose.msra.mxu0 0
      %453 = vmatprep.subr.bf16.mxu0 0
      %454 = vmatpush1.bf16.xpose.msra.mxu0 0
      %455 = vmatprep.subr.bf16.mxu0 0
      %456 = vmatpush1.bf16.xpose.msra.mxu0 0
      %457 = vmatprep.subr.bf16.mxu0 0
      %458 = vmatpush1.bf16.xpose.msra.mxu0 0
      %459 = vmatprep.subr.bf16.mxu0 0
      %460 = vmatpush1.bf16.xpose.msra.mxu0 0
      %461 = vmatprep.subr.bf16.mxu0 0
      %462 = vmatpush1.bf16.xpose.msra.mxu0 0
      %463 = vmatprep.subr.bf16.mxu0 0
      %464 = vmatpush1.bf16.xpose.msra.mxu0 0
      %465 = vmatprep.subr.bf16.mxu0 0
      %466 = vmatpush1.bf16.xpose.msra.mxu0 0
      %467 = vmatprep.mubr.bf16.mxu0 0
      %468 = vmatmul.mubr.bf16.gmra.mrb[0].mxu0 %v430
      %v469 = vpop.f32.mrb[0].mxu0
      %v470 = vadd.f32 0.0, %v469
      %v471 = vpop.f32.mrb[0].mxu0
      %v472 = vpop.f32.mrb[0].mxu0
      %v473 = vpop.f32.mrb[0].mxu0
      %474 = vdwg.mxu0
      %v475 = vsel %vm359, -1e+09, %v470
      %v476 = vsel %vm361, %v475, -inf
      %477 = vmax.xlane.f32.xlu0 %v476
      %v478 = vpop.xlane.xlu0 %477
      %v479 = vsub.f32 %v475, %v478
      %v480 = vmul.f32 %v479, 1.442695
      %v481 = vpow.pop %v480
      %v482 = vsel %vm361, %v481, 0.0
      %483 = vadd.xlane.f32.xlu0 %v482
      %v484 = vpop.xlane.xlu0 %483
      %v485 = vrcp.pop %v484
      %v486 = vmul.f32 %v481, %v485
      %v487 = vpack.c.bf16 %v486, %v486
      %488 = vrot.lane.b32.xlu0 %v305, 88
      %v489 = vpop.permute.xlu0 %488
      %v491 = vsel %vm361, %v487, 0
      %v494 = vsel %vm380, %v489, 0
      %496 = vmatprep.subr.bf16.mxu0 0
      %497 = vmatpush1.bf16.msra.mxu0 %v494
      %498 = vmatprep.subr.bf16.mxu0 0
      %499 = vmatpush1.bf16.msra.mxu0 0
      %500 = vmatprep.subr.bf16.mxu0 0
      %501 = vmatpush1.bf16.msra.mxu0 0
      %502 = vmatprep.subr.bf16.mxu0 0
      %503 = vmatpush1.bf16.msra.mxu0 0
      %504 = vmatprep.subr.bf16.mxu0 0
      %505 = vmatpush1.bf16.msra.mxu0 0
      %506 = vmatprep.subr.bf16.mxu0 0
      %507 = vmatpush1.bf16.msra.mxu0 0
      %508 = vmatprep.subr.bf16.mxu0 0
      %509 = vmatpush1.bf16.msra.mxu0 0
      %510 = vmatprep.subr.bf16.mxu0 0
      %511 = vmatpush1.bf16.msra.mxu0 0
      %512 = vmatprep.subr.bf16.mxu0 0
      %513 = vmatpush1.bf16.msra.mxu0 0
      %514 = vmatprep.subr.bf16.mxu0 0
      %515 = vmatpush1.bf16.msra.mxu0 0
      %516 = vmatprep.subr.bf16.mxu0 0
      %517 = vmatpush1.bf16.msra.mxu0 0
      %518 = vmatprep.subr.bf16.mxu0 0
      %519 = vmatpush1.bf16.msra.mxu0 0
      %520 = vmatprep.subr.bf16.mxu0 0
      %521 = vmatpush1.bf16.msra.mxu0 0
      %522 = vmatprep.subr.bf16.mxu0 0
      %523 = vmatpush1.bf16.msra.mxu0 0
      %524 = vmatprep.subr.bf16.mxu0 0
      %525 = vmatpush1.bf16.msra.mxu0 0
      %526 = vmatprep.subr.bf16.mxu0 0
      %527 = vmatpush1.bf16.msra.mxu0 0
      %528 = vmatprep.mubr.bf16.mxu0 0
      %529 = vmatmul.mubr.bf16.gmra.mrb[0].mxu0 %v491
      %v530 = vpop.f32.mrb[0].mxu0
      %v531 = vadd.f32 0.0, %v530
      %v532 = vpop.f32.mrb[0].mxu0
      %v533 = vpop.f32.mrb[0].mxu0
      %v534 = vpop.f32.mrb[0].mxu0
      %535 = vdwg.mxu0
      %536 = vrot.lane.b32.xlu0 %v304, 112
      %v537 = vpop.permute.xlu0 %536
      %538 = vrot.lane.b32.xlu0 %v305, 112
      %v539 = vpop.permute.xlu0 %538
      %v541 = vsel %vm306, %v537, 0
      %v544 = vsel %vm306, %v539, 0
      %546 = vmatprep.subr.bf16.mxu0 0
      %547 = vmatpush1.bf16.xpose.msra.mxu0 %v544
      %548 = vmatprep.subr.bf16.mxu0 0
      %549 = vmatpush1.bf16.xpose.msra.mxu0 0
      %550 = vmatprep.subr.bf16.mxu0 0
      %551 = vmatpush1.bf16.xpose.msra.mxu0 0
      %552 = vmatprep.subr.bf16.mxu0 0
      %553 = vmatpush1.bf16.xpose.msra.mxu0 0
      %554 = vmatprep.subr.bf16.mxu0 0
      %555 = vmatpush1.bf16.xpose.msra.mxu0 0
      %556 = vmatprep.subr.bf16.mxu0 0
      %557 = vmatpush1.bf16.xpose.msra.mxu0 0
      %558 = vmatprep.subr.bf16.mxu0 0
      %559 = vmatpush1.bf16.xpose.msra.mxu0 0
      %560 = vmatprep.subr.bf16.mxu0 0
      %561 = vmatpush1.bf16.xpose.msra.mxu0 0
      %562 = vmatprep.subr.bf16.mxu0 0
      %563 = vmatpush1.bf16.xpose.msra.mxu0 0
      %564 = vmatprep.subr.bf16.mxu0 0
      %565 = vmatpush1.bf16.xpose.msra.mxu0 0
      %566 = vmatprep.subr.bf16.mxu0 0
      %567 = vmatpush1.bf16.xpose.msra.mxu0 0
      %568 = vmatprep.subr.bf16.mxu0 0
      %569 = vmatpush1.bf16.xpose.msra.mxu0 0
      %570 = vmatprep.subr.bf16.mxu0 0
      %571 = vmatpush1.bf16.xpose.msra.mxu0 0
      %572 = vmatprep.subr.bf16.mxu0 0
      %573 = vmatpush1.bf16.xpose.msra.mxu0 0
      %574 = vmatprep.subr.bf16.mxu0 0
      %575 = vmatpush1.bf16.xpose.msra.mxu0 0
      %576 = vmatprep.subr.bf16.mxu0 0
      %577 = vmatpush1.bf16.xpose.msra.mxu0 0
      %578 = vmatprep.mubr.bf16.mxu0 0
      %579 = vmatmul.mubr.bf16.gmra.mrb[0].mxu0 %v541
      %v580 = vpop.f32.mrb[0].mxu0
      %v581 = vadd.f32 0.0, %v580
      %v582 = vpop.f32.mrb[0].mxu0
      %v583 = vpop.f32.mrb[0].mxu0
      %v584 = vpop.f32.mrb[0].mxu0
      %585 = vdwg.mxu0
      %v586 = vsel %vm359, -1e+09, %v581
      %v587 = vsel %vm361, %v586, -inf
      %588 = vmax.xlane.f32.xlu0 %v587
      %v589 = vpop.xlane.xlu0 %588
      %v590 = vsub.f32 %v586, %v589
      %v591 = vmul.f32 %v590, 1.442695
      %v592 = vpow.pop %v591
      %v593 = vsel %vm361, %v592, 0.0
      %594 = vadd.xlane.f32.xlu0 %v593
      %v595 = vpop.xlane.xlu0 %594
      %v596 = vrcp.pop %v595
      %v597 = vmul.f32 %v592, %v596
      %v598 = vpack.c.bf16 %v597, %v597
      %599 = vrot.lane.b32.xlu0 %v305, 80
      %v600 = vpop.permute.xlu0 %599
      %v602 = vsel %vm361, %v598, 0
      %v605 = vsel %vm380, %v600, 0
      %607 = vmatprep.subr.bf16.mxu0 0
      %608 = vmatpush1.bf16.msra.mxu0 %v605
      %609 = vmatprep.subr.bf16.mxu0 0
      %610 = vmatpush1.bf16.msra.mxu0 0
      %611 = vmatprep.subr.bf16.mxu0 0
      %612 = vmatpush1.bf16.msra.mxu0 0
      %613 = vmatprep.subr.bf16.mxu0 0
      %614 = vmatpush1.bf16.msra.mxu0 0
      %615 = vmatprep.subr.bf16.mxu0 0
      %616 = vmatpush1.bf16.msra.mxu0 0
      %617 = vmatprep.subr.bf16.mxu0 0
      %618 = vmatpush1.bf16.msra.mxu0 0
      %619 = vmatprep.subr.bf16.mxu0 0
      %620 = vmatpush1.bf16.msra.mxu0 0
      %621 = vmatprep.subr.bf16.mxu0 0
      %622 = vmatpush1.bf16.msra.mxu0 0
      %623 = vmatprep.subr.bf16.mxu0 0
      %624 = vmatpush1.bf16.msra.mxu0 0
      %625 = vmatprep.subr.bf16.mxu0 0
      %626 = vmatpush1.bf16.msra.mxu0 0
      %627 = vmatprep.subr.bf16.mxu0 0
      %628 = vmatpush1.bf16.msra.mxu0 0
      %629 = vmatprep.subr.bf16.mxu0 0
      %630 = vmatpush1.bf16.msra.mxu0 0
      %631 = vmatprep.subr.bf16.mxu0 0
      %632 = vmatpush1.bf16.msra.mxu0 0
      %633 = vmatprep.subr.bf16.mxu0 0
      %634 = vmatpush1.bf16.msra.mxu0 0
      %635 = vmatprep.subr.bf16.mxu0 0
      %636 = vmatpush1.bf16.msra.mxu0 0
      %637 = vmatprep.subr.bf16.mxu0 0
      %638 = vmatpush1.bf16.msra.mxu0 0
      %639 = vmatprep.mubr.bf16.mxu0 0
      %640 = vmatmul.mubr.bf16.gmra.mrb[0].mxu0 %v602
      %v641 = vpop.f32.mrb[0].mxu0
      %v642 = vadd.f32 0.0, %v641
      %v643 = vpop.f32.mrb[0].mxu0
      %v644 = vpop.f32.mrb[0].mxu0
      %v645 = vpop.f32.mrb[0].mxu0
      %646 = vdwg.mxu0
      %647 = vrot.lane.b32.xlu0 %v304, 104
      %v648 = vpop.permute.xlu0 %647
      %649 = vrot.lane.b32.xlu0 %v305, 104
      %v650 = vpop.permute.xlu0 %649
      %v652 = vsel %vm306, %v648, 0
      %v655 = vsel %vm306, %v650, 0
      %657 = vmatprep.subr.bf16.mxu0 0
      %658 = vmatpush1.bf16.xpose.msra.mxu0 %v655
      %659 = vmatprep.subr.bf16.mxu0 0
      %660 = vmatpush1.bf16.xpose.msra.mxu0 0
      %661 = vmatprep.subr.bf16.mxu0 0
      %662 = vmatpush1.bf16.xpose.msra.mxu0 0
      %663 = vmatprep.subr.bf16.mxu0 0
      %664 = vmatpush1.bf16.xpose.msra.mxu0 0
      %665 = vmatprep.subr.bf16.mxu0 0
      %666 = vmatpush1.bf16.xpose.msra.mxu0 0
      %667 = vmatprep.subr.bf16.mxu0 0
      %668 = vmatpush1.bf16.xpose.msra.mxu0 0
      %669 = vmatprep.subr.bf16.mxu0 0
      %670 = vmatpush1.bf16.xpose.msra.mxu0 0
      %671 = vmatprep.subr.bf16.mxu0 0
      %672 = vmatpush1.bf16.xpose.msra.mxu0 0
      %673 = vmatprep.subr.bf16.mxu0 0
      %674 = vmatpush1.bf16.xpose.msra.mxu0 0
      %675 = vmatprep.subr.bf16.mxu0 0
      %676 = vmatpush1.bf16.xpose.msra.mxu0 0
      %677 = vmatprep.subr.bf16.mxu0 0
      %678 = vmatpush1.bf16.xpose.msra.mxu0 0
      %679 = vmatprep.subr.bf16.mxu0 0
      %680 = vmatpush1.bf16.xpose.msra.mxu0 0
      %681 = vmatprep.subr.bf16.mxu0 0
      %682 = vmatpush1.bf16.xpose.msra.mxu0 0
      %683 = vmatprep.subr.bf16.mxu0 0
      %684 = vmatpush1.bf16.xpose.msra.mxu0 0
      %685 = vmatprep.subr.bf16.mxu0 0
      %686 = vmatpush1.bf16.xpose.msra.mxu0 0
      %687 = vmatprep.subr.bf16.mxu0 0
      %688 = vmatpush1.bf16.xpose.msra.mxu0 0
      %689 = vmatprep.mubr.bf16.mxu0 0
      %690 = vmatmul.mubr.bf16.gmra.mrb[0].mxu0 %v652
      %v691 = vpop.f32.mrb[0].mxu0
      %v692 = vadd.f32 0.0, %v691
      %v693 = vpop.f32.mrb[0].mxu0
      %v694 = vpop.f32.mrb[0].mxu0
      %v695 = vpop.f32.mrb[0].mxu0
      %696 = vdwg.mxu0
      %v697 = vsel %vm359, -1e+09, %v692
      %v698 = vsel %vm361, %v697, -inf
      %699 = vmax.xlane.f32.xlu0 %v698
      %v700 = vpop.xlane.xlu0 %699
      %v701 = vsub.f32 %v697, %v700
      %v702 = vmul.f32 %v701, 1.442695
      %v703 = vpow.pop %v702
      %v704 = vsel %vm361, %v703, 0.0
      %705 = vadd.xlane.f32.xlu0 %v704
      %v706 = vpop.xlane.xlu0 %705
      %v707 = vrcp.pop %v706
      %v708 = vmul.f32 %v703, %v707
      %v709 = vpack.c.bf16 %v708, %v708
      %710 = vrot.lane.b32.xlu0 %v305, 72
      %v711 = vpop.permute.xlu0 %710
      %v713 = vsel %vm361, %v709, 0
      %v716 = vsel %vm380, %v711, 0
      %718 = vmatprep.subr.bf16.mxu0 0
      %719 = vmatpush1.bf16.msra.mxu0 %v716
      %720 = vmatprep.subr.bf16.mxu0 0
      %721 = vmatpush1.bf16.msra.mxu0 0
      %722 = vmatprep.subr.bf16.mxu0 0
      %723 = vmatpush1.bf16.msra.mxu0 0
      %724 = vmatprep.subr.bf16.mxu0 0
      %725 = vmatpush1.bf16.msra.mxu0 0
      %726 = vmatprep.subr.bf16.mxu0 0
      %727 = vmatpush1.bf16.msra.mxu0 0
      %728 = vmatprep.subr.bf16.mxu0 0
      %729 = vmatpush1.bf16.msra.mxu0 0
      %730 = vmatprep.subr.bf16.mxu0 0
      %731 = vmatpush1.bf16.msra.mxu0 0
      %732 = vmatprep.subr.bf16.mxu0 0
      %733 = vmatpush1.bf16.msra.mxu0 0
      %734 = vmatprep.subr.bf16.mxu0 0
      %735 = vmatpush1.bf16.msra.mxu0 0
      %736 = vmatprep.subr.bf16.mxu0 0
      %737 = vmatpush1.bf16.msra.mxu0 0
      %738 = vmatprep.subr.bf16.mxu0 0
      %739 = vmatpush1.bf16.msra.mxu0 0
      %740 = vmatprep.subr.bf16.mxu0 0
      %741 = vmatpush1.bf16.msra.mxu0 0
      %742 = vmatprep.subr.bf16.mxu0 0
      %743 = vmatpush1.bf16.msra.mxu0 0
      %744 = vmatprep.subr.bf16.mxu0 0
      %745 = vmatpush1.bf16.msra.mxu0 0
      %746 = vmatprep.subr.bf16.mxu0 0
      %747 = vmatpush1.bf16.msra.mxu0 0
      %748 = vmatprep.subr.bf16.mxu0 0
      %749 = vmatpush1.bf16.msra.mxu0 0
      %750 = vmatprep.mubr.bf16.mxu0 0
      %751 = vmatmul.mubr.bf16.gmra.mrb[0].mxu0 %v713
      %v752 = vpop.f32.mrb[0].mxu0
      %v753 = vadd.f32 0.0, %v752
      %v754 = vpop.f32.mrb[0].mxu0
      %v755 = vpop.f32.mrb[0].mxu0
      %v756 = vpop.f32.mrb[0].mxu0
      %757 = vdwg.mxu0
      %759 = vrot.lane.b32.xlu0 %v531, 8
      %v760 = vpop.permute.xlu0 %759
      %763 = vrot.lane.b32.xlu0 %v642, 16
      %v764 = vpop.permute.xlu0 %763
      %767 = vrot.lane.b32.xlu0 %v753, 24
      %v768 = vpop.permute.xlu0 %767
      %v770 = vsel %vm306, %v419, %v760
      %vm771 = vcmask 130048
      %v772 = vsel %vm771, %v770, %v764
      %vm773 = vcmask 195584
      %v774 = vsel %vm773, %v772, %v768
      %v775 = vpack.c.bf16 %v774, %v774
      %v776 = vld [vmem:[%s3] sm:$0xff]
      %v777 = vld [vmem:[%s3 + $0x8] sm:$0xff]
      %v778 = vld [vmem:[%s3 + $0x10] sm:$0xff]
      %v779 = vld [vmem:[%s3 + $0x18] sm:$0xff]
      %v780 = vpack.c.bf16 %v777, %v776
      %v781 = vpack.c.bf16 %v779, %v778
      %v782 = vld [vmem:[%s4] sm:$0x1]
      %v784 = vlaneseq
      %v785 = vshrl.u32 %v784, 7
      %v786 = vsub.s32 0, %v785
      %v787 = vrot.slane %v782, %v786
      %vm789 = vcmask 261120
      %v791 = vsel %vm789, %v775, 0
      %793 = vmatprep.subr.bf16.mxu0 0
      %794 = vmatpush1.bf16.msra.mxu0 %v780
      %795 = vmatprep.subr.bf16.mxu0 0
      %796 = vmatpush1.bf16.msra.mxu0 %v781
      %797 = vmatprep.subr.bf16.mxu0 0
      %798 = vmatpush1.bf16.msra.mxu0 0
      %799 = vmatprep.subr.bf16.mxu0 0
      %800 = vmatpush1.bf16.msra.mxu0 0
      %801 = vmatprep.subr.bf16.mxu0 0
      %802 = vmatpush1.bf16.msra.mxu0 0
      %803 = vmatprep.subr.bf16.mxu0 0
      %804 = vmatpush1.bf16.msra.mxu0 0
      %805 = vmatprep.subr.bf16.mxu0 0
      %806 = vmatpush1.bf16.msra.mxu0 0
      %807 = vmatprep.subr.bf16.mxu0 0
      %808 = vmatpush1.bf16.msra.mxu0 0
      %809 = vmatprep.subr.bf16.mxu0 0
      %810 = vmatpush1.bf16.msra.mxu0 0
      %811 = vmatprep.subr.bf16.mxu0 0
      %812 = vmatpush1.bf16.msra.mxu0 0
      %813 = vmatprep.subr.bf16.mxu0 0
      %814 = vmatpush1.bf16.msra.mxu0 0
      %815 = vmatprep.subr.bf16.mxu0 0
      %816 = vmatpush1.bf16.msra.mxu0 0
      %817 = vmatprep.subr.bf16.mxu0 0
      %818 = vmatpush1.bf16.msra.mxu0 0
      %819 = vmatprep.subr.bf16.mxu0 0
      %820 = vmatpush1.bf16.msra.mxu0 0
      %821 = vmatprep.subr.bf16.mxu0 0
      %822 = vmatpush1.bf16.msra.mxu0 0
      %823 = vmatprep.subr.bf16.mxu0 0
      %824 = vmatpush1.bf16.msra.mxu0 0
      %825 = vmatprep.mubr.bf16.mxu0 0
      %826 = vmatmul.mubr.bf16.gmra.mrb[0].mxu0 %v791
      %v827 = vpop.f32.mrb[0].mxu0
      %v828 = vadd.f32 %v787, %v827
      %v829 = vpop.f32.mrb[0].mxu0
      %v830 = vpop.f32.mrb[0].mxu0
      %v831 = vpop.f32.mrb[0].mxu0
      %832 = vdwg.mxu0
      %v833 = vld [vmem:[%s293] sm:$0xff]
      %v834 = vadd.f32 %v833, %v828
      %835 = vst.msk [vmem:[%s297] sm:$0xff] %vm789, %v834
      %p836 = scmp.lt.s32.totalorder %s17, 1
      %s837 = scalar_select %p836, %s17, 1
      %s838 = smul.addr %s837, 8
      %s839 = scalar_lea.vmem %s6, %s838
      // Predicated region
      $region45: #{decoder_layer.10} parent=43 // pred_check
        %p840 = pneg %p181
      $region46: #{decoder_layer.10} parent=43 // pred_check_branch
        %842 = sbr.rel (%p840) target = $region48
      $region47: #{decoder_layer.10} parent=43 // pred_region
        _
      $region48: #{decoder_layer.10} parent=43 // pred_fallthru
        _
    $region44: #{decoder_layer.10} parent=5 // pred_fallthru
      _
    %p843 = scmp.le.s32.totalorder 2, %s12
    // Predicated region
    $region49: #{decoder_layer.10} parent=5 // pred_check
      %p844 = pneg %p843
    $region50: #{decoder_layer.10} parent=5 // pred_check_branch
      %846 = sbr.rel (%p844) target = $region52
    $region51: #{decoder_layer.10} parent=5 // pred_region
      %s847 = ssub.s32 %s12, 2
      // Predicated region
      $region53: #{decoder_layer.10} parent=51 // pred_check
        %p848 = pneg %p187
      $region54: #{decoder_layer.10} parent=51 // pred_check_branch
        %850 = sbr.rel (%p848) target = $region56
      $region55: #{decoder_layer.10} parent=51 // pred_region
        %p851 = scmp.lt.s32.totalorder %s18, 1
        %s852 = scalar_select %p851, %s18, 1
        %s853 = smul.addr %s852, 8
        %s854 = scalar_lea.vmem %s6, %s853
      $region56: #{decoder_layer.10} parent=51 // pred_fallthru
        _
    $region52: #{decoder_layer.10} parent=5 // pred_fallthru
      _
  $region6: #{decoder_layer.10} parent=0 // loop_footer
    %s16 = sadd.s32 1, %s12
  $region7: #{decoder_layer.10} parent=0 // loop_footer_branch
    %11 = sbr.rel target = $region3
  $region8: #{decoder_layer.10} parent=0 // loop_exit
    _

</llo_original>
